<compile_context>
chip_gen: v5e
topology: v5e:2x2
jax: 0.10.0
libtpu: 0.0.40
codegen_flags: <defaults>
</compile_context>

<pallas_src>
import jax
import jax.numpy as jnp
from jax.experimental import pallas as pl
from jax.experimental.pallas import tpu as pltpu


def _imagenet_v0_kernel(x_ref, wc_ref, wf_ref, bf_ref, wh_ref, bh_ref,
                        o_ref, acc_ref):
    # x_ref  : [Nb, T, C]   bf16  one HW-chunk of Nb images (channels-last)
    # wc_ref : [C, F]       f32   stand-in 1x1 conv weight (VPU operand)
    # wf_ref : [F, E]       bf16  feature Linear weight, pre-scaled by 1/HW
    # bf_ref : [1, E]       f32   feature Linear bias
    # wh_ref : [E, BP]      bf16  hash Linear weight, zero-padded to BP lanes
    # bh_ref : [1, BP]      f32   hash Linear bias, zero-padded
    # o_ref  : [1, Nb, BP]  f32
    # acc_ref: [Nb, F]      f32   running sum over HW of relu(conv)
    k = pl.program_id(1)

    @pl.when(k == 0)
    def _init():
        acc_ref[...] = jnp.zeros_like(acc_ref)

    x = x_ref[...].astype(jnp.float32)                       # [Nb, T, C]
    wc = wc_ref[...]                                          # [C, F] f32
    n_chan = x.shape[-1]

    # K=C pointwise "conv" as unrolled VPU broadcast-FMA (keeps the MXU free).
    fm = x[:, :, 0:1] * wc[0:1, :][None]                      # [Nb, T, F]
    for c in range(1, n_chan):
        fm = fm + x[:, :, c:c + 1] * wc[c:c + 1, :][None]
    fm = jnp.maximum(fm, 0.0)                                 # ReLU

    # Global average pool: accumulate the sum in f32 (1/HW folded into wf).
    acc_ref[...] += jnp.sum(fm, axis=1)                       # [Nb, F]

    @pl.when(k == pl.num_programs(1) - 1)
    def _finalize():
        base = acc_ref[...].astype(jnp.bfloat16)              # [Nb, F]
        fea = jnp.dot(base, wf_ref[...],
                      preferred_element_type=jnp.float32) + bf_ref[...]
        hsh = jnp.tanh(
            jnp.dot(fea.astype(jnp.bfloat16), wh_ref[...],
                    preferred_element_type=jnp.float32) + bh_ref[...]
        )                                                     # [Nb, BP] f32
        o_ref[...] = hsh.reshape(o_ref.shape).astype(o_ref.dtype)


def imagenet_v0_forward(x_nchw, params, *, nb=2, hw_tile=128):
    """x_nchw: [N, C, H, W] float32. Returns squeeze([N, bit])."""
    wc, wf, bf, wh, bh = (params["wc"], params["wf"], params["bf"],
                          params["wh"], params["bh"])
    N, C, H, W = x_nchw.shape
    HW = H * W
    F = wc.shape[1]          # 2048 backbone features
    E = wf.shape[1]          # SEMANTIC_EMBED
    bit = wh.shape[1]
    BP = 128 if bit <= 128 else ((bit + 127) // 128) * 128    # lane-dense hash

    nb = min(nb, N)
    hw_tile = min(hw_tile, HW)
    assert N % nb == 0, (N, nb)
    # TODO(synk): a ragged HW tail would need masking of the pooled sum.
    assert HW % hw_tile == 0 and (hw_tile % 8 == 0 or hw_tile == HW), (HW, hw_tile)

    # NCHW -> [N, HW, C] channels-last, bf16 for the DMA / VPU inputs.
    # TODO(synk): for real ImageNet resolutions, feed [N, C, HW] (spatial on the
    # lane axis) to avoid the C=3 lane padding of this block in VMEM.
    x = jnp.transpose(x_nchw, (0, 2, 3, 1)).reshape(N, HW, C).astype(jnp.bfloat16)

    wc_f = wc.astype(jnp.float32)                             # VPU operand, f32
    wf_b = (wf / HW).astype(jnp.bfloat16)                     # fold mean's 1/HW
    bf_f = bf.reshape(1, E).astype(jnp.float32)
    wh_b = jnp.zeros((E, BP), jnp.bfloat16).at[:, :bit].set(wh.astype(jnp.bfloat16))
    bh_f = jnp.zeros((1, BP), jnp.float32).at[:, :bit].set(
        bh.reshape(1, bit).astype(jnp.float32))

    flops = 2 * N * HW * C * F + N * HW * F + 2 * N * F * E + 2 * N * E * BP
    bytes_accessed = (x.size * 2 + wc_f.size * 4 + wf_b.size * 2 + bf_f.size * 4
                      + wh_b.size * 2 + bh_f.size * 4 + N * BP * 4)

    out = pl.pallas_call(
        _imagenet_v0_kernel,
        out_shape=jax.ShapeDtypeStruct((N // nb, nb, BP), jnp.float32),
        grid_spec=pltpu.PrefetchScalarGridSpec(
            num_scalar_prefetch=0,
            grid=(N // nb, HW // hw_tile),
            in_specs=[
                pl.BlockSpec((nb, hw_tile, C), lambda n, k: (n, k, 0)),  # x chunk
                pl.BlockSpec((C, F), lambda n, k: (0, 0)),               # conv W
                pl.BlockSpec((F, E), lambda n, k: (0, 0)),               # feature W
                pl.BlockSpec((1, E), lambda n, k: (0, 0)),               # feature b
                pl.BlockSpec((E, BP), lambda n, k: (0, 0)),              # hash W
                pl.BlockSpec((1, BP), lambda n, k: (0, 0)),              # hash b
            ],
            out_specs=pl.BlockSpec((1, nb, BP), lambda n, k: (n, 0, 0)),
            scratch_shapes=[pltpu.VMEM((nb, F), jnp.float32)],           # pooled sum
        ),
        compiler_params=pltpu.CompilerParams(
            dimension_semantics=("parallel", "arbitrary"),
            vmem_limit_bytes=48 * 1024 * 1024,
        ),
        cost_estimate=pl.CostEstimate(
            flops=flops, transcendentals=N * BP, bytes_accessed=bytes_accessed),
    )(x, wc_f, wf_b, bf_f, wh_b, bh_f)

    hsh = out.reshape(N, BP)[:, :bit]
    return jnp.squeeze(hsh)                                   # torch.squeeze(hsh_I)


def init_params(key, *, c_in=3, backbone_feat=2048, semantic_embed=128, bit=64):
    """Deterministic init matching init_parameters_recursively (normal, std=0.01)."""
    k0, k1, k2, k3, k4 = jax.random.split(key, 5)
    std = 0.01
    return {
        # stand-in backbone conv weight (resnet convs have no bias)
        "wc": std * jax.random.normal(k0, (c_in, backbone_feat), jnp.float32),
        # nn.Linear(2048, SEMANTIC_EMBED): stored [in, out] (transpose of torch)
        "wf": std * jax.random.normal(k1, (backbone_feat, semantic_embed), jnp.float32),
        "bf": std * jax.random.normal(k2, (semantic_embed,), jnp.float32),
        # nn.Linear(SEMANTIC_EMBED, bit)
        "wh": std * jax.random.normal(k3, (semantic_embed, bit), jnp.float32),
        "bh": std * jax.random.normal(k4, (bit,), jnp.float32),
    }


def _reference_forward(x_nchw, params):
    """Pure-JAX f32 reference of the same forward pass."""
    N, C, H, W = x_nchw.shape
    x = jnp.transpose(x_nchw, (0, 2, 3, 1)).reshape(N, H * W, C).astype(jnp.float32)
    fm = jnp.maximum(jnp.einsum("nsc,cf->nsf", x, params["wc"]), 0.0)
    base = jnp.mean(fm, axis=1)
    fea = base @ params["wf"] + params["bf"]
    return jnp.squeeze(jnp.tanh(fea @ params["wh"] + params["bh"]))


if __name__ == "__main__":
    key = jax.random.PRNGKey(0)
    k_param, k_x = jax.random.split(key)

    # cfg: SEMANTIC_EMBED=128, bit=64, numClass unused in forward
    SEMANTIC_EMBED, BIT = 128, 64
    N, C, H, W = 4, 3, 16, 16                     # small ImageNet-like NCHW input

    params = init_params(k_param, c_in=C, semantic_embed=SEMANTIC_EMBED, bit=BIT)
    x = jax.random.normal(k_x, (N, C, H, W), jnp.float32)

    out = imagenet_v0_forward(x, params, nb=2, hw_tile=128)   # grid (2, 2)
    out = jax.block_until_ready(out)

    ref = _reference_forward(x, params)

    assert out.shape == (N, BIT), out.shape
    assert bool(jnp.all(jnp.isfinite(out)))
    assert bool(jnp.all(jnp.abs(out) <= 1.0))                 # tanh range
    assert bool(jnp.allclose(out, ref, atol=2e-3, rtol=2e-2)), \
        float(jnp.max(jnp.abs(out - ref)))
    print("KERNEL_OK")
</pallas_src>

<mosaic_0001>
module attributes {stable_mosaic.version = 11 : i64} {
  func.func @_imagenet_v0_kernel(%arg0: i32, %arg1: i32, %arg2: memref<2x128x3xbf16, #tpu.memory_space<vmem>>, %arg3: memref<3x2048xf32, #tpu.memory_space<vmem>>, %arg4: memref<2048x128xbf16, #tpu.memory_space<vmem>>, %arg5: memref<1x128xf32, #tpu.memory_space<vmem>>, %arg6: memref<128x128xbf16, #tpu.memory_space<vmem>>, %arg7: memref<1x128xf32, #tpu.memory_space<vmem>>, %arg8: memref<1x2x128xf32, #tpu.memory_space<vmem>>, %arg9: memref<2x2048xf32, #tpu.memory_space<vmem>>) attributes {dimension_semantics = [#tpu.dimension_semantics<parallel>, #tpu.dimension_semantics<arbitrary>], iteration_bounds = array<i64: 2, 2>, scalar_prefetch = 0 : i64, scratch_operands = 1 : i64, tpu.core_type = #tpu.core_type<tc>, window_params = [{transform_indices = @transform_0, window_bounds = array<i64: 2, 128, 3>}, {pipeline_mode = #tpu.pipeline_mode<synchronous>, transform_indices = @transform_1, window_bounds = array<i64: 3, 2048>}, {pipeline_mode = #tpu.pipeline_mode<synchronous>, transform_indices = @transform_2, window_bounds = array<i64: 2048, 128>}, {pipeline_mode = #tpu.pipeline_mode<synchronous>, transform_indices = @transform_3, window_bounds = array<i64: 1, 128>}, {pipeline_mode = #tpu.pipeline_mode<synchronous>, transform_indices = @transform_4, window_bounds = array<i64: 128, 128>}, {pipeline_mode = #tpu.pipeline_mode<synchronous>, transform_indices = @transform_5, window_bounds = array<i64: 1, 128>}, {transform_indices = @transform_6, window_bounds = array<i64: 1, 2, 128>}]} {
    %c0_i32 = arith.constant 0 : i32
    %0 = arith.cmpi eq, %arg1, %c0_i32 : i32
    %1 = arith.extui %0 : i1 to i32
    %c0_i32_0 = arith.constant 0 : i32
    %2 = arith.cmpi ne, %1, %c0_i32_0 : i32
    scf.if %2 {
      %cst_11 = arith.constant 0.000000e+00 : f32
      %35 = vector.broadcast %cst_11 : f32 to vector<2x2048xf32>
      %c0_12 = arith.constant 0 : index
      %c0_13 = arith.constant 0 : index
      %36 = vector.load %arg9[%c0_12, %c0_13] : memref<2x2048xf32, #tpu.memory_space<vmem>>, vector<2x2048xf32>
      tpu.vector_store %arg9[%c0_12, %c0_13], %35 {strides = array<i32>} : memref<2x2048xf32, #tpu.memory_space<vmem>>, vector<2x2048xf32>,
    } else {
    }
    %c0 = arith.constant 0 : index
    %c0_1 = arith.constant 0 : index
    %c0_2 = arith.constant 0 : index
    %3 = vector.load %arg2[%c0, %c0_1, %c0_2] : memref<2x128x3xbf16, #tpu.memory_space<vmem>>, vector<2x128x3xbf16>
    %4 = arith.extf %3 : vector<2x128x3xbf16> to vector<2x128x3xf32>
    %c0_3 = arith.constant 0 : index
    %c0_4 = arith.constant 0 : index
    %5 = vector.load %arg3[%c0_3, %c0_4] : memref<3x2048xf32, #tpu.memory_space<vmem>>, vector<3x2048xf32>
    %6 = vector.extract_strided_slice %4 {offsets = [0, 0, 0], sizes = [2, 128, 1], strides = [1, 1, 1]} : vector<2x128x3xf32> to vector<2x128x1xf32>
    %7 = vector.extract_strided_slice %5 {offsets = [0, 0], sizes = [1, 2048], strides = [1, 1]} : vector<3x2048xf32> to vector<1x2048xf32>
    %8 = vector.shape_cast %7 : vector<1x2048xf32> to vector<1x1x2048xf32>
    %9 = vector.broadcast %6 : vector<2x128x1xf32> to vector<2x128x2048xf32>
    %10 = vector.broadcast %8 : vector<1x1x2048xf32> to vector<2x128x2048xf32>
    %11 = arith.mulf %9, %10 : vector<2x128x2048xf32>
    %12 = vector.extract_strided_slice %4 {offsets = [0, 0, 1], sizes = [2, 128, 1], strides = [1, 1, 1]} : vector<2x128x3xf32> to vector<2x128x1xf32>
    %13 = vector.extract_strided_slice %5 {offsets = [1, 0], sizes = [1, 2048], strides = [1, 1]} : vector<3x2048xf32> to vector<1x2048xf32>
    %14 = vector.shape_cast %13 : vector<1x2048xf32> to vector<1x1x2048xf32>
    %15 = vector.broadcast %12 : vector<2x128x1xf32> to vector<2x128x2048xf32>
    %16 = vector.broadcast %14 : vector<1x1x2048xf32> to vector<2x128x2048xf32>
    %17 = arith.mulf %15, %16 : vector<2x128x2048xf32>
    %18 = arith.addf %11, %17 : vector<2x128x2048xf32>
    %19 = vector.extract_strided_slice %4 {offsets = [0, 0, 2], sizes = [2, 128, 1], strides = [1, 1, 1]} : vector<2x128x3xf32> to vector<2x128x1xf32>
    %20 = vector.extract_strided_slice %5 {offsets = [2, 0], sizes = [1, 2048], strides = [1, 1]} : vector<3x2048xf32> to vector<1x2048xf32>
    %21 = vector.shape_cast %20 : vector<1x2048xf32> to vector<1x1x2048xf32>
    %22 = vector.broadcast %19 : vector<2x128x1xf32> to vector<2x128x2048xf32>
    %23 = vector.broadcast %21 : vector<1x1x2048xf32> to vector<2x128x2048xf32>
    %24 = arith.mulf %22, %23 : vector<2x128x2048xf32>
    %25 = arith.addf %18, %24 : vector<2x128x2048xf32>
    %cst = arith.constant 0.000000e+00 : f32
    %26 = vector.broadcast %cst : f32 to vector<2x128x2048xf32>
    %27 = arith.maximumf %25, %26 : vector<2x128x2048xf32>
    %c0_5 = arith.constant 0 : index
    %c0_6 = arith.constant 0 : index
    %28 = vector.load %arg9[%c0_5, %c0_6] : memref<2x2048xf32, #tpu.memory_space<vmem>>, vector<2x2048xf32>
    %cst_7 = arith.constant dense<0.000000e+00> : vector<2x2048xf32>
    %29 = vector.multi_reduction <add>, %27, %cst_7 [1] : vector<2x128x2048xf32> to vector<2x2048xf32>
    %30 = arith.addf %28, %29 : vector<2x2048xf32>
    %c0_8 = arith.constant 0 : index
    %c0_9 = arith.constant 0 : index
    %31 = vector.load %arg9[%c0_8, %c0_9] : memref<2x2048xf32, #tpu.memory_space<vmem>>, vector<2x2048xf32>
    tpu.vector_store %arg9[%c0_8, %c0_9], %30 {strides = array<i32>} : memref<2x2048xf32, #tpu.memory_space<vmem>>, vector<2x2048xf32>,
    %c1_i32 = arith.constant 1 : i32
    %32 = arith.cmpi eq, %arg1, %c1_i32 : i32
    %33 = arith.extui %32 : i1 to i32
    %c0_i32_10 = arith.constant 0 : i32
    %34 = arith.cmpi ne, %33, %c0_i32_10 : i32
    scf.if %34 {
      %c0_11 = arith.constant 0 : index
      %c0_12 = arith.constant 0 : index
      %35 = vector.load %arg9[%c0_11, %c0_12] : memref<2x2048xf32, #tpu.memory_space<vmem>>, vector<2x2048xf32>
      %36 = arith.truncf %35 : vector<2x2048xf32> to vector<2x2048xbf16>
      %c0_13 = arith.constant 0 : index
      %c0_14 = arith.constant 0 : index
      %37 = vector.load %arg4[%c0_13, %c0_14] : memref<2048x128xbf16, #tpu.memory_space<vmem>>, vector<2048x128xbf16>
      %cst_15 = arith.constant dense<0.000000e+00> : vector<2x128xf32>
      %38 = tpu.matmul %36, %37, %cst_15 {dimension_numbers = #tpu.dot_dimension_numbers<[1], [0], [0], [1], [0, 0, 1, 1], [], []>} : vector<2x2048xbf16>, vector<2048x128xbf16>, vector<2x128xf32> -> vector<2x128xf32>
      %c0_16 = arith.constant 0 : index
      %c0_17 = arith.constant 0 : index
      %39 = vector.load %arg5[%c0_16, %c0_17] : memref<1x128xf32, #tpu.memory_space<vmem>>, vector<1x128xf32>
      %40 = vector.broadcast %39 : vector<1x128xf32> to vector<2x128xf32>
      %41 = arith.addf %38, %40 : vector<2x128xf32>
      %42 = arith.truncf %41 : vector<2x128xf32> to vector<2x128xbf16>
      %c0_18 = arith.constant 0 : index
      %c0_19 = arith.constant 0 : index
      %43 = vector.load %arg6[%c0_18, %c0_19] : memref<128x128xbf16, #tpu.memory_space<vmem>>, vector<128x128xbf16>
      %cst_20 = arith.constant dense<0.000000e+00> : vector<2x128xf32>
      %44 = tpu.matmul %42, %43, %cst_20 {dimension_numbers = #tpu.dot_dimension_numbers<[1], [0], [0], [1], [0, 0, 1, 1], [], []>} : vector<2x128xbf16>, vector<128x128xbf16>, vector<2x128xf32> -> vector<2x128xf32>
      %c0_21 = arith.constant 0 : index
      %c0_22 = arith.constant 0 : index
      %45 = vector.load %arg7[%c0_21, %c0_22] : memref<1x128xf32, #tpu.memory_space<vmem>>, vector<1x128xf32>
      %46 = vector.broadcast %45 : vector<1x128xf32> to vector<2x128xf32>
      %47 = arith.addf %44, %46 : vector<2x128xf32>
      %48 = math.tanh %47 : vector<2x128xf32>
      %49 = vector.shape_cast %48 : vector<2x128xf32> to vector<1x2x128xf32>
      %c0_23 = arith.constant 0 : index
      %c0_24 = arith.constant 0 : index
      %c0_25 = arith.constant 0 : index
      %50 = vector.load %arg8[%c0_23, %c0_24, %c0_25] : memref<1x2x128xf32, #tpu.memory_space<vmem>>, vector<1x2x128xf32>
      tpu.vector_store %arg8[%c0_23, %c0_24, %c0_25], %49 {strides = array<i32>} : memref<1x2x128xf32, #tpu.memory_space<vmem>>, vector<1x2x128xf32>,
    } else {
    }
    return
  }
  func.func @transform_0(%arg0: i32, %arg1: i32) -> (i32, i32, i32) {
    %c0_i32 = arith.constant 0 : i32
    %c0_i32_0 = arith.constant 0 : i32
    return %arg0, %arg1, %c0_i32 : i32, i32, i32
  }
  func.func @transform_1(%arg0: i32, %arg1: i32) -> (i32, i32) {
    %c0_i32 = arith.constant 0 : i32
    %c0_i32_0 = arith.constant 0 : i32
    %c0_i32_1 = arith.constant 0 : i32
    return %c0_i32, %c0_i32_0 : i32, i32
  }
  func.func @transform_2(%arg0: i32, %arg1: i32) -> (i32, i32) {
    %c0_i32 = arith.constant 0 : i32
    %c0_i32_0 = arith.constant 0 : i32
    %c0_i32_1 = arith.constant 0 : i32
    return %c0_i32, %c0_i32_0 : i32, i32
  }
  func.func @transform_3(%arg0: i32, %arg1: i32) -> (i32, i32) {
    %c0_i32 = arith.constant 0 : i32
    %c0_i32_0 = arith.constant 0 : i32
    %c0_i32_1 = arith.constant 0 : i32
    return %c0_i32, %c0_i32_0 : i32, i32
  }
  func.func @transform_4(%arg0: i32, %arg1: i32) -> (i32, i32) {
    %c0_i32 = arith.constant 0 : i32
    %c0_i32_0 = arith.constant 0 : i32
    %c0_i32_1 = arith.constant 0 : i32
    return %c0_i32, %c0_i32_0 : i32, i32
  }
  func.func @transform_5(%arg0: i32, %arg1: i32) -> (i32, i32) {
    %c0_i32 = arith.constant 0 : i32
    %c0_i32_0 = arith.constant 0 : i32
    %c0_i32_1 = arith.constant 0 : i32
    return %c0_i32, %c0_i32_0 : i32, i32
  }
  func.func @transform_6(%arg0: i32, %arg1: i32) -> (i32, i32, i32) {
    %c0_i32 = arith.constant 0 : i32
    %c0_i32_0 = arith.constant 0 : i32
    %c0_i32_1 = arith.constant 0 : i32
    return %arg0, %c0_i32, %c0_i32_0 : i32, i32, i32
  }
}

</mosaic_0001>

<llo_original>
// kernel: tpu_custom_call.1
$region0: #{tpu_custom_call.1}
  #allocation0 [shape = 'u32[]', space=smem, size = 0x4, offset = 0x4, fixed_abs, tag = 'smem constant byte address 0x4 - core index']
  #allocation1 [shape = 'u32[72,128]{1,0:T(1,128)}', space=vmem, size = 0x9000, scoped, tag = 'internal scratch']
  #allocation2 [shape = 'f32[2,2048]{1,0:T(2,128)}', space=vmem, size = 0x4000, scoped, tag = 'scratch operand']
  %s0 = inlined_call_operand.vmem [shape: bf16[4,256,3], index: 0, kind: input, shape index: {}]
  %s1 = inlined_call_operand.vmem [shape: f32[3,2048], index: 1, kind: input, shape index: {}]
  %s2 = inlined_call_operand.hbm [shape: bf16[2048,128], index: 2, kind: input, shape index: {}]
  %s3 = inlined_call_operand.vmem [shape: f32[1,128], index: 3, kind: input, shape index: {}]
  %s4 = inlined_call_operand.vmem [shape: bf16[128,128], index: 4, kind: input, shape index: {}]
  %s5 = inlined_call_operand.vmem [shape: f32[1,128], index: 5, kind: input, shape index: {}]
  %s6 = inlined_call_operand.hbm [shape: f32[2,2,128], index: 6, kind: output, shape index: {}]
  %s7 = sld [smem:[#allocation0]]
  $region110: #{tpu_custom_call.1} parent=0
    _
  %s9 = ssub.s32 1, %s7
  %s10 = scalar_select 0, %s9, %s7
  $region1: #{tpu_custom_call.1} parent=0
    #allocation3 [shape = 'u8[131072]{0}', space=vmem, size = 0x20000, scoped, tag = 'input window, operand 0']
    #allocation4 [shape = 'u8[524288]{0}', space=vmem, size = 0x80000, scoped, tag = 'input window, operand 2, single buffered']
    #allocation5 [shape = 's32[2]{0}', space=sflag, size = 0x8, scoped, tag = 'scoped memory for tpu_custom_call.1']
    #allocation6 [shape = 's32[2]{0}', space=sflag, size = 0x8, scoped, tag = 'scoped memory for tpu_custom_call.1']
    #allocation7 [shape = 'u8[2048]{0}', space=vmem, size = 0x800, scoped, tag = 'output window, operand 0']
    %11 = vsyncpa [#allocation5], 0
    %12 = vsyncpa [#allocation6], 0
    %s13 = scalar_lea.sflag [#allocation6], 1
    %14 = vsyncpa %s13, 0
    loop: start=0, step=1, limit=6
    $region2: #{tpu_custom_call.1} parent=1 // loop_pre_header
      _
    $region3: #{tpu_custom_call.1} parent=1 // loop_header
      %s16 = sphi 0, %s20
      %p17 = scmp.ge.s32.totalorder %s16, 6
      %s23 = sphi 0, %s35
      %s24 = sphi 0, %s31
      %s25 = sphi 0, %s23
      %s26 = sphi 0, %s24
      %s27 = sphi 0, %s25
      %s28 = sphi 0, %s26
      %s40 = sphi 0, %s42
      %s43 = sphi 0, %s40
      %s44 = sphi 0, %s43
      %s60 = sphi 0, %s44
      %s64 = sphi 0, %s64
      %s66 = sphi 0, %s64
      %s67 = sphi 0, %s66
      %s81 = sphi 0, %s67
      %s85 = sphi 0, %s85
      %s87 = sphi 0, %s85
      %s88 = sphi 0, %s87
      %s102 = sphi 0, %s88
      %s106 = sphi 0, %s106
      %s108 = sphi 0, %s106
      %s109 = sphi 0, %s108
      %s123 = sphi 0, %s109
      %s127 = sphi 0, %s127
      %s129 = sphi 0, %s127
      %s130 = sphi 0, %s129
      %s144 = sphi 0, %s130
      %s148 = sphi 0, %s148
      %s150 = sphi 0, %s148
      %s151 = sphi 0, %s150
      %s165 = sphi 0, %s151
      %s171 = sphi 0, %s173
      %s174 = sphi 0, %s171
      %s175 = sphi 0, %s174
      %s191 = sphi 0, %s175
    $region4: #{tpu_custom_call.1} parent=1 // loop_header_branch
      %19 = sbr.rel (%p17) target = $region8
    $region5: #{tpu_custom_call.1} parent=1 // loop_body
      %s21 = ssub.s32 %s16, 1
      %s22 = ssub.s32 %s16, 2
      %s29 = sadd.s32 1, %s24
      %p30 = scmp.ge.s32.totalorder %s29, 2
      %s31 = scalar_select %p30, 0, %s29
      %s32 = sadd.s32 1, %s23
      %s33 = scalar_select %p30, %s32, %s23
      %p34 = scmp.ge.s32.totalorder %s33, 2
      %s35 = scalar_select %p34, 0, %s33
      %s36 = ssub.s32 %s23, %s35
      %s37 = ssub.s32 %s24, %s31
      %s38 = sor.u32 %s36, %s37
      %p39 = scmp.eq.s32.totalorder %s38, 0
      %s41 = sadd.s32 %s40, 1
      %s42 = scalar_select %p39, %s40, %s41
      %p45 = pneg %p39
      %p46 = scmp.eq.s32.totalorder %s16, 3
      %p47 = por %p45, %p46
      %p48 = scmp.ne.s32.totalorder %s40, %s43
      %p49 = scmp.eq.s32.totalorder %s16, 0
      %p50 = por %p48, %p49
      %p51 = scmp.ne.s32.totalorder %s40, %s43
      %p52 = scmp.eq.s32.totalorder %s21, 3
      %p53 = por %p51, %p52
      %p54 = scmp.ne.s32.totalorder %s43, %s44
      %p55 = scmp.eq.s32.totalorder %s21, 0
      %p56 = por %p54, %p55
      %p57 = scmp.ne.s32.totalorder %s43, %s44
      %p58 = scmp.eq.s32.totalorder %s22, 3
      %p59 = por %p57, %p58
      %p61 = scmp.ne.s32.totalorder %s44, %s60
      %p62 = scmp.eq.s32.totalorder %s22, 0
      %p63 = por %p61, %p62
      %s65 = sadd.s32 %s64, 1
      %p68 = scmp.eq.s32.totalorder %s16, 3
      %p69 = scmp.ne.s32.totalorder %s64, %s66
      %p70 = scmp.eq.s32.totalorder %s16, 0
      %p71 = por %p69, %p70
      %p72 = scmp.ne.s32.totalorder %s64, %s66
      %p73 = scmp.eq.s32.totalorder %s21, 3
      %p74 = por %p72, %p73
      %p75 = scmp.ne.s32.totalorder %s66, %s67
      %p76 = scmp.eq.s32.totalorder %s21, 0
      %p77 = por %p75, %p76
      %p78 = scmp.ne.s32.totalorder %s66, %s67
      %p79 = scmp.eq.s32.totalorder %s22, 3
      %p80 = por %p78, %p79
      %p82 = scmp.ne.s32.totalorder %s67, %s81
      %p83 = scmp.eq.s32.totalorder %s22, 0
      %p84 = por %p82, %p83
      %s86 = sadd.s32 %s85, 1
      %p89 = scmp.eq.s32.totalorder %s16, 3
      %p90 = scmp.ne.s32.totalorder %s85, %s87
      %p91 = scmp.eq.s32.totalorder %s16, 0
      %p92 = por %p90, %p91
      %p93 = scmp.ne.s32.totalorder %s85, %s87
      %p94 = scmp.eq.s32.totalorder %s21, 3
      %p95 = por %p93, %p94
      %p96 = scmp.ne.s32.totalorder %s87, %s88
      %p97 = scmp.eq.s32.totalorder %s21, 0
      %p98 = por %p96, %p97
      %p99 = scmp.ne.s32.totalorder %s87, %s88
      %p100 = scmp.eq.s32.totalorder %s22, 3
      %p101 = por %p99, %p100
      %p103 = scmp.ne.s32.totalorder %s88, %s102
      %p104 = scmp.eq.s32.totalorder %s22, 0
      %p105 = por %p103, %p104
      %s107 = sadd.s32 %s106, 1
      %p110 = scmp.eq.s32.totalorder %s16, 3
      %p111 = scmp.ne.s32.totalorder %s106, %s108
      %p112 = scmp.eq.s32.totalorder %s16, 0
      %p113 = por %p111, %p112
      %p114 = scmp.ne.s32.totalorder %s106, %s108
      %p115 = scmp.eq.s32.totalorder %s21, 3
      %p116 = por %p114, %p115
      %p117 = scmp.ne.s32.totalorder %s108, %s109
      %p118 = scmp.eq.s32.totalorder %s21, 0
      %p119 = por %p117, %p118
      %p120 = scmp.ne.s32.totalorder %s108, %s109
      %p121 = scmp.eq.s32.totalorder %s22, 3
      %p122 = por %p120, %p121
      %p124 = scmp.ne.s32.totalorder %s109, %s123
      %p125 = scmp.eq.s32.totalorder %s22, 0
      %p126 = por %p124, %p125
      %s128 = sadd.s32 %s127, 1
      %p131 = scmp.eq.s32.totalorder %s16, 3
      %p132 = scmp.ne.s32.totalorder %s127, %s129
      %p133 = scmp.eq.s32.totalorder %s16, 0
      %p134 = por %p132, %p133
      %p135 = scmp.ne.s32.totalorder %s127, %s129
      %p136 = scmp.eq.s32.totalorder %s21, 3
      %p137 = por %p135, %p136
      %p138 = scmp.ne.s32.totalorder %s129, %s130
      %p139 = scmp.eq.s32.totalorder %s21, 0
      %p140 = por %p138, %p139
      %p141 = scmp.ne.s32.totalorder %s129, %s130
      %p142 = scmp.eq.s32.totalorder %s22, 3
      %p143 = por %p141, %p142
      %p145 = scmp.ne.s32.totalorder %s130, %s144
      %p146 = scmp.eq.s32.totalorder %s22, 0
      %p147 = por %p145, %p146
      %s149 = sadd.s32 %s148, 1
      %p152 = scmp.eq.s32.totalorder %s16, 3
      %p153 = scmp.ne.s32.totalorder %s148, %s150
      %p154 = scmp.eq.s32.totalorder %s16, 0
      %p155 = por %p153, %p154
      %p156 = scmp.ne.s32.totalorder %s148, %s150
      %p157 = scmp.eq.s32.totalorder %s21, 3
      %p158 = por %p156, %p157
      %p159 = scmp.ne.s32.totalorder %s150, %s151
      %p160 = scmp.eq.s32.totalorder %s21, 0
      %p161 = por %p159, %p160
      %p162 = scmp.ne.s32.totalorder %s150, %s151
      %p163 = scmp.eq.s32.totalorder %s22, 3
      %p164 = por %p162, %p163
      %p166 = scmp.ne.s32.totalorder %s151, %s165
      %p167 = scmp.eq.s32.totalorder %s22, 0
      %p168 = por %p166, %p167
      %s169 = ssub.s32 %s23, %s35
      %p170 = scmp.eq.s32.totalorder %s169, 0
      %s172 = sadd.s32 %s171, 1
      %s173 = scalar_select %p170, %s171, %s172
      %p176 = pneg %p170
      %p177 = scmp.eq.s32.totalorder %s16, 3
      %p178 = por %p176, %p177
      %p179 = scmp.ne.s32.totalorder %s171, %s174
      %p180 = scmp.eq.s32.totalorder %s16, 0
      %p181 = por %p179, %p180
      %p182 = scmp.ne.s32.totalorder %s171, %s174
      %p183 = scmp.eq.s32.totalorder %s21, 3
      %p184 = por %p182, %p183
      %p185 = scmp.ne.s32.totalorder %s174, %s175
      %p186 = scmp.eq.s32.totalorder %s21, 0
      %p187 = por %p185, %p186
      %p188 = scmp.ne.s32.totalorder %s174, %s175
      %p189 = scmp.eq.s32.totalorder %s22, 3
      %p190 = por %p188, %p189
      %p192 = scmp.ne.s32.totalorder %s175, %s191
      %p193 = scmp.eq.s32.totalorder %s22, 0
      %p194 = por %p192, %p193
      %p195 = scmp.le.s32.totalorder 1, %s16
      %p196 = scmp.lt.s32.totalorder %s16, 5
      %p197 = pnand %p195, %p196
      %p198 = pneg %p197
      // Predicated region
      $region9: #{tpu_custom_call.1} parent=5 // pred_check
        _
      $region10: #{tpu_custom_call.1} parent=5 // pred_check_branch
        %200 = sbr.rel (%p197) target = $region12
      $region11: #{tpu_custom_call.1} parent=5 // pred_region
        %s201 = ssub.s32 %s16, 1
        // Predicated region
        $region13: #{tpu_custom_call.1} parent=11 // pred_check
          %p202 = pneg %p77
        $region14: #{tpu_custom_call.1} parent=11 // pred_check_branch
          %204 = sbr.rel (%p202) target = $region16
        $region15: #{tpu_custom_call.1} parent=11 // pred_region
          _
        $region16: #{tpu_custom_call.1} parent=11 // pred_fallthru
          _
        // Predicated region
        $region17: #{tpu_custom_call.1} parent=11 // pred_check
          %p205 = pneg %p98
        $region18: #{tpu_custom_call.1} parent=11 // pred_check_branch
          %207 = sbr.rel (%p205) target = $region20
        $region19: #{tpu_custom_call.1} parent=11 // pred_region
          %209 = vsyncadd [#allocation5], 0
          %s210 = sshll.u32 %s2, 4
          %s211 = int_to_ptr.hbm [resolvable:$true] %s210
          %s212 = sshll.u32 [#allocation4], 4
          %s213 = int_to_ptr.vmem [resolvable:$true] %s212
          %218 = dma.hbm_to_vmem [thread:$0]  %s211, 16384, %s213, [#allocation5], 64, 64, 4
        $region20: #{tpu_custom_call.1} parent=11 // pred_fallthru
          _
        // Predicated region
        $region21: #{tpu_custom_call.1} parent=11 // pred_check
          %p219 = pneg %p119
        $region22: #{tpu_custom_call.1} parent=11 // pred_check_branch
          %221 = sbr.rel (%p219) target = $region24
        $region23: #{tpu_custom_call.1} parent=11 // pred_region
          _
        $region24: #{tpu_custom_call.1} parent=11 // pred_fallthru
          _
        // Predicated region
        $region25: #{tpu_custom_call.1} parent=11 // pred_check
          %p222 = pneg %p140
        $region26: #{tpu_custom_call.1} parent=11 // pred_check_branch
          %224 = sbr.rel (%p222) target = $region28
        $region27: #{tpu_custom_call.1} parent=11 // pred_region
          _
        $region28: #{tpu_custom_call.1} parent=11 // pred_fallthru
          _
        // Predicated region
        $region29: #{tpu_custom_call.1} parent=11 // pred_check
          %p225 = pneg %p161
        $region30: #{tpu_custom_call.1} parent=11 // pred_check_branch
          %227 = sbr.rel (%p225) target = $region32
        $region31: #{tpu_custom_call.1} parent=11 // pred_region
          _
        $region32: #{tpu_custom_call.1} parent=11 // pred_fallthru
          _
      $region12: #{tpu_custom_call.1} parent=5 // pred_fallthru
        _
      %p228 = scmp.lt.s32.totalorder %s16, 4
      // Predicated region
      $region33: #{tpu_custom_call.1} parent=5 // pred_check
        %p229 = pneg %p228
      $region34: #{tpu_custom_call.1} parent=5 // pred_check_branch
        %231 = sbr.rel (%p229) target = $region36
      $region35: #{tpu_custom_call.1} parent=5 // pred_region
        // Predicated region
        $region37: #{tpu_custom_call.1} parent=35 // pred_check
          %p232 = pneg %p50
        $region38: #{tpu_custom_call.1} parent=35 // pred_check_branch
          %234 = sbr.rel (%p232) target = $region40
        $region39: #{tpu_custom_call.1} parent=35 // pred_region
          %s235 = sand.u32 %s40, 1
          %s236 = sand.u32 %s40, 1
          %s237 = smul.addr %s236, 128
          %s238 = scalar_lea.vmem [#allocation3], %s237
          %s239 = smul.u32 2, %s23
          %s240 = smul.u32 16, %s24
          %s241 = smul.addr %s239, 32
          %s242 = sadd.s32 %s240, %s241
          %s243 = smul.addr %s242, 4
          %s244 = scalar_lea.vmem %s0, %s243
          // Predicated region
          $region41: #{tpu_custom_call.1} parent=39 // pred_check
            _
          $region42: #{tpu_custom_call.1} parent=39 // pred_check_branch
            %246 = sbr.rel (0) target = $region44
          $region43: #{tpu_custom_call.1} parent=39 // pred_region
            // Predicated region
            $region45: #{tpu_custom_call.1} parent=43 // pred_check
              _
            $region46: #{tpu_custom_call.1} parent=43 // pred_check_branch
              %248 = sbr.rel target = $region48
            $region47: #{tpu_custom_call.1} parent=43 // pred_region
              // Predicated region
              $region60: #{tpu_custom_call.1} parent=47 // pred_check
                _
              $region61: #{tpu_custom_call.1} parent=47 // pred_check_branch
                %326 = sbr.rel (0) target = $region63
              $region62: #{tpu_custom_call.1} parent=47 // pred_region
                loop: start=0, step=1, limit=1
                $region64: #{tpu_custom_call.1} parent=62 // loop_pre_header
                  _
                $region65: #{tpu_custom_call.1} parent=62 // loop_header
                  %s328 = sphi 0, %s332
                  %p329 = scmp.ge.s32.totalorder %s328, 1
                  %s333 = sphi %s244, %s244
                  %s334 = sphi %s238, %s238
                $region66: #{tpu_custom_call.1} parent=62 // loop_header_branch
                  %331 = sbr.rel (%p329) target = $region70
                $region67: #{tpu_custom_call.1} parent=62 // loop_body
                  _
                $region68: #{tpu_custom_call.1} parent=62 // loop_footer
                  %s332 = sadd.s32 1, %s328
                $region69: #{tpu_custom_call.1} parent=62 // loop_footer_branch
                  %327 = sbr.rel target = $region65
                $region70: #{tpu_custom_call.1} parent=62 // loop_exit
                  _
                %s336 = ssub.s32 16, 1
                loop: start=0, step=1, limit=1
                $region71: #{tpu_custom_call.1} parent=62 // loop_pre_header
                  _
                $region72: #{tpu_custom_call.1} parent=62 // loop_header
                  %s338 = sphi 0, %s342
                  %p339 = scmp.ge.s32.totalorder %s338, 1
                  %s343 = sphi %s244, %s244
                  %s344 = sphi %s238, %s238
                $region73: #{tpu_custom_call.1} parent=62 // loop_header_branch
                  %341 = sbr.rel (%p339) target = $region77
                $region74: #{tpu_custom_call.1} parent=62 // loop_body
                  %v345 = vld [vmem:[%s343] sm:%s336]
                  %346 = vst [vmem:[%s344] sm:%s336] %v345
                  %v347 = vld [vmem:[%s343 + $0x4] sm:%s336]
                  %348 = vst [vmem:[%s344 + $0x4] sm:%s336] %v347
                  %v349 = vld [vmem:[%s343 + $0x8] sm:%s336]
                  %350 = vst [vmem:[%s344 + $0x8] sm:%s336] %v349
                  %v351 = vld [vmem:[%s343 + $0xc] sm:%s336]
                  %352 = vst [vmem:[%s344 + $0xc] sm:%s336] %v351
                  %v353 = vld [vmem:[%s343 + $0x10] sm:%s336]
                  %354 = vst [vmem:[%s344 + $0x10] sm:%s336] %v353
                  %v355 = vld [vmem:[%s343 + $0x14] sm:%s336]
                  %356 = vst [vmem:[%s344 + $0x14] sm:%s336] %v355
                  %v357 = vld [vmem:[%s343 + $0x18] sm:%s336]
                  %358 = vst [vmem:[%s344 + $0x18] sm:%s336] %v357
                  %v359 = vld [vmem:[%s343 + $0x1c] sm:%s336]
                  %360 = vst [vmem:[%s344 + $0x1c] sm:%s336] %v359
                  %v361 = vld [vmem:[%s343 + $0x20] sm:%s336]
                  %362 = vst [vmem:[%s344 + $0x20] sm:%s336] %v361
                  %v363 = vld [vmem:[%s343 + $0x24] sm:%s336]
                  %364 = vst [vmem:[%s344 + $0x24] sm:%s336] %v363
                  %v365 = vld [vmem:[%s343 + $0x28] sm:%s336]
                  %366 = vst [vmem:[%s344 + $0x28] sm:%s336] %v365
                  %v367 = vld [vmem:[%s343 + $0x2c] sm:%s336]
                  %368 = vst [vmem:[%s344 + $0x2c] sm:%s336] %v367
                  %v369 = vld [vmem:[%s343 + $0x30] sm:%s336]
                  %370 = vst [vmem:[%s344 + $0x30] sm:%s336] %v369
                  %v371 = vld [vmem:[%s343 + $0x34] sm:%s336]
                  %372 = vst [vmem:[%s344 + $0x34] sm:%s336] %v371
                  %v373 = vld [vmem:[%s343 + $0x38] sm:%s336]
                  %374 = vst [vmem:[%s344 + $0x38] sm:%s336] %v373
                  %v375 = vld [vmem:[%s343 + $0x3c] sm:%s336]
                  %376 = vst [vmem:[%s344 + $0x3c] sm:%s336] %v375
                  %v377 = vld [vmem:[%s343 + $0x80] sm:%s336]
                  %378 = vst [vmem:[%s344 + $0x40] sm:%s336] %v377
                  %v379 = vld [vmem:[%s343 + $0x84] sm:%s336]
                  %380 = vst [vmem:[%s344 + $0x44] sm:%s336] %v379
                  %v381 = vld [vmem:[%s343 + $0x88] sm:%s336]
                  %382 = vst [vmem:[%s344 + $0x48] sm:%s336] %v381
                  %v383 = vld [vmem:[%s343 + $0x8c] sm:%s336]
                  %384 = vst [vmem:[%s344 + $0x4c] sm:%s336] %v383
                  %v385 = vld [vmem:[%s343 + $0x90] sm:%s336]
                  %386 = vst [vmem:[%s344 + $0x50] sm:%s336] %v385
                  %v387 = vld [vmem:[%s343 + $0x94] sm:%s336]
                  %388 = vst [vmem:[%s344 + $0x54] sm:%s336] %v387
                  %v389 = vld [vmem:[%s343 + $0x98] sm:%s336]
                  %390 = vst [vmem:[%s344 + $0x58] sm:%s336] %v389
                  %v391 = vld [vmem:[%s343 + $0x9c] sm:%s336]
                  %392 = vst [vmem:[%s344 + $0x5c] sm:%s336] %v391
                  %v393 = vld [vmem:[%s343 + $0xa0] sm:%s336]
                  %394 = vst [vmem:[%s344 + $0x60] sm:%s336] %v393
                  %v395 = vld [vmem:[%s343 + $0xa4] sm:%s336]
                  %396 = vst [vmem:[%s344 + $0x64] sm:%s336] %v395
                  %v397 = vld [vmem:[%s343 + $0xa8] sm:%s336]
                  %398 = vst [vmem:[%s344 + $0x68] sm:%s336] %v397
                  %v399 = vld [vmem:[%s343 + $0xac] sm:%s336]
                  %400 = vst [vmem:[%s344 + $0x6c] sm:%s336] %v399
                  %v401 = vld [vmem:[%s343 + $0xb0] sm:%s336]
                  %402 = vst [vmem:[%s344 + $0x70] sm:%s336] %v401
                  %v403 = vld [vmem:[%s343 + $0xb4] sm:%s336]
                  %404 = vst [vmem:[%s344 + $0x74] sm:%s336] %v403
                  %v405 = vld [vmem:[%s343 + $0xb8] sm:%s336]
                  %406 = vst [vmem:[%s344 + $0x78] sm:%s336] %v405
                  %v407 = vld [vmem:[%s343 + $0xbc] sm:%s336]
                  %408 = vst [vmem:[%s344 + $0x7c] sm:%s336] %v407
                $region75: #{tpu_custom_call.1} parent=62 // loop_footer
                  %s342 = sadd.s32 1, %s338
                $region76: #{tpu_custom_call.1} parent=62 // loop_footer_branch
                  %337 = sbr.rel target = $region72
                $region77: #{tpu_custom_call.1} parent=62 // loop_exit
                  _
              $region63: #{tpu_custom_call.1} parent=47 // pred_fallthru
                _
            $region48: #{tpu_custom_call.1} parent=43 // pred_fallthru
              _
            // Predicated region
            $region49: #{tpu_custom_call.1} parent=43 // pred_check
              _
            $region50: #{tpu_custom_call.1} parent=43 // pred_check_branch
              %250 = sbr.rel (0) target = $region52
            $region51: #{tpu_custom_call.1} parent=43 // pred_region
              %s252 = ssub.s32 16, 1
              loop: start=0, step=1, limit=1
              $region53: #{tpu_custom_call.1} parent=51 // loop_pre_header
                _
              $region54: #{tpu_custom_call.1} parent=51 // loop_header
                %s254 = sphi 0, %s258
                %p255 = scmp.ge.s32.totalorder %s254, 1
                %s259 = sphi %s244, %s244
                %s260 = sphi %s238, %s238
              $region55: #{tpu_custom_call.1} parent=51 // loop_header_branch
                %257 = sbr.rel (%p255) target = $region59
              $region56: #{tpu_custom_call.1} parent=51 // loop_body
                %v261 = vld [vmem:[%s259] sm:%s252]
                %262 = vst [vmem:[%s260] sm:%s252] %v261
                %v263 = vld [vmem:[%s259 + $0x4] sm:%s252]
                %264 = vst [vmem:[%s260 + $0x4] sm:%s252] %v263
                %v265 = vld [vmem:[%s259 + $0x8] sm:%s252]
                %266 = vst [vmem:[%s260 + $0x8] sm:%s252] %v265
                %v267 = vld [vmem:[%s259 + $0xc] sm:%s252]
                %268 = vst [vmem:[%s260 + $0xc] sm:%s252] %v267
                %v269 = vld [vmem:[%s259 + $0x10] sm:%s252]
                %270 = vst [vmem:[%s260 + $0x10] sm:%s252] %v269
                %v271 = vld [vmem:[%s259 + $0x14] sm:%s252]
                %272 = vst [vmem:[%s260 + $0x14] sm:%s252] %v271
                %v273 = vld [vmem:[%s259 + $0x18] sm:%s252]
                %274 = vst [vmem:[%s260 + $0x18] sm:%s252] %v273
                %v275 = vld [vmem:[%s259 + $0x1c] sm:%s252]
                %276 = vst [vmem:[%s260 + $0x1c] sm:%s252] %v275
                %v277 = vld [vmem:[%s259 + $0x20] sm:%s252]
                %278 = vst [vmem:[%s260 + $0x20] sm:%s252] %v277
                %v279 = vld [vmem:[%s259 + $0x24] sm:%s252]
                %280 = vst [vmem:[%s260 + $0x24] sm:%s252] %v279
                %v281 = vld [vmem:[%s259 + $0x28] sm:%s252]
                %282 = vst [vmem:[%s260 + $0x28] sm:%s252] %v281
                %v283 = vld [vmem:[%s259 + $0x2c] sm:%s252]
                %284 = vst [vmem:[%s260 + $0x2c] sm:%s252] %v283
                %v285 = vld [vmem:[%s259 + $0x30] sm:%s252]
                %286 = vst [vmem:[%s260 + $0x30] sm:%s252] %v285
                %v287 = vld [vmem:[%s259 + $0x34] sm:%s252]
                %288 = vst [vmem:[%s260 + $0x34] sm:%s252] %v287
                %v289 = vld [vmem:[%s259 + $0x38] sm:%s252]
                %290 = vst [vmem:[%s260 + $0x38] sm:%s252] %v289
                %v291 = vld [vmem:[%s259 + $0x3c] sm:%s252]
                %292 = vst [vmem:[%s260 + $0x3c] sm:%s252] %v291
                %v293 = vld [vmem:[%s259 + $0x80] sm:%s252]
                %294 = vst [vmem:[%s260 + $0x40] sm:%s252] %v293
                %v295 = vld [vmem:[%s259 + $0x84] sm:%s252]
                %296 = vst [vmem:[%s260 + $0x44] sm:%s252] %v295
                %v297 = vld [vmem:[%s259 + $0x88] sm:%s252]
                %298 = vst [vmem:[%s260 + $0x48] sm:%s252] %v297
                %v299 = vld [vmem:[%s259 + $0x8c] sm:%s252]
                %300 = vst [vmem:[%s260 + $0x4c] sm:%s252] %v299
                %v301 = vld [vmem:[%s259 + $0x90] sm:%s252]
                %302 = vst [vmem:[%s260 + $0x50] sm:%s252] %v301
                %v303 = vld [vmem:[%s259 + $0x94] sm:%s252]
                %304 = vst [vmem:[%s260 + $0x54] sm:%s252] %v303
                %v305 = vld [vmem:[%s259 + $0x98] sm:%s252]
                %306 = vst [vmem:[%s260 + $0x58] sm:%s252] %v305
                %v307 = vld [vmem:[%s259 + $0x9c] sm:%s252]
                %308 = vst [vmem:[%s260 + $0x5c] sm:%s252] %v307
                %v309 = vld [vmem:[%s259 + $0xa0] sm:%s252]
                %310 = vst [vmem:[%s260 + $0x60] sm:%s252] %v309
                %v311 = vld [vmem:[%s259 + $0xa4] sm:%s252]
                %312 = vst [vmem:[%s260 + $0x64] sm:%s252] %v311
                %v313 = vld [vmem:[%s259 + $0xa8] sm:%s252]
                %314 = vst [vmem:[%s260 + $0x68] sm:%s252] %v313
                %v315 = vld [vmem:[%s259 + $0xac] sm:%s252]
                %316 = vst [vmem:[%s260 + $0x6c] sm:%s252] %v315
                %v317 = vld [vmem:[%s259 + $0xb0] sm:%s252]
                %318 = vst [vmem:[%s260 + $0x70] sm:%s252] %v317
                %v319 = vld [vmem:[%s259 + $0xb4] sm:%s252]
                %320 = vst [vmem:[%s260 + $0x74] sm:%s252] %v319
                %v321 = vld [vmem:[%s259 + $0xb8] sm:%s252]
                %322 = vst [vmem:[%s260 + $0x78] sm:%s252] %v321
                %v323 = vld [vmem:[%s259 + $0xbc] sm:%s252]
                %324 = vst [vmem:[%s260 + $0x7c] sm:%s252] %v323
              $region57: #{tpu_custom_call.1} parent=51 // loop_footer
                %s258 = sadd.s32 1, %s254
              $region58: #{tpu_custom_call.1} parent=51 // loop_footer_branch
                %253 = sbr.rel target = $region54
              $region59: #{tpu_custom_call.1} parent=51 // loop_exit
                _
            $region52: #{tpu_custom_call.1} parent=43 // pred_fallthru
              _
          $region44: #{tpu_custom_call.1} parent=39 // pred_fallthru
            _
          %409 = vnop
        $region40: #{tpu_custom_call.1} parent=35 // pred_fallthru
          _
      $region36: #{tpu_custom_call.1} parent=5 // pred_fallthru
        _
      %p410 = scmp.le.s32.totalorder 1, %s16
      %p411 = scmp.lt.s32.totalorder %s16, 5
      %p412 = pnand %p410, %p411
      %p413 = pneg %p412
      // Predicated region
      $region78: #{tpu_custom_call.1} parent=5 // pred_check
        _
      $region79: #{tpu_custom_call.1} parent=5 // pred_check_branch
        %415 = sbr.rel (%p412) target = $region81
      $region80: #{tpu_custom_call.1} parent=5 // pred_region
        %s416 = ssub.s32 %s16, 1
        %s417 = sand.u32 %s43, 1
        %s418 = sand.u32 %s43, 1
        %s419 = smul.addr %s418, 128
        %s420 = scalar_lea.vmem [#allocation3], %s419
        // Predicated region
        $region82: #{tpu_custom_call.1} parent=80 // pred_check
          %p421 = pneg %p56
        $region83: #{tpu_custom_call.1} parent=80 // pred_check_branch
          %423 = sbr.rel (%p421) target = $region85
        $region84: #{tpu_custom_call.1} parent=80 // pred_region
          _
        $region85: #{tpu_custom_call.1} parent=80 // pred_fallthru
          _
        // Predicated region
        $region86: #{tpu_custom_call.1} parent=80 // pred_check
          %p424 = pneg %p98
        $region87: #{tpu_custom_call.1} parent=80 // pred_check_branch
          %426 = sbr.rel (%p424) target = $region89
        $region88: #{tpu_custom_call.1} parent=80 // pred_region
          %428 = dma.done [#allocation5], 16384
        $region89: #{tpu_custom_call.1} parent=80 // pred_fallthru
          _
        %s429 = sand.u32 %s43, 1
        %s430 = sand.u32 %s43, 1
        %s431 = smul.addr %s430, 128
        %s432 = scalar_lea.vmem [#allocation3], %s431
        %p433 = pneg %p56
        %p434 = pneg %p53
        %p435 = pneg %p77
        %p436 = pneg %p74
        %p437 = pneg %p98
        %p438 = pneg %p95
        %p439 = pneg %p119
        %p440 = pneg %p116
        %p441 = pneg %p140
        %p442 = pneg %p137
        %p443 = pneg %p161
        %p444 = pneg %p158
        %p445 = pneg %p187
        %p446 = pneg %p184
        %s447 = sand.u32 %s174, 1
        %s448 = scalar_lea.sflag [#allocation6], %s447
        %s449 = sand.u32 %s174, 1
        %s450 = smul.addr %s449, 2
        %s451 = scalar_lea.vmem [#allocation7], %s450
        %s452 = smul.u32 2, %s25
        %s453 = smul.u32 16, %s26
        %p454 = scmp.eq.s32.totalorder %s26, 0
        // Predicated region
        $region90: #{tpu_custom_call.1} parent=80 // pred_check
          %p455 = pneg %p454
        $region91: #{tpu_custom_call.1} parent=80 // pred_check_branch
          %457 = sbr.rel (%p455) target = $region93
        $region92: #{tpu_custom_call.1} parent=80 // pred_region
          %458 = vst [vmem:[#allocation2] sm:$0xff] 0.0
          %459 = vst [vmem:[#allocation2 + $0x8] sm:$0xff] 0.0
          %460 = vst [vmem:[#allocation2 + $0x10] sm:$0xff] 0.0
          %461 = vst [vmem:[#allocation2 + $0x18] sm:$0xff] 0.0
        $region93: #{tpu_custom_call.1} parent=80 // pred_fallthru
          _
        %v462 = vld [vmem:[%s420] sm:$0xf]
        %v463 = vld [vmem:[%s420 + $0x4] sm:$0xf]
        %v464 = vld [vmem:[%s420 + $0x8] sm:$0xf]
        %v465 = vld [vmem:[%s420 + $0xc] sm:$0xf]
        %v466 = vld [vmem:[%s420 + $0x10] sm:$0xf]
        %v467 = vld [vmem:[%s420 + $0x14] sm:$0xf]
        %v468 = vld [vmem:[%s420 + $0x18] sm:$0xf]
        %v469 = vld [vmem:[%s420 + $0x1c] sm:$0xf]
        %v470 = vld [vmem:[%s420 + $0x20] sm:$0xf]
        %v471 = vld [vmem:[%s420 + $0x24] sm:$0xf]
        %v472 = vld [vmem:[%s420 + $0x28] sm:$0xf]
        %v473 = vld [vmem:[%s420 + $0x2c] sm:$0xf]
        %v474 = vld [vmem:[%s420 + $0x30] sm:$0xf]
        %v475 = vld [vmem:[%s420 + $0x34] sm:$0xf]
        %v476 = vld [vmem:[%s420 + $0x38] sm:$0xf]
        %v477 = vld [vmem:[%s420 + $0x3c] sm:$0xf]
        %v478 = vld [vmem:[%s420 + $0x40] sm:$0xf]
        %v479 = vld [vmem:[%s420 + $0x44] sm:$0xf]
        %v480 = vld [vmem:[%s420 + $0x48] sm:$0xf]
        %v481 = vld [vmem:[%s420 + $0x4c] sm:$0xf]
        %v482 = vld [vmem:[%s420 + $0x50] sm:$0xf]
        %v483 = vld [vmem:[%s420 + $0x54] sm:$0xf]
        %v484 = vld [vmem:[%s420 + $0x58] sm:$0xf]
        %v485 = vld [vmem:[%s420 + $0x5c] sm:$0xf]
        %v486 = vld [vmem:[%s420 + $0x60] sm:$0xf]
        %v487 = vld [vmem:[%s420 + $0x64] sm:$0xf]
        %v488 = vld [vmem:[%s420 + $0x68] sm:$0xf]
        %v489 = vld [vmem:[%s420 + $0x6c] sm:$0xf]
        %v490 = vld [vmem:[%s420 + $0x70] sm:$0xf]
        %v491 = vld [vmem:[%s420 + $0x74] sm:$0xf]
        %v492 = vld [vmem:[%s420 + $0x78] sm:$0xf]
        %v493 = vld [vmem:[%s420 + $0x7c] sm:$0xf]
        %v494 = vunpack.c.l.bf16 %v462
        %v495 = vunpack.c.l.bf16 %v463
        %v496 = vunpack.c.l.bf16 %v464
        %v497 = vunpack.c.l.bf16 %v465
        %v498 = vunpack.c.l.bf16 %v466
        %v499 = vunpack.c.l.bf16 %v467
        %v500 = vunpack.c.l.bf16 %v468
        %v501 = vunpack.c.l.bf16 %v469
        %v502 = vunpack.c.l.bf16 %v470
        %v503 = vunpack.c.l.bf16 %v471
        %v504 = vunpack.c.l.bf16 %v472
        %v505 = vunpack.c.l.bf16 %v473
        %v506 = vunpack.c.l.bf16 %v474
        %v507 = vunpack.c.l.bf16 %v475
        %v508 = vunpack.c.l.bf16 %v476
        %v509 = vunpack.c.l.bf16 %v477
        %v510 = vunpack.c.l.bf16 %v478
        %v511 = vunpack.c.l.bf16 %v479
        %v512 = vunpack.c.l.bf16 %v480
        %v513 = vunpack.c.l.bf16 %v481
        %v514 = vunpack.c.l.bf16 %v482
        %v515 = vunpack.c.l.bf16 %v483
        %v516 = vunpack.c.l.bf16 %v484
        %v517 = vunpack.c.l.bf16 %v485
        %v518 = vunpack.c.l.bf16 %v486
        %v519 = vunpack.c.l.bf16 %v487
        %v520 = vunpack.c.l.bf16 %v488
        %v521 = vunpack.c.l.bf16 %v489
        %v522 = vunpack.c.l.bf16 %v490
        %v523 = vunpack.c.l.bf16 %v491
        %v524 = vunpack.c.l.bf16 %v492
        %v525 = vunpack.c.l.bf16 %v493
        %v526 = vld [vmem:[%s1] sm:$0x77]
        %v527 = vld [vmem:[%s1 + $0x8] sm:$0x77]
        %v528 = vld [vmem:[%s1 + $0x10] sm:$0x77]
        %v529 = vld [vmem:[%s1 + $0x18] sm:$0x77]
        %v530 = vld [vmem:[%s1 + $0x20] sm:$0x77]
        %v531 = vld [vmem:[%s1 + $0x28] sm:$0x77]
        %v532 = vld [vmem:[%s1 + $0x30] sm:$0x77]
        %v533 = vld [vmem:[%s1 + $0x38] sm:$0x77]
        %535 = vset.pattern.permute.xlu0 0
        %536 = vperm.xlu0 %535, %v494
        %v537 = vpop.permute.xlu0 %536
        %540 = vset.pattern.permute.xlu0 0
        %541 = vperm.xlu0 %540, %v495
        %v542 = vpop.permute.xlu0 %541
        %545 = vset.pattern.permute.xlu0 0
        %546 = vperm.xlu0 %545, %v496
        %v547 = vpop.permute.xlu0 %546
        %550 = vset.pattern.permute.xlu0 0
        %551 = vperm.xlu0 %550, %v497
        %v552 = vpop.permute.xlu0 %551
        %555 = vset.pattern.permute.xlu0 0
        %556 = vperm.xlu0 %555, %v498
        %v557 = vpop.permute.xlu0 %556
        %560 = vset.pattern.permute.xlu0 0
        %561 = vperm.xlu0 %560, %v499
        %v562 = vpop.permute.xlu0 %561
        %565 = vset.pattern.permute.xlu0 0
        %566 = vperm.xlu0 %565, %v500
        %v567 = vpop.permute.xlu0 %566
        %570 = vset.pattern.permute.xlu0 0
        %571 = vperm.xlu0 %570, %v501
        %v572 = vpop.permute.xlu0 %571
        %575 = vset.pattern.permute.xlu0 0
        %576 = vperm.xlu0 %575, %v502
        %v577 = vpop.permute.xlu0 %576
        %580 = vset.pattern.permute.xlu0 0
        %581 = vperm.xlu0 %580, %v503
        %v582 = vpop.permute.xlu0 %581
        %585 = vset.pattern.permute.xlu0 0
        %586 = vperm.xlu0 %585, %v504
        %v587 = vpop.permute.xlu0 %586
        %590 = vset.pattern.permute.xlu0 0
        %591 = vperm.xlu0 %590, %v505
        %v592 = vpop.permute.xlu0 %591
        %595 = vset.pattern.permute.xlu0 0
        %596 = vperm.xlu0 %595, %v506
        %v597 = vpop.permute.xlu0 %596
        %600 = vset.pattern.permute.xlu0 0
        %601 = vperm.xlu0 %600, %v507
        %v602 = vpop.permute.xlu0 %601
        %605 = vset.pattern.permute.xlu0 0
        %606 = vperm.xlu0 %605, %v508
        %v607 = vpop.permute.xlu0 %606
        %610 = vset.pattern.permute.xlu0 0
        %611 = vperm.xlu0 %610, %v509
        %v612 = vpop.permute.xlu0 %611
        %615 = vset.pattern.permute.xlu0 0
        %616 = vperm.xlu0 %615, %v510
        %v617 = vpop.permute.xlu0 %616
        %620 = vset.pattern.permute.xlu0 0
        %621 = vperm.xlu0 %620, %v511
        %v622 = vpop.permute.xlu0 %621
        %625 = vset.pattern.permute.xlu0 0
        %626 = vperm.xlu0 %625, %v512
        %v627 = vpop.permute.xlu0 %626
        %630 = vset.pattern.permute.xlu0 0
        %631 = vperm.xlu0 %630, %v513
        %v632 = vpop.permute.xlu0 %631
        %635 = vset.pattern.permute.xlu0 0
        %636 = vperm.xlu0 %635, %v514
        %v637 = vpop.permute.xlu0 %636
        %640 = vset.pattern.permute.xlu0 0
        %641 = vperm.xlu0 %640, %v515
        %v642 = vpop.permute.xlu0 %641
        %645 = vset.pattern.permute.xlu0 0
        %646 = vperm.xlu0 %645, %v516
        %v647 = vpop.permute.xlu0 %646
        %650 = vset.pattern.permute.xlu0 0
        %651 = vperm.xlu0 %650, %v517
        %v652 = vpop.permute.xlu0 %651
        %655 = vset.pattern.permute.xlu0 0
        %656 = vperm.xlu0 %655, %v518
        %v657 = vpop.permute.xlu0 %656
        %660 = vset.pattern.permute.xlu0 0
        %661 = vperm.xlu0 %660, %v519
        %v662 = vpop.permute.xlu0 %661
        %665 = vset.pattern.permute.xlu0 0
        %666 = vperm.xlu0 %665, %v520
        %v667 = vpop.permute.xlu0 %666
        %670 = vset.pattern.permute.xlu0 0
        %671 = vperm.xlu0 %670, %v521
        %v672 = vpop.permute.xlu0 %671
        %675 = vset.pattern.permute.xlu0 0
        %676 = vperm.xlu0 %675, %v522
        %v677 = vpop.permute.xlu0 %676
        %680 = vset.pattern.permute.xlu0 0
        %681 = vperm.xlu0 %680, %v523
        %v682 = vpop.permute.xlu0 %681
        %685 = vset.pattern.permute.xlu0 0
        %686 = vperm.xlu0 %685, %v524
        %v687 = vpop.permute.xlu0 %686
        %690 = vset.pattern.permute.xlu0 0
        %691 = vperm.xlu0 %690, %v525
        %v692 = vpop.permute.xlu0 %691
        %v702 = vperm.slane %v526, 0
        %v703 = vperm.slane %v526, 4
        %v704 = vperm.slane %v527, 0
        %v705 = vperm.slane %v527, 4
        %v706 = vperm.slane %v528, 0
        %v707 = vperm.slane %v528, 4
        %v708 = vperm.slane %v529, 0
        %v709 = vperm.slane %v529, 4
        %v710 = vperm.slane %v530, 0
        %v711 = vperm.slane %v530, 4
        %v712 = vperm.slane %v531, 0
        %v713 = vperm.slane %v531, 4
        %v714 = vperm.slane %v532, 0
        %v715 = vperm.slane %v532, 4
        %v716 = vperm.slane %v533, 0
        %v717 = vperm.slane %v533, 4
        %v734 = vperm.slane %v702, 0
        %v735 = vperm.slane %v703, 0
        %v736 = vperm.slane %v704, 0
        %v737 = vperm.slane %v705, 0
        %v738 = vperm.slane %v706, 0
        %v739 = vperm.slane %v707, 0
        %v740 = vperm.slane %v708, 0
        %v741 = vperm.slane %v709, 0
        %v742 = vperm.slane %v710, 0
        %v743 = vperm.slane %v711, 0
        %v744 = vperm.slane %v712, 0
        %v745 = vperm.slane %v713, 0
        %v746 = vperm.slane %v714, 0
        %v747 = vperm.slane %v715, 0
        %v748 = vperm.slane %v716, 0
        %v749 = vperm.slane %v717, 0
        %v750 = vmul.f32 %v537, %v734
        %v751 = vmul.f32 %v537, %v735
        %v752 = vmul.f32 %v537, %v736
        %v753 = vmul.f32 %v537, %v737
        %v754 = vmul.f32 %v537, %v738
        %v755 = vmul.f32 %v537, %v739
        %v756 = vmul.f32 %v537, %v740
        %v757 = vmul.f32 %v537, %v741
        %v758 = vmul.f32 %v537, %v742
        %v759 = vmul.f32 %v537, %v743
        %v760 = vmul.f32 %v537, %v744
        %v761 = vmul.f32 %v537, %v745
        %v762 = vmul.f32 %v537, %v746
        %v763 = vmul.f32 %v537, %v747
        %v764 = vmul.f32 %v537, %v748
        %v765 = vmul.f32 %v537, %v749
        %v766 = vmul.f32 %v542, %v734
        %v767 = vmul.f32 %v542, %v735
        %v768 = vmul.f32 %v542, %v736
        %v769 = vmul.f32 %v542, %v737
        %v770 = vmul.f32 %v542, %v738
        %v771 = vmul.f32 %v542, %v739
        %v772 = vmul.f32 %v542, %v740
        %v773 = vmul.f32 %v542, %v741
        %v774 = vmul.f32 %v542, %v742
        %v775 = vmul.f32 %v542, %v743
        %v776 = vmul.f32 %v542, %v744
        %v777 = vmul.f32 %v542, %v745
        %v778 = vmul.f32 %v542, %v746
        %v779 = vmul.f32 %v542, %v747
        %v780 = vmul.f32 %v542, %v748
        %v781 = vmul.f32 %v542, %v749
        %v782 = vmul.f32 %v547, %v734
        %v783 = vmul.f32 %v547, %v735
        %v784 = vmul.f32 %v547, %v736
        %v785 = vmul.f32 %v547, %v737
        %v786 = vmul.f32 %v547, %v738
        %v787 = vmul.f32 %v547, %v739
        %v788 = vmul.f32 %v547, %v740
        %v789 = vmul.f32 %v547, %v741
        %v790 = vmul.f32 %v547, %v742
        %v791 = vmul.f32 %v547, %v743
        %v792 = vmul.f32 %v547, %v744
        %v793 = vmul.f32 %v547, %v745
        %v794 = vmul.f32 %v547, %v746
        %v795 = vmul.f32 %v547, %v747
        %v796 = vmul.f32 %v547, %v748
        %v797 = vmul.f32 %v547, %v749
        %v798 = vmul.f32 %v552, %v734
        %v799 = vmul.f32 %v552, %v735
        %v800 = vmul.f32 %v552, %v736
        %v801 = vmul.f32 %v552, %v737
        %v802 = vmul.f32 %v552, %v738
        %v803 = vmul.f32 %v552, %v739
        %v804 = vmul.f32 %v552, %v740
        %v805 = vmul.f32 %v552, %v741
        %v806 = vmul.f32 %v552, %v742
        %v807 = vmul.f32 %v552, %v743
        %v808 = vmul.f32 %v552, %v744
        %v809 = vmul.f32 %v552, %v745
        %v810 = vmul.f32 %v552, %v746
        %v811 = vmul.f32 %v552, %v747
        %v812 = vmul.f32 %v552, %v748
        %v813 = vmul.f32 %v552, %v749
        %v814 = vmul.f32 %v557, %v734
        %v815 = vmul.f32 %v557, %v735
        %v816 = vmul.f32 %v557, %v736
        %v817 = vmul.f32 %v557, %v737
        %v818 = vmul.f32 %v557, %v738
        %v819 = vmul.f32 %v557, %v739
        %v820 = vmul.f32 %v557, %v740
        %v821 = vmul.f32 %v557, %v741
        %v822 = vmul.f32 %v557, %v742
        %v823 = vmul.f32 %v557, %v743
        %v824 = vmul.f32 %v557, %v744
        %v825 = vmul.f32 %v557, %v745
        %v826 = vmul.f32 %v557, %v746
        %v827 = vmul.f32 %v557, %v747
        %v828 = vmul.f32 %v557, %v748
        %v829 = vmul.f32 %v557, %v749
        %v830 = vmul.f32 %v562, %v734
        %v831 = vmul.f32 %v562, %v735
        %v832 = vmul.f32 %v562, %v736
        %v833 = vmul.f32 %v562, %v737
        %v834 = vmul.f32 %v562, %v738
        %v835 = vmul.f32 %v562, %v739
        %v836 = vmul.f32 %v562, %v740
        %v837 = vmul.f32 %v562, %v741
        %v838 = vmul.f32 %v562, %v742
        %v839 = vmul.f32 %v562, %v743
        %v840 = vmul.f32 %v562, %v744
        %v841 = vmul.f32 %v562, %v745
        %v842 = vmul.f32 %v562, %v746
        %v843 = vmul.f32 %v562, %v747
        %v844 = vmul.f32 %v562, %v748
        %v845 = vmul.f32 %v562, %v749
        %v846 = vmul.f32 %v567, %v734
        %v847 = vmul.f32 %v567, %v735
        %v848 = vmul.f32 %v567, %v736
        %v849 = vmul.f32 %v567, %v737
        %v850 = vmul.f32 %v567, %v738
        %v851 = vmul.f32 %v567, %v739
        %v852 = vmul.f32 %v567, %v740
        %v853 = vmul.f32 %v567, %v741
        %v854 = vmul.f32 %v567, %v742
        %v855 = vmul.f32 %v567, %v743
        %v856 = vmul.f32 %v567, %v744
        %v857 = vmul.f32 %v567, %v745
        %v858 = vmul.f32 %v567, %v746
        %v859 = vmul.f32 %v567, %v747
        %v860 = vmul.f32 %v567, %v748
        %v861 = vmul.f32 %v567, %v749
        %v862 = vmul.f32 %v572, %v734
        %v863 = vmul.f32 %v572, %v735
        %v864 = vmul.f32 %v572, %v736
        %v865 = vmul.f32 %v572, %v737
        %v866 = vmul.f32 %v572, %v738
        %v867 = vmul.f32 %v572, %v739
        %v868 = vmul.f32 %v572, %v740
        %v869 = vmul.f32 %v572, %v741
        %v870 = vmul.f32 %v572, %v742
        %v871 = vmul.f32 %v572, %v743
        %v872 = vmul.f32 %v572, %v744
        %v873 = vmul.f32 %v572, %v745
        %v874 = vmul.f32 %v572, %v746
        %v875 = vmul.f32 %v572, %v747
        %v876 = vmul.f32 %v572, %v748
        %v877 = vmul.f32 %v572, %v749
        %v878 = vmul.f32 %v577, %v734
        %v879 = vmul.f32 %v577, %v735
        %v880 = vmul.f32 %v577, %v736
        %v881 = vmul.f32 %v577, %v737
        %v882 = vmul.f32 %v577, %v738
        %v883 = vmul.f32 %v577, %v739
        %v884 = vmul.f32 %v577, %v740
        %v885 = vmul.f32 %v577, %v741
        %v886 = vmul.f32 %v577, %v742
        %v887 = vmul.f32 %v577, %v743
        %v888 = vmul.f32 %v577, %v744
        %v889 = vmul.f32 %v577, %v745
        %v890 = vmul.f32 %v577, %v746
        %v891 = vmul.f32 %v577, %v747
        %v892 = vmul.f32 %v577, %v748
        %v893 = vmul.f32 %v577, %v749
        %v894 = vmul.f32 %v582, %v734
        %v895 = vmul.f32 %v582, %v735
        %v896 = vmul.f32 %v582, %v736
        %v897 = vmul.f32 %v582, %v737
        %v898 = vmul.f32 %v582, %v738
        %v899 = vmul.f32 %v582, %v739
        %v900 = vmul.f32 %v582, %v740
        %v901 = vmul.f32 %v582, %v741
        %v902 = vmul.f32 %v582, %v742
        %v903 = vmul.f32 %v582, %v743
        %v904 = vmul.f32 %v582, %v744
        %v905 = vmul.f32 %v582, %v745
        %v906 = vmul.f32 %v582, %v746
        %v907 = vmul.f32 %v582, %v747
        %v908 = vmul.f32 %v582, %v748
        %v909 = vmul.f32 %v582, %v749
        %v910 = vmul.f32 %v587, %v734
        %v911 = vmul.f32 %v587, %v735
        %v912 = vmul.f32 %v587, %v736
        %v913 = vmul.f32 %v587, %v737
        %v914 = vmul.f32 %v587, %v738
        %v915 = vmul.f32 %v587, %v739
        %v916 = vmul.f32 %v587, %v740
        %v917 = vmul.f32 %v587, %v741
        %v918 = vmul.f32 %v587, %v742
        %v919 = vmul.f32 %v587, %v743
        %v920 = vmul.f32 %v587, %v744
        %v921 = vmul.f32 %v587, %v745
        %v922 = vmul.f32 %v587, %v746
        %v923 = vmul.f32 %v587, %v747
        %v924 = vmul.f32 %v587, %v748
        %v925 = vmul.f32 %v587, %v749
        %v926 = vmul.f32 %v592, %v734
        %v927 = vmul.f32 %v592, %v735
        %v928 = vmul.f32 %v592, %v736
        %v929 = vmul.f32 %v592, %v737
        %v930 = vmul.f32 %v592, %v738
        %v931 = vmul.f32 %v592, %v739
        %v932 = vmul.f32 %v592, %v740
        %v933 = vmul.f32 %v592, %v741
        %v934 = vmul.f32 %v592, %v742
        %v935 = vmul.f32 %v592, %v743
        %v936 = vmul.f32 %v592, %v744
        %v937 = vmul.f32 %v592, %v745
        %v938 = vmul.f32 %v592, %v746
        %v939 = vmul.f32 %v592, %v747
        %v940 = vmul.f32 %v592, %v748
        %v941 = vmul.f32 %v592, %v749
        %v942 = vmul.f32 %v597, %v734
        %v943 = vmul.f32 %v597, %v735
        %v944 = vmul.f32 %v597, %v736
        %v945 = vmul.f32 %v597, %v737
        %v946 = vmul.f32 %v597, %v738
        %v947 = vmul.f32 %v597, %v739
        %v948 = vmul.f32 %v597, %v740
        %v949 = vmul.f32 %v597, %v741
        %v950 = vmul.f32 %v597, %v742
        %v951 = vmul.f32 %v597, %v743
        %v952 = vmul.f32 %v597, %v744
        %v953 = vmul.f32 %v597, %v745
        %v954 = vmul.f32 %v597, %v746
        %v955 = vmul.f32 %v597, %v747
        %v956 = vmul.f32 %v597, %v748
        %v957 = vmul.f32 %v597, %v749
        %v958 = vmul.f32 %v602, %v734
        %v959 = vmul.f32 %v602, %v735
        %v960 = vmul.f32 %v602, %v736
        %v961 = vmul.f32 %v602, %v737
        %v962 = vmul.f32 %v602, %v738
        %v963 = vmul.f32 %v602, %v739
        %v964 = vmul.f32 %v602, %v740
        %v965 = vmul.f32 %v602, %v741
        %v966 = vmul.f32 %v602, %v742
        %v967 = vmul.f32 %v602, %v743
        %v968 = vmul.f32 %v602, %v744
        %v969 = vmul.f32 %v602, %v745
        %v970 = vmul.f32 %v602, %v746
        %v971 = vmul.f32 %v602, %v747
        %v972 = vmul.f32 %v602, %v748
        %v973 = vmul.f32 %v602, %v749
        %v974 = vmul.f32 %v607, %v734
        %v975 = vmul.f32 %v607, %v735
        %v976 = vmul.f32 %v607, %v736
        %v977 = vmul.f32 %v607, %v737
        %v978 = vmul.f32 %v607, %v738
        %v979 = vmul.f32 %v607, %v739
        %v980 = vmul.f32 %v607, %v740
        %v981 = vmul.f32 %v607, %v741
        %v982 = vmul.f32 %v607, %v742
        %v983 = vmul.f32 %v607, %v743
        %v984 = vmul.f32 %v607, %v744
        %v985 = vmul.f32 %v607, %v745
        %v986 = vmul.f32 %v607, %v746
        %v987 = vmul.f32 %v607, %v747
        %v988 = vmul.f32 %v607, %v748
        %v989 = vmul.f32 %v607, %v749
        %v990 = vmul.f32 %v612, %v734
        %v991 = vmul.f32 %v612, %v735
        %v992 = vmul.f32 %v612, %v736
        %v993 = vmul.f32 %v612, %v737
        %v994 = vmul.f32 %v612, %v738
        %v995 = vmul.f32 %v612, %v739
        %v996 = vmul.f32 %v612, %v740
        %v997 = vmul.f32 %v612, %v741
        %v998 = vmul.f32 %v612, %v742
        %v999 = vmul.f32 %v612, %v743
        %v1000 = vmul.f32 %v612, %v744
        %v1001 = vmul.f32 %v612, %v745
        %v1002 = vmul.f32 %v612, %v746
        %v1003 = vmul.f32 %v612, %v747
        %v1004 = vmul.f32 %v612, %v748
        %v1005 = vmul.f32 %v612, %v749
        %v1006 = vmul.f32 %v617, %v734
        %v1007 = vmul.f32 %v617, %v735
        %v1008 = vmul.f32 %v617, %v736
        %v1009 = vmul.f32 %v617, %v737
        %v1010 = vmul.f32 %v617, %v738
        %v1011 = vmul.f32 %v617, %v739
        %v1012 = vmul.f32 %v617, %v740
        %v1013 = vmul.f32 %v617, %v741
        %v1014 = vmul.f32 %v617, %v742
        %v1015 = vmul.f32 %v617, %v743
        %v1016 = vmul.f32 %v617, %v744
        %v1017 = vmul.f32 %v617, %v745
        %v1018 = vmul.f32 %v617, %v746
        %v1019 = vmul.f32 %v617, %v747
        %v1020 = vmul.f32 %v617, %v748
        %v1021 = vmul.f32 %v617, %v749
        %v1022 = vmul.f32 %v622, %v734
        %v1023 = vmul.f32 %v622, %v735
        %v1024 = vmul.f32 %v622, %v736
        %v1025 = vmul.f32 %v622, %v737
        %v1026 = vmul.f32 %v622, %v738
        %v1027 = vmul.f32 %v622, %v739
        %v1028 = vmul.f32 %v622, %v740
        %v1029 = vmul.f32 %v622, %v741
        %v1030 = vmul.f32 %v622, %v742
        %v1031 = vmul.f32 %v622, %v743
        %v1032 = vmul.f32 %v622, %v744
        %v1033 = vmul.f32 %v622, %v745
        %v1034 = vmul.f32 %v622, %v746
        %v1035 = vmul.f32 %v622, %v747
        %v1036 = vmul.f32 %v622, %v748
        %v1037 = vmul.f32 %v622, %v749
        %v1038 = vmul.f32 %v627, %v734
        %v1039 = vmul.f32 %v627, %v735
        %v1040 = vmul.f32 %v627, %v736
        %v1041 = vmul.f32 %v627, %v737
        %v1042 = vmul.f32 %v627, %v738
        %v1043 = vmul.f32 %v627, %v739
        %v1044 = vmul.f32 %v627, %v740
        %v1045 = vmul.f32 %v627, %v741
        %v1046 = vmul.f32 %v627, %v742
        %v1047 = vmul.f32 %v627, %v743
        %v1048 = vmul.f32 %v627, %v744
        %v1049 = vmul.f32 %v627, %v745
        %v1050 = vmul.f32 %v627, %v746
        %v1051 = vmul.f32 %v627, %v747
        %v1052 = vmul.f32 %v627, %v748
        %v1053 = vmul.f32 %v627, %v749
        %v1054 = vmul.f32 %v632, %v734
        %v1055 = vmul.f32 %v632, %v735
        %v1056 = vmul.f32 %v632, %v736
        %v1057 = vmul.f32 %v632, %v737
        %v1058 = vmul.f32 %v632, %v738
        %v1059 = vmul.f32 %v632, %v739
        %v1060 = vmul.f32 %v632, %v740
        %v1061 = vmul.f32 %v632, %v741
        %v1062 = vmul.f32 %v632, %v742
        %v1063 = vmul.f32 %v632, %v743
        %v1064 = vmul.f32 %v632, %v744
        %v1065 = vmul.f32 %v632, %v745
        %v1066 = vmul.f32 %v632, %v746
        %v1067 = vmul.f32 %v632, %v747
        %v1068 = vmul.f32 %v632, %v748
        %v1069 = vmul.f32 %v632, %v749
        %v1070 = vmul.f32 %v637, %v734
        %v1071 = vmul.f32 %v637, %v735
        %v1072 = vmul.f32 %v637, %v736
        %v1073 = vmul.f32 %v637, %v737
        %v1074 = vmul.f32 %v637, %v738
        %v1075 = vmul.f32 %v637, %v739
        %v1076 = vmul.f32 %v637, %v740
        %v1077 = vmul.f32 %v637, %v741
        %v1078 = vmul.f32 %v637, %v742
        %v1079 = vmul.f32 %v637, %v743
        %v1080 = vmul.f32 %v637, %v744
        %v1081 = vmul.f32 %v637, %v745
        %v1082 = vmul.f32 %v637, %v746
        %v1083 = vmul.f32 %v637, %v747
        %v1084 = vmul.f32 %v637, %v748
        %v1085 = vmul.f32 %v637, %v749
        %v1086 = vmul.f32 %v642, %v734
        %v1087 = vmul.f32 %v642, %v735
        %v1088 = vmul.f32 %v642, %v736
        %v1089 = vmul.f32 %v642, %v737
        %v1090 = vmul.f32 %v642, %v738
        %v1091 = vmul.f32 %v642, %v739
        %v1092 = vmul.f32 %v642, %v740
        %v1093 = vmul.f32 %v642, %v741
        %v1094 = vmul.f32 %v642, %v742
        %v1095 = vmul.f32 %v642, %v743
        %v1096 = vmul.f32 %v642, %v744
        %v1097 = vmul.f32 %v642, %v745
        %v1098 = vmul.f32 %v642, %v746
        %v1099 = vmul.f32 %v642, %v747
        %v1100 = vmul.f32 %v642, %v748
        %v1101 = vmul.f32 %v642, %v749
        %v1102 = vmul.f32 %v647, %v734
        %v1103 = vmul.f32 %v647, %v735
        %v1104 = vmul.f32 %v647, %v736
        %v1105 = vmul.f32 %v647, %v737
        %v1106 = vmul.f32 %v647, %v738
        %v1107 = vmul.f32 %v647, %v739
        %v1108 = vmul.f32 %v647, %v740
        %v1109 = vmul.f32 %v647, %v741
        %v1110 = vmul.f32 %v647, %v742
        %v1111 = vmul.f32 %v647, %v743
        %v1112 = vmul.f32 %v647, %v744
        %v1113 = vmul.f32 %v647, %v745
        %v1114 = vmul.f32 %v647, %v746
        %v1115 = vmul.f32 %v647, %v747
        %v1116 = vmul.f32 %v647, %v748
        %v1117 = vmul.f32 %v647, %v749
        %v1118 = vmul.f32 %v652, %v734
        %v1119 = vmul.f32 %v652, %v735
        %v1120 = vmul.f32 %v652, %v736
        %v1121 = vmul.f32 %v652, %v737
        %v1122 = vmul.f32 %v652, %v738
        %v1123 = vmul.f32 %v652, %v739
        %v1124 = vmul.f32 %v652, %v740
        %v1125 = vmul.f32 %v652, %v741
        %v1126 = vmul.f32 %v652, %v742
        %v1127 = vmul.f32 %v652, %v743
        %v1128 = vmul.f32 %v652, %v744
        %v1129 = vmul.f32 %v652, %v745
        %v1130 = vmul.f32 %v652, %v746
        %v1131 = vmul.f32 %v652, %v747
        %v1132 = vmul.f32 %v652, %v748
        %v1133 = vmul.f32 %v652, %v749
        %v1134 = vmul.f32 %v657, %v734
        %v1135 = vmul.f32 %v657, %v735
        %v1136 = vmul.f32 %v657, %v736
        %v1137 = vmul.f32 %v657, %v737
        %v1138 = vmul.f32 %v657, %v738
        %v1139 = vmul.f32 %v657, %v739
        %v1140 = vmul.f32 %v657, %v740
        %v1141 = vmul.f32 %v657, %v741
        %v1142 = vmul.f32 %v657, %v742
        %v1143 = vmul.f32 %v657, %v743
        %v1144 = vmul.f32 %v657, %v744
        %v1145 = vmul.f32 %v657, %v745
        %v1146 = vmul.f32 %v657, %v746
        %v1147 = vmul.f32 %v657, %v747
        %v1148 = vmul.f32 %v657, %v748
        %v1149 = vmul.f32 %v657, %v749
        %v1150 = vmul.f32 %v662, %v734
        %v1151 = vmul.f32 %v662, %v735
        %v1152 = vmul.f32 %v662, %v736
        %v1153 = vmul.f32 %v662, %v737
        %v1154 = vmul.f32 %v662, %v738
        %v1155 = vmul.f32 %v662, %v739
        %v1156 = vmul.f32 %v662, %v740
        %v1157 = vmul.f32 %v662, %v741
        %v1158 = vmul.f32 %v662, %v742
        %v1159 = vmul.f32 %v662, %v743
        %v1160 = vmul.f32 %v662, %v744
        %v1161 = vmul.f32 %v662, %v745
        %v1162 = vmul.f32 %v662, %v746
        %v1163 = vmul.f32 %v662, %v747
        %v1164 = vmul.f32 %v662, %v748
        %v1165 = vmul.f32 %v662, %v749
        %v1166 = vmul.f32 %v667, %v734
        %v1167 = vmul.f32 %v667, %v735
        %v1168 = vmul.f32 %v667, %v736
        %v1169 = vmul.f32 %v667, %v737
        %v1170 = vmul.f32 %v667, %v738
        %v1171 = vmul.f32 %v667, %v739
        %v1172 = vmul.f32 %v667, %v740
        %v1173 = vmul.f32 %v667, %v741
        %v1174 = vmul.f32 %v667, %v742
        %v1175 = vmul.f32 %v667, %v743
        %v1176 = vmul.f32 %v667, %v744
        %v1177 = vmul.f32 %v667, %v745
        %v1178 = vmul.f32 %v667, %v746
        %v1179 = vmul.f32 %v667, %v747
        %v1180 = vmul.f32 %v667, %v748
        %v1181 = vmul.f32 %v667, %v749
        %v1182 = vmul.f32 %v672, %v734
        %v1183 = vmul.f32 %v672, %v735
        %v1184 = vmul.f32 %v672, %v736
        %v1185 = vmul.f32 %v672, %v737
        %v1186 = vmul.f32 %v672, %v738
        %v1187 = vmul.f32 %v672, %v739
        %v1188 = vmul.f32 %v672, %v740
        %v1189 = vmul.f32 %v672, %v741
        %v1190 = vmul.f32 %v672, %v742
        %v1191 = vmul.f32 %v672, %v743
        %v1192 = vmul.f32 %v672, %v744
        %v1193 = vmul.f32 %v672, %v745
        %v1194 = vmul.f32 %v672, %v746
        %v1195 = vmul.f32 %v672, %v747
        %v1196 = vmul.f32 %v672, %v748
        %v1197 = vmul.f32 %v672, %v749
        %v1198 = vmul.f32 %v677, %v734
        %v1199 = vmul.f32 %v677, %v735
        %v1200 = vmul.f32 %v677, %v736
        %v1201 = vmul.f32 %v677, %v737
        %v1202 = vmul.f32 %v677, %v738
        %v1203 = vmul.f32 %v677, %v739
        %v1204 = vmul.f32 %v677, %v740
        %v1205 = vmul.f32 %v677, %v741
        %v1206 = vmul.f32 %v677, %v742
        %v1207 = vmul.f32 %v677, %v743
        %v1208 = vmul.f32 %v677, %v744
        %v1209 = vmul.f32 %v677, %v745
        %v1210 = vmul.f32 %v677, %v746
        %v1211 = vmul.f32 %v677, %v747
        %v1212 = vmul.f32 %v677, %v748
        %v1213 = vmul.f32 %v677, %v749
        %v1214 = vmul.f32 %v682, %v734
        %v1215 = vmul.f32 %v682, %v735
        %v1216 = vmul.f32 %v682, %v736
        %v1217 = vmul.f32 %v682, %v737
        %v1218 = vmul.f32 %v682, %v738
        %v1219 = vmul.f32 %v682, %v739
        %v1220 = vmul.f32 %v682, %v740
        %v1221 = vmul.f32 %v682, %v741
        %v1222 = vmul.f32 %v682, %v742
        %v1223 = vmul.f32 %v682, %v743
        %v1224 = vmul.f32 %v682, %v744
        %v1225 = vmul.f32 %v682, %v745
        %v1226 = vmul.f32 %v682, %v746
        %v1227 = vmul.f32 %v682, %v747
        %v1228 = vmul.f32 %v682, %v748
        %v1229 = vmul.f32 %v682, %v749
        %v1230 = vmul.f32 %v687, %v734
        %v1231 = vmul.f32 %v687, %v735
        %v1232 = vmul.f32 %v687, %v736
        %v1233 = vmul.f32 %v687, %v737
        %v1234 = vmul.f32 %v687, %v738
        %v1235 = vmul.f32 %v687, %v739
        %v1236 = vmul.f32 %v687, %v740
        %v1237 = vmul.f32 %v687, %v741
        %v1238 = vmul.f32 %v687, %v742
        %v1239 = vmul.f32 %v687, %v743
        %v1240 = vmul.f32 %v687, %v744
        %v1241 = vmul.f32 %v687, %v745
        %v1242 = vmul.f32 %v687, %v746
        %v1243 = vmul.f32 %v687, %v747
        %v1244 = vmul.f32 %v687, %v748
        %v1245 = vmul.f32 %v687, %v749
        %v1246 = vmul.f32 %v692, %v734
        %v1247 = vmul.f32 %v692, %v735
        %v1248 = vmul.f32 %v692, %v736
        %v1249 = vmul.f32 %v692, %v737
        %v1250 = vmul.f32 %v692, %v738
        %v1251 = vmul.f32 %v692, %v739
        %v1252 = vmul.f32 %v692, %v740
        %v1253 = vmul.f32 %v692, %v741
        %v1254 = vmul.f32 %v692, %v742
        %v1255 = vmul.f32 %v692, %v743
        %v1256 = vmul.f32 %v692, %v744
        %v1257 = vmul.f32 %v692, %v745
        %v1258 = vmul.f32 %v692, %v746
        %v1259 = vmul.f32 %v692, %v747
        %v1260 = vmul.f32 %v692, %v748
        %v1261 = vmul.f32 %v692, %v749
        %1262 = vset.pattern.permute.xlu0 1
        %1263 = vperm.xlu0 %1262, %v494
        %v1264 = vpop.permute.xlu0 %1263
        %1266 = vset.pattern.permute.xlu0 1
        %1267 = vperm.xlu0 %1266, %v495
        %v1268 = vpop.permute.xlu0 %1267
        %1270 = vset.pattern.permute.xlu0 1
        %1271 = vperm.xlu0 %1270, %v496
        %v1272 = vpop.permute.xlu0 %1271
        %1274 = vset.pattern.permute.xlu0 1
        %1275 = vperm.xlu0 %1274, %v497
        %v1276 = vpop.permute.xlu0 %1275
        %1278 = vset.pattern.permute.xlu0 1
        %1279 = vperm.xlu0 %1278, %v498
        %v1280 = vpop.permute.xlu0 %1279
        %1282 = vset.pattern.permute.xlu0 1
        %1283 = vperm.xlu0 %1282, %v499
        %v1284 = vpop.permute.xlu0 %1283
        %1286 = vset.pattern.permute.xlu0 1
        %1287 = vperm.xlu0 %1286, %v500
        %v1288 = vpop.permute.xlu0 %1287
        %1290 = vset.pattern.permute.xlu0 1
        %1291 = vperm.xlu0 %1290, %v501
        %v1292 = vpop.permute.xlu0 %1291
        %1294 = vset.pattern.permute.xlu0 1
        %1295 = vperm.xlu0 %1294, %v502
        %v1296 = vpop.permute.xlu0 %1295
        %1298 = vset.pattern.permute.xlu0 1
        %1299 = vperm.xlu0 %1298, %v503
        %v1300 = vpop.permute.xlu0 %1299
        %1302 = vset.pattern.permute.xlu0 1
        %1303 = vperm.xlu0 %1302, %v504
        %v1304 = vpop.permute.xlu0 %1303
        %1306 = vset.pattern.permute.xlu0 1
        %1307 = vperm.xlu0 %1306, %v505
        %v1308 = vpop.permute.xlu0 %1307
        %1310 = vset.pattern.permute.xlu0 1
        %1311 = vperm.xlu0 %1310, %v506
        %v1312 = vpop.permute.xlu0 %1311
        %1314 = vset.pattern.permute.xlu0 1
        %1315 = vperm.xlu0 %1314, %v507
        %v1316 = vpop.permute.xlu0 %1315
        %1318 = vset.pattern.permute.xlu0 1
        %1319 = vperm.xlu0 %1318, %v508
        %v1320 = vpop.permute.xlu0 %1319
        %1322 = vset.pattern.permute.xlu0 1
        %1323 = vperm.xlu0 %1322, %v509
        %v1324 = vpop.permute.xlu0 %1323
        %1326 = vset.pattern.permute.xlu0 1
        %1327 = vperm.xlu0 %1326, %v510
        %v1328 = vpop.permute.xlu0 %1327
        %1330 = vset.pattern.permute.xlu0 1
        %1331 = vperm.xlu0 %1330, %v511
        %v1332 = vpop.permute.xlu0 %1331
        %1334 = vset.pattern.permute.xlu0 1
        %1335 = vperm.xlu0 %1334, %v512
        %v1336 = vpop.permute.xlu0 %1335
        %1338 = vset.pattern.permute.xlu0 1
        %1339 = vperm.xlu0 %1338, %v513
        %v1340 = vpop.permute.xlu0 %1339
        %1342 = vset.pattern.permute.xlu0 1
        %1343 = vperm.xlu0 %1342, %v514
        %v1344 = vpop.permute.xlu0 %1343
        %1346 = vset.pattern.permute.xlu0 1
        %1347 = vperm.xlu0 %1346, %v515
        %v1348 = vpop.permute.xlu0 %1347
        %1350 = vset.pattern.permute.xlu0 1
        %1351 = vperm.xlu0 %1350, %v516
        %v1352 = vpop.permute.xlu0 %1351
        %1354 = vset.pattern.permute.xlu0 1
        %1355 = vperm.xlu0 %1354, %v517
        %v1356 = vpop.permute.xlu0 %1355
        %1358 = vset.pattern.permute.xlu0 1
        %1359 = vperm.xlu0 %1358, %v518
        %v1360 = vpop.permute.xlu0 %1359
        %1362 = vset.pattern.permute.xlu0 1
        %1363 = vperm.xlu0 %1362, %v519
        %v1364 = vpop.permute.xlu0 %1363
        %1366 = vset.pattern.permute.xlu0 1
        %1367 = vperm.xlu0 %1366, %v520
        %v1368 = vpop.permute.xlu0 %1367
        %1370 = vset.pattern.permute.xlu0 1
        %1371 = vperm.xlu0 %1370, %v521
        %v1372 = vpop.permute.xlu0 %1371
        %1374 = vset.pattern.permute.xlu0 1
        %1375 = vperm.xlu0 %1374, %v522
        %v1376 = vpop.permute.xlu0 %1375
        %1378 = vset.pattern.permute.xlu0 1
        %1379 = vperm.xlu0 %1378, %v523
        %v1380 = vpop.permute.xlu0 %1379
        %1382 = vset.pattern.permute.xlu0 1
        %1383 = vperm.xlu0 %1382, %v524
        %v1384 = vpop.permute.xlu0 %1383
        %1386 = vset.pattern.permute.xlu0 1
        %1387 = vperm.xlu0 %1386, %v525
        %v1388 = vpop.permute.xlu0 %1387
        %v1390 = vperm.slane %v526, 1
        %v1391 = vperm.slane %v526, 5
        %v1392 = vperm.slane %v527, 1
        %v1393 = vperm.slane %v527, 5
        %v1394 = vperm.slane %v528, 1
        %v1395 = vperm.slane %v528, 5
        %v1396 = vperm.slane %v529, 1
        %v1397 = vperm.slane %v529, 5
        %v1398 = vperm.slane %v530, 1
        %v1399 = vperm.slane %v530, 5
        %v1400 = vperm.slane %v531, 1
        %v1401 = vperm.slane %v531, 5
        %v1402 = vperm.slane %v532, 1
        %v1403 = vperm.slane %v532, 5
        %v1404 = vperm.slane %v533, 1
        %v1405 = vperm.slane %v533, 5
        %v1422 = vperm.slane %v1390, 1
        %v1423 = vperm.slane %v1391, 1
        %v1424 = vperm.slane %v1392, 1
        %v1425 = vperm.slane %v1393, 1
        %v1426 = vperm.slane %v1394, 1
        %v1427 = vperm.slane %v1395, 1
        %v1428 = vperm.slane %v1396, 1
        %v1429 = vperm.slane %v1397, 1
        %v1430 = vperm.slane %v1398, 1
        %v1431 = vperm.slane %v1399, 1
        %v1432 = vperm.slane %v1400, 1
        %v1433 = vperm.slane %v1401, 1
        %v1434 = vperm.slane %v1402, 1
        %v1435 = vperm.slane %v1403, 1
        %v1436 = vperm.slane %v1404, 1
        %v1437 = vperm.slane %v1405, 1
        %v1438 = vmul.f32 %v1264, %v1422
        %v1439 = vmul.f32 %v1264, %v1423
        %v1440 = vmul.f32 %v1264, %v1424
        %v1441 = vmul.f32 %v1264, %v1425
        %v1442 = vmul.f32 %v1264, %v1426
        %v1443 = vmul.f32 %v1264, %v1427
        %v1444 = vmul.f32 %v1264, %v1428
        %v1445 = vmul.f32 %v1264, %v1429
        %v1446 = vmul.f32 %v1264, %v1430
        %v1447 = vmul.f32 %v1264, %v1431
        %v1448 = vmul.f32 %v1264, %v1432
        %v1449 = vmul.f32 %v1264, %v1433
        %v1450 = vmul.f32 %v1264, %v1434
        %v1451 = vmul.f32 %v1264, %v1435
        %v1452 = vmul.f32 %v1264, %v1436
        %v1453 = vmul.f32 %v1264, %v1437
        %v1454 = vmul.f32 %v1268, %v1422
        %v1455 = vmul.f32 %v1268, %v1423
        %v1456 = vmul.f32 %v1268, %v1424
        %v1457 = vmul.f32 %v1268, %v1425
        %v1458 = vmul.f32 %v1268, %v1426
        %v1459 = vmul.f32 %v1268, %v1427
        %v1460 = vmul.f32 %v1268, %v1428
        %v1461 = vmul.f32 %v1268, %v1429
        %v1462 = vmul.f32 %v1268, %v1430
        %v1463 = vmul.f32 %v1268, %v1431
        %v1464 = vmul.f32 %v1268, %v1432
        %v1465 = vmul.f32 %v1268, %v1433
        %v1466 = vmul.f32 %v1268, %v1434
        %v1467 = vmul.f32 %v1268, %v1435
        %v1468 = vmul.f32 %v1268, %v1436
        %v1469 = vmul.f32 %v1268, %v1437
        %v1470 = vmul.f32 %v1272, %v1422
        %v1471 = vmul.f32 %v1272, %v1423
        %v1472 = vmul.f32 %v1272, %v1424
        %v1473 = vmul.f32 %v1272, %v1425
        %v1474 = vmul.f32 %v1272, %v1426
        %v1475 = vmul.f32 %v1272, %v1427
        %v1476 = vmul.f32 %v1272, %v1428
        %v1477 = vmul.f32 %v1272, %v1429
        %v1478 = vmul.f32 %v1272, %v1430
        %v1479 = vmul.f32 %v1272, %v1431
        %v1480 = vmul.f32 %v1272, %v1432
        %v1481 = vmul.f32 %v1272, %v1433
        %v1482 = vmul.f32 %v1272, %v1434
        %v1483 = vmul.f32 %v1272, %v1435
        %v1484 = vmul.f32 %v1272, %v1436
        %v1485 = vmul.f32 %v1272, %v1437
        %v1486 = vmul.f32 %v1276, %v1422
        %v1487 = vmul.f32 %v1276, %v1423
        %v1488 = vmul.f32 %v1276, %v1424
        %v1489 = vmul.f32 %v1276, %v1425
        %v1490 = vmul.f32 %v1276, %v1426
        %v1491 = vmul.f32 %v1276, %v1427
        %v1492 = vmul.f32 %v1276, %v1428
        %v1493 = vmul.f32 %v1276, %v1429
        %v1494 = vmul.f32 %v1276, %v1430
        %v1495 = vmul.f32 %v1276, %v1431
        %v1496 = vmul.f32 %v1276, %v1432
        %v1497 = vmul.f32 %v1276, %v1433
        %v1498 = vmul.f32 %v1276, %v1434
        %v1499 = vmul.f32 %v1276, %v1435
        %v1500 = vmul.f32 %v1276, %v1436
        %v1501 = vmul.f32 %v1276, %v1437
        %v1502 = vmul.f32 %v1280, %v1422
        %v1503 = vmul.f32 %v1280, %v1423
        %v1504 = vmul.f32 %v1280, %v1424
        %v1505 = vmul.f32 %v1280, %v1425
        %v1506 = vmul.f32 %v1280, %v1426
        %v1507 = vmul.f32 %v1280, %v1427
        %v1508 = vmul.f32 %v1280, %v1428
        %v1509 = vmul.f32 %v1280, %v1429
        %v1510 = vmul.f32 %v1280, %v1430
        %v1511 = vmul.f32 %v1280, %v1431
        %v1512 = vmul.f32 %v1280, %v1432
        %v1513 = vmul.f32 %v1280, %v1433
        %v1514 = vmul.f32 %v1280, %v1434
        %v1515 = vmul.f32 %v1280, %v1435
        %v1516 = vmul.f32 %v1280, %v1436
        %v1517 = vmul.f32 %v1280, %v1437
        %v1518 = vmul.f32 %v1284, %v1422
        %v1519 = vmul.f32 %v1284, %v1423
        %v1520 = vmul.f32 %v1284, %v1424
        %v1521 = vmul.f32 %v1284, %v1425
        %v1522 = vmul.f32 %v1284, %v1426
        %v1523 = vmul.f32 %v1284, %v1427
        %v1524 = vmul.f32 %v1284, %v1428
        %v1525 = vmul.f32 %v1284, %v1429
        %v1526 = vmul.f32 %v1284, %v1430
        %v1527 = vmul.f32 %v1284, %v1431
        %v1528 = vmul.f32 %v1284, %v1432
        %v1529 = vmul.f32 %v1284, %v1433
        %v1530 = vmul.f32 %v1284, %v1434
        %v1531 = vmul.f32 %v1284, %v1435
        %v1532 = vmul.f32 %v1284, %v1436
        %v1533 = vmul.f32 %v1284, %v1437
        %v1534 = vmul.f32 %v1288, %v1422
        %v1535 = vmul.f32 %v1288, %v1423
        %v1536 = vmul.f32 %v1288, %v1424
        %v1537 = vmul.f32 %v1288, %v1425
        %v1538 = vmul.f32 %v1288, %v1426
        %v1539 = vmul.f32 %v1288, %v1427
        %v1540 = vmul.f32 %v1288, %v1428
        %v1541 = vmul.f32 %v1288, %v1429
        %v1542 = vmul.f32 %v1288, %v1430
        %v1543 = vmul.f32 %v1288, %v1431
        %v1544 = vmul.f32 %v1288, %v1432
        %v1545 = vmul.f32 %v1288, %v1433
        %v1546 = vmul.f32 %v1288, %v1434
        %v1547 = vmul.f32 %v1288, %v1435
        %v1548 = vmul.f32 %v1288, %v1436
        %v1549 = vmul.f32 %v1288, %v1437
        %v1550 = vmul.f32 %v1292, %v1422
        %v1551 = vmul.f32 %v1292, %v1423
        %v1552 = vmul.f32 %v1292, %v1424
        %v1553 = vmul.f32 %v1292, %v1425
        %v1554 = vmul.f32 %v1292, %v1426
        %v1555 = vmul.f32 %v1292, %v1427
        %v1556 = vmul.f32 %v1292, %v1428
        %v1557 = vmul.f32 %v1292, %v1429
        %v1558 = vmul.f32 %v1292, %v1430
        %v1559 = vmul.f32 %v1292, %v1431
        %v1560 = vmul.f32 %v1292, %v1432
        %v1561 = vmul.f32 %v1292, %v1433
        %v1562 = vmul.f32 %v1292, %v1434
        %v1563 = vmul.f32 %v1292, %v1435
        %v1564 = vmul.f32 %v1292, %v1436
        %v1565 = vmul.f32 %v1292, %v1437
        %v1566 = vmul.f32 %v1296, %v1422
        %v1567 = vmul.f32 %v1296, %v1423
        %v1568 = vmul.f32 %v1296, %v1424
        %v1569 = vmul.f32 %v1296, %v1425
        %v1570 = vmul.f32 %v1296, %v1426
        %v1571 = vmul.f32 %v1296, %v1427
        %v1572 = vmul.f32 %v1296, %v1428
        %v1573 = vmul.f32 %v1296, %v1429
        %v1574 = vmul.f32 %v1296, %v1430
        %v1575 = vmul.f32 %v1296, %v1431
        %v1576 = vmul.f32 %v1296, %v1432
        %v1577 = vmul.f32 %v1296, %v1433
        %v1578 = vmul.f32 %v1296, %v1434
        %v1579 = vmul.f32 %v1296, %v1435
        %v1580 = vmul.f32 %v1296, %v1436
        %v1581 = vmul.f32 %v1296, %v1437
        %v1582 = vmul.f32 %v1300, %v1422
        %v1583 = vmul.f32 %v1300, %v1423
        %v1584 = vmul.f32 %v1300, %v1424
        %v1585 = vmul.f32 %v1300, %v1425
        %v1586 = vmul.f32 %v1300, %v1426
        %v1587 = vmul.f32 %v1300, %v1427
        %v1588 = vmul.f32 %v1300, %v1428
        %v1589 = vmul.f32 %v1300, %v1429
        %v1590 = vmul.f32 %v1300, %v1430
        %v1591 = vmul.f32 %v1300, %v1431
        %v1592 = vmul.f32 %v1300, %v1432
        %v1593 = vmul.f32 %v1300, %v1433
        %v1594 = vmul.f32 %v1300, %v1434
        %v1595 = vmul.f32 %v1300, %v1435
        %v1596 = vmul.f32 %v1300, %v1436
        %v1597 = vmul.f32 %v1300, %v1437
        %v1598 = vmul.f32 %v1304, %v1422
        %v1599 = vmul.f32 %v1304, %v1423
        %v1600 = vmul.f32 %v1304, %v1424
        %v1601 = vmul.f32 %v1304, %v1425
        %v1602 = vmul.f32 %v1304, %v1426
        %v1603 = vmul.f32 %v1304, %v1427
        %v1604 = vmul.f32 %v1304, %v1428
        %v1605 = vmul.f32 %v1304, %v1429
        %v1606 = vmul.f32 %v1304, %v1430
        %v1607 = vmul.f32 %v1304, %v1431
        %v1608 = vmul.f32 %v1304, %v1432
        %v1609 = vmul.f32 %v1304, %v1433
        %v1610 = vmul.f32 %v1304, %v1434
        %v1611 = vmul.f32 %v1304, %v1435
        %v1612 = vmul.f32 %v1304, %v1436
        %v1613 = vmul.f32 %v1304, %v1437
        %v1614 = vmul.f32 %v1308, %v1422
        %v1615 = vmul.f32 %v1308, %v1423
        %v1616 = vmul.f32 %v1308, %v1424
        %v1617 = vmul.f32 %v1308, %v1425
        %v1618 = vmul.f32 %v1308, %v1426
        %v1619 = vmul.f32 %v1308, %v1427
        %v1620 = vmul.f32 %v1308, %v1428
        %v1621 = vmul.f32 %v1308, %v1429
        %v1622 = vmul.f32 %v1308, %v1430
        %v1623 = vmul.f32 %v1308, %v1431
        %v1624 = vmul.f32 %v1308, %v1432
        %v1625 = vmul.f32 %v1308, %v1433
        %v1626 = vmul.f32 %v1308, %v1434
        %v1627 = vmul.f32 %v1308, %v1435
        %v1628 = vmul.f32 %v1308, %v1436
        %v1629 = vmul.f32 %v1308, %v1437
        %v1630 = vmul.f32 %v1312, %v1422
        %v1631 = vmul.f32 %v1312, %v1423
        %v1632 = vmul.f32 %v1312, %v1424
        %v1633 = vmul.f32 %v1312, %v1425
        %v1634 = vmul.f32 %v1312, %v1426
        %v1635 = vmul.f32 %v1312, %v1427
        %v1636 = vmul.f32 %v1312, %v1428
        %v1637 = vmul.f32 %v1312, %v1429
        %v1638 = vmul.f32 %v1312, %v1430
        %v1639 = vmul.f32 %v1312, %v1431
        %v1640 = vmul.f32 %v1312, %v1432
        %v1641 = vmul.f32 %v1312, %v1433
        %v1642 = vmul.f32 %v1312, %v1434
        %v1643 = vmul.f32 %v1312, %v1435
        %v1644 = vmul.f32 %v1312, %v1436
        %v1645 = vmul.f32 %v1312, %v1437
        %v1646 = vmul.f32 %v1316, %v1422
        %v1647 = vmul.f32 %v1316, %v1423
        %v1648 = vmul.f32 %v1316, %v1424
        %v1649 = vmul.f32 %v1316, %v1425
        %v1650 = vmul.f32 %v1316, %v1426
        %v1651 = vmul.f32 %v1316, %v1427
        %v1652 = vmul.f32 %v1316, %v1428
        %v1653 = vmul.f32 %v1316, %v1429
        %v1654 = vmul.f32 %v1316, %v1430
        %v1655 = vmul.f32 %v1316, %v1431
        %v1656 = vmul.f32 %v1316, %v1432
        %v1657 = vmul.f32 %v1316, %v1433
        %v1658 = vmul.f32 %v1316, %v1434
        %v1659 = vmul.f32 %v1316, %v1435
        %v1660 = vmul.f32 %v1316, %v1436
        %v1661 = vmul.f32 %v1316, %v1437
        %v1662 = vmul.f32 %v1320, %v1422
        %v1663 = vmul.f32 %v1320, %v1423
        %v1664 = vmul.f32 %v1320, %v1424
        %v1665 = vmul.f32 %v1320, %v1425
        %v1666 = vmul.f32 %v1320, %v1426
        %v1667 = vmul.f32 %v1320, %v1427
        %v1668 = vmul.f32 %v1320, %v1428
        %v1669 = vmul.f32 %v1320, %v1429
        %v1670 = vmul.f32 %v1320, %v1430
        %v1671 = vmul.f32 %v1320, %v1431
        %v1672 = vmul.f32 %v1320, %v1432
        %v1673 = vmul.f32 %v1320, %v1433
        %v1674 = vmul.f32 %v1320, %v1434
        %v1675 = vmul.f32 %v1320, %v1435
        %v1676 = vmul.f32 %v1320, %v1436
        %v1677 = vmul.f32 %v1320, %v1437
        %v1678 = vmul.f32 %v1324, %v1422
        %v1679 = vmul.f32 %v1324, %v1423
        %v1680 = vmul.f32 %v1324, %v1424
        %v1681 = vmul.f32 %v1324, %v1425
        %v1682 = vmul.f32 %v1324, %v1426
        %v1683 = vmul.f32 %v1324, %v1427
        %v1684 = vmul.f32 %v1324, %v1428
        %v1685 = vmul.f32 %v1324, %v1429
        %v1686 = vmul.f32 %v1324, %v1430
        %v1687 = vmul.f32 %v1324, %v1431
        %v1688 = vmul.f32 %v1324, %v1432
        %v1689 = vmul.f32 %v1324, %v1433
        %v1690 = vmul.f32 %v1324, %v1434
        %v1691 = vmul.f32 %v1324, %v1435
        %v1692 = vmul.f32 %v1324, %v1436
        %v1693 = vmul.f32 %v1324, %v1437
        %v1694 = vmul.f32 %v1328, %v1422
        %v1695 = vmul.f32 %v1328, %v1423
        %v1696 = vmul.f32 %v1328, %v1424
        %v1697 = vmul.f32 %v1328, %v1425
        %v1698 = vmul.f32 %v1328, %v1426
        %v1699 = vmul.f32 %v1328, %v1427
        %v1700 = vmul.f32 %v1328, %v1428
        %v1701 = vmul.f32 %v1328, %v1429
        %v1702 = vmul.f32 %v1328, %v1430
        %v1703 = vmul.f32 %v1328, %v1431
        %v1704 = vmul.f32 %v1328, %v1432
        %v1705 = vmul.f32 %v1328, %v1433
        %v1706 = vmul.f32 %v1328, %v1434
        %v1707 = vmul.f32 %v1328, %v1435
        %v1708 = vmul.f32 %v1328, %v1436
        %v1709 = vmul.f32 %v1328, %v1437
        %v1710 = vmul.f32 %v1332, %v1422
        %v1711 = vmul.f32 %v1332, %v1423
        %v1712 = vmul.f32 %v1332, %v1424
        %v1713 = vmul.f32 %v1332, %v1425
        %v1714 = vmul.f32 %v1332, %v1426
        %v1715 = vmul.f32 %v1332, %v1427
        %v1716 = vmul.f32 %v1332, %v1428
        %v1717 = vmul.f32 %v1332, %v1429
        %v1718 = vmul.f32 %v1332, %v1430
        %v1719 = vmul.f32 %v1332, %v1431
        %v1720 = vmul.f32 %v1332, %v1432
        %v1721 = vmul.f32 %v1332, %v1433
        %v1722 = vmul.f32 %v1332, %v1434
        %v1723 = vmul.f32 %v1332, %v1435
        %v1724 = vmul.f32 %v1332, %v1436
        %v1725 = vmul.f32 %v1332, %v1437
        %v1726 = vmul.f32 %v1336, %v1422
        %v1727 = vmul.f32 %v1336, %v1423
        %v1728 = vmul.f32 %v1336, %v1424
        %v1729 = vmul.f32 %v1336, %v1425
        %v1730 = vmul.f32 %v1336, %v1426
        %v1731 = vmul.f32 %v1336, %v1427
        %v1732 = vmul.f32 %v1336, %v1428
        %v1733 = vmul.f32 %v1336, %v1429
        %v1734 = vmul.f32 %v1336, %v1430
        %v1735 = vmul.f32 %v1336, %v1431
        %v1736 = vmul.f32 %v1336, %v1432
        %v1737 = vmul.f32 %v1336, %v1433
        %v1738 = vmul.f32 %v1336, %v1434
        %v1739 = vmul.f32 %v1336, %v1435
        %v1740 = vmul.f32 %v1336, %v1436
        %v1741 = vmul.f32 %v1336, %v1437
        %v1742 = vmul.f32 %v1340, %v1422
        %v1743 = vmul.f32 %v1340, %v1423
        %v1744 = vmul.f32 %v1340, %v1424
        %v1745 = vmul.f32 %v1340, %v1425
        %v1746 = vmul.f32 %v1340, %v1426
        %v1747 = vmul.f32 %v1340, %v1427
        %v1748 = vmul.f32 %v1340, %v1428
        %v1749 = vmul.f32 %v1340, %v1429
        %v1750 = vmul.f32 %v1340, %v1430
        %v1751 = vmul.f32 %v1340, %v1431
        %v1752 = vmul.f32 %v1340, %v1432
        %v1753 = vmul.f32 %v1340, %v1433
        %v1754 = vmul.f32 %v1340, %v1434
        %v1755 = vmul.f32 %v1340, %v1435
        %v1756 = vmul.f32 %v1340, %v1436
        %v1757 = vmul.f32 %v1340, %v1437
        %v1758 = vmul.f32 %v1344, %v1422
        %v1759 = vmul.f32 %v1344, %v1423
        %v1760 = vmul.f32 %v1344, %v1424
        %v1761 = vmul.f32 %v1344, %v1425
        %v1762 = vmul.f32 %v1344, %v1426
        %v1763 = vmul.f32 %v1344, %v1427
        %v1764 = vmul.f32 %v1344, %v1428
        %v1765 = vmul.f32 %v1344, %v1429
        %v1766 = vmul.f32 %v1344, %v1430
        %v1767 = vmul.f32 %v1344, %v1431
        %v1768 = vmul.f32 %v1344, %v1432
        %v1769 = vmul.f32 %v1344, %v1433
        %v1770 = vmul.f32 %v1344, %v1434
        %v1771 = vmul.f32 %v1344, %v1435
        %v1772 = vmul.f32 %v1344, %v1436
        %v1773 = vmul.f32 %v1344, %v1437
        %v1774 = vmul.f32 %v1348, %v1422
        %v1775 = vmul.f32 %v1348, %v1423
        %v1776 = vmul.f32 %v1348, %v1424
        %v1777 = vmul.f32 %v1348, %v1425
        %v1778 = vmul.f32 %v1348, %v1426
        %v1779 = vmul.f32 %v1348, %v1427
        %v1780 = vmul.f32 %v1348, %v1428
        %v1781 = vmul.f32 %v1348, %v1429
        %v1782 = vmul.f32 %v1348, %v1430
        %v1783 = vmul.f32 %v1348, %v1431
        %v1784 = vmul.f32 %v1348, %v1432
        %v1785 = vmul.f32 %v1348, %v1433
        %v1786 = vmul.f32 %v1348, %v1434
        %v1787 = vmul.f32 %v1348, %v1435
        %v1788 = vmul.f32 %v1348, %v1436
        %v1789 = vmul.f32 %v1348, %v1437
        %v1790 = vmul.f32 %v1352, %v1422
        %v1791 = vmul.f32 %v1352, %v1423
        %v1792 = vmul.f32 %v1352, %v1424
        %v1793 = vmul.f32 %v1352, %v1425
        %v1794 = vmul.f32 %v1352, %v1426
        %v1795 = vmul.f32 %v1352, %v1427
        %v1796 = vmul.f32 %v1352, %v1428
        %v1797 = vmul.f32 %v1352, %v1429
        %v1798 = vmul.f32 %v1352, %v1430
        %v1799 = vmul.f32 %v1352, %v1431
        %v1800 = vmul.f32 %v1352, %v1432
        %v1801 = vmul.f32 %v1352, %v1433
        %v1802 = vmul.f32 %v1352, %v1434
        %v1803 = vmul.f32 %v1352, %v1435
        %v1804 = vmul.f32 %v1352, %v1436
        %v1805 = vmul.f32 %v1352, %v1437
        %v1806 = vmul.f32 %v1356, %v1422
        %v1807 = vmul.f32 %v1356, %v1423
        %v1808 = vmul.f32 %v1356, %v1424
        %v1809 = vmul.f32 %v1356, %v1425
        %v1810 = vmul.f32 %v1356, %v1426
        %v1811 = vmul.f32 %v1356, %v1427
        %v1812 = vmul.f32 %v1356, %v1428
        %v1813 = vmul.f32 %v1356, %v1429
        %v1814 = vmul.f32 %v1356, %v1430
        %v1815 = vmul.f32 %v1356, %v1431
        %v1816 = vmul.f32 %v1356, %v1432
        %v1817 = vmul.f32 %v1356, %v1433
        %v1818 = vmul.f32 %v1356, %v1434
        %v1819 = vmul.f32 %v1356, %v1435
        %v1820 = vmul.f32 %v1356, %v1436
        %v1821 = vmul.f32 %v1356, %v1437
        %v1822 = vmul.f32 %v1360, %v1422
        %v1823 = vmul.f32 %v1360, %v1423
        %v1824 = vmul.f32 %v1360, %v1424
        %v1825 = vmul.f32 %v1360, %v1425
        %v1826 = vmul.f32 %v1360, %v1426
        %v1827 = vmul.f32 %v1360, %v1427
        %v1828 = vmul.f32 %v1360, %v1428
        %v1829 = vmul.f32 %v1360, %v1429
        %v1830 = vmul.f32 %v1360, %v1430
        %v1831 = vmul.f32 %v1360, %v1431
        %v1832 = vmul.f32 %v1360, %v1432
        %v1833 = vmul.f32 %v1360, %v1433
        %v1834 = vmul.f32 %v1360, %v1434
        %v1835 = vmul.f32 %v1360, %v1435
        %v1836 = vmul.f32 %v1360, %v1436
        %v1837 = vmul.f32 %v1360, %v1437
        %v1838 = vmul.f32 %v1364, %v1422
        %v1839 = vmul.f32 %v1364, %v1423
        %v1840 = vmul.f32 %v1364, %v1424
        %v1841 = vmul.f32 %v1364, %v1425
        %v1842 = vmul.f32 %v1364, %v1426
        %v1843 = vmul.f32 %v1364, %v1427
        %v1844 = vmul.f32 %v1364, %v1428
        %v1845 = vmul.f32 %v1364, %v1429
        %v1846 = vmul.f32 %v1364, %v1430
        %v1847 = vmul.f32 %v1364, %v1431
        %v1848 = vmul.f32 %v1364, %v1432
        %v1849 = vmul.f32 %v1364, %v1433
        %v1850 = vmul.f32 %v1364, %v1434
        %v1851 = vmul.f32 %v1364, %v1435
        %v1852 = vmul.f32 %v1364, %v1436
        %v1853 = vmul.f32 %v1364, %v1437
        %v1854 = vmul.f32 %v1368, %v1422
        %v1855 = vmul.f32 %v1368, %v1423
        %v1856 = vmul.f32 %v1368, %v1424
        %v1857 = vmul.f32 %v1368, %v1425
        %v1858 = vmul.f32 %v1368, %v1426
        %v1859 = vmul.f32 %v1368, %v1427
        %v1860 = vmul.f32 %v1368, %v1428
        %v1861 = vmul.f32 %v1368, %v1429
        %v1862 = vmul.f32 %v1368, %v1430
        %v1863 = vmul.f32 %v1368, %v1431
        %v1864 = vmul.f32 %v1368, %v1432
        %v1865 = vmul.f32 %v1368, %v1433
        %v1866 = vmul.f32 %v1368, %v1434
        %v1867 = vmul.f32 %v1368, %v1435
        %v1868 = vmul.f32 %v1368, %v1436
        %v1869 = vmul.f32 %v1368, %v1437
        %v1870 = vmul.f32 %v1372, %v1422
        %v1871 = vmul.f32 %v1372, %v1423
        %v1872 = vmul.f32 %v1372, %v1424
        %v1873 = vmul.f32 %v1372, %v1425
        %v1874 = vmul.f32 %v1372, %v1426
        %v1875 = vmul.f32 %v1372, %v1427
        %v1876 = vmul.f32 %v1372, %v1428
        %v1877 = vmul.f32 %v1372, %v1429
        %v1878 = vmul.f32 %v1372, %v1430
        %v1879 = vmul.f32 %v1372, %v1431
        %v1880 = vmul.f32 %v1372, %v1432
        %v1881 = vmul.f32 %v1372, %v1433
        %v1882 = vmul.f32 %v1372, %v1434
        %v1883 = vmul.f32 %v1372, %v1435
        %v1884 = vmul.f32 %v1372, %v1436
        %v1885 = vmul.f32 %v1372, %v1437
        %v1886 = vmul.f32 %v1376, %v1422
        %v1887 = vmul.f32 %v1376, %v1423
        %v1888 = vmul.f32 %v1376, %v1424
        %v1889 = vmul.f32 %v1376, %v1425
        %v1890 = vmul.f32 %v1376, %v1426
        %v1891 = vmul.f32 %v1376, %v1427
        %v1892 = vmul.f32 %v1376, %v1428
        %v1893 = vmul.f32 %v1376, %v1429
        %v1894 = vmul.f32 %v1376, %v1430
        %v1895 = vmul.f32 %v1376, %v1431
        %v1896 = vmul.f32 %v1376, %v1432
        %v1897 = vmul.f32 %v1376, %v1433
        %v1898 = vmul.f32 %v1376, %v1434
        %v1899 = vmul.f32 %v1376, %v1435
        %v1900 = vmul.f32 %v1376, %v1436
        %v1901 = vmul.f32 %v1376, %v1437
        %v1902 = vmul.f32 %v1380, %v1422
        %v1903 = vmul.f32 %v1380, %v1423
        %v1904 = vmul.f32 %v1380, %v1424
        %v1905 = vmul.f32 %v1380, %v1425
        %v1906 = vmul.f32 %v1380, %v1426
        %v1907 = vmul.f32 %v1380, %v1427
        %v1908 = vmul.f32 %v1380, %v1428
        %v1909 = vmul.f32 %v1380, %v1429
        %v1910 = vmul.f32 %v1380, %v1430
        %v1911 = vmul.f32 %v1380, %v1431
        %v1912 = vmul.f32 %v1380, %v1432
        %v1913 = vmul.f32 %v1380, %v1433
        %v1914 = vmul.f32 %v1380, %v1434
        %v1915 = vmul.f32 %v1380, %v1435
        %v1916 = vmul.f32 %v1380, %v1436
        %v1917 = vmul.f32 %v1380, %v1437
        %v1918 = vmul.f32 %v1384, %v1422
        %v1919 = vmul.f32 %v1384, %v1423
        %v1920 = vmul.f32 %v1384, %v1424
        %v1921 = vmul.f32 %v1384, %v1425
        %v1922 = vmul.f32 %v1384, %v1426
        %v1923 = vmul.f32 %v1384, %v1427
        %v1924 = vmul.f32 %v1384, %v1428
        %v1925 = vmul.f32 %v1384, %v1429
        %v1926 = vmul.f32 %v1384, %v1430
        %v1927 = vmul.f32 %v1384, %v1431
        %v1928 = vmul.f32 %v1384, %v1432
        %v1929 = vmul.f32 %v1384, %v1433
        %v1930 = vmul.f32 %v1384, %v1434
        %v1931 = vmul.f32 %v1384, %v1435
        %v1932 = vmul.f32 %v1384, %v1436
        %v1933 = vmul.f32 %v1384, %v1437
        %v1934 = vmul.f32 %v1388, %v1422
        %v1935 = vmul.f32 %v1388, %v1423
        %v1936 = vmul.f32 %v1388, %v1424
        %v1937 = vmul.f32 %v1388, %v1425
        %v1938 = vmul.f32 %v1388, %v1426
        %v1939 = vmul.f32 %v1388, %v1427
        %v1940 = vmul.f32 %v1388, %v1428
        %v1941 = vmul.f32 %v1388, %v1429
        %v1942 = vmul.f32 %v1388, %v1430
        %v1943 = vmul.f32 %v1388, %v1431
        %v1944 = vmul.f32 %v1388, %v1432
        %v1945 = vmul.f32 %v1388, %v1433
        %v1946 = vmul.f32 %v1388, %v1434
        %v1947 = vmul.f32 %v1388, %v1435
        %v1948 = vmul.f32 %v1388, %v1436
        %v1949 = vmul.f32 %v1388, %v1437
        %v1950 = vadd.f32 %v750, %v1438
        %v1951 = vadd.f32 %v751, %v1439
        %v1952 = vadd.f32 %v752, %v1440
        %v1953 = vadd.f32 %v753, %v1441
        %v1954 = vadd.f32 %v754, %v1442
        %v1955 = vadd.f32 %v755, %v1443
        %v1956 = vadd.f32 %v756, %v1444
        %v1957 = vadd.f32 %v757, %v1445
        %v1958 = vadd.f32 %v758, %v1446
        %v1959 = vadd.f32 %v759, %v1447
        %v1960 = vadd.f32 %v760, %v1448
        %v1961 = vadd.f32 %v761, %v1449
        %v1962 = vadd.f32 %v762, %v1450
        %v1963 = vadd.f32 %v763, %v1451
        %v1964 = vadd.f32 %v764, %v1452
        %v1965 = vadd.f32 %v765, %v1453
        %v1966 = vadd.f32 %v766, %v1454
        %v1967 = vadd.f32 %v767, %v1455
        %v1968 = vadd.f32 %v768, %v1456
        %v1969 = vadd.f32 %v769, %v1457
        %v1970 = vadd.f32 %v770, %v1458
        %v1971 = vadd.f32 %v771, %v1459
        %v1972 = vadd.f32 %v772, %v1460
        %v1973 = vadd.f32 %v773, %v1461
        %v1974 = vadd.f32 %v774, %v1462
        %v1975 = vadd.f32 %v775, %v1463
        %v1976 = vadd.f32 %v776, %v1464
        %v1977 = vadd.f32 %v777, %v1465
        %v1978 = vadd.f32 %v778, %v1466
        %v1979 = vadd.f32 %v779, %v1467
        %v1980 = vadd.f32 %v780, %v1468
        %v1981 = vadd.f32 %v781, %v1469
        %v1982 = vadd.f32 %v782, %v1470
        %v1983 = vadd.f32 %v783, %v1471
        %v1984 = vadd.f32 %v784, %v1472
        %v1985 = vadd.f32 %v785, %v1473
        %v1986 = vadd.f32 %v786, %v1474
        %v1987 = vadd.f32 %v787, %v1475
        %v1988 = vadd.f32 %v788, %v1476
        %v1989 = vadd.f32 %v789, %v1477
        %v1990 = vadd.f32 %v790, %v1478
        %v1991 = vadd.f32 %v791, %v1479
        %v1992 = vadd.f32 %v792, %v1480
        %v1993 = vadd.f32 %v793, %v1481
        %v1994 = vadd.f32 %v794, %v1482
        %v1995 = vadd.f32 %v795, %v1483
        %v1996 = vadd.f32 %v796, %v1484
        %v1997 = vadd.f32 %v797, %v1485
        %v1998 = vadd.f32 %v798, %v1486
        %v1999 = vadd.f32 %v799, %v1487
        %v2000 = vadd.f32 %v800, %v1488
        %v2001 = vadd.f32 %v801, %v1489
        %v2002 = vadd.f32 %v802, %v1490
        %v2003 = vadd.f32 %v803, %v1491
        %v2004 = vadd.f32 %v804, %v1492
        %v2005 = vadd.f32 %v805, %v1493
        %v2006 = vadd.f32 %v806, %v1494
        %v2007 = vadd.f32 %v807, %v1495
        %v2008 = vadd.f32 %v808, %v1496
        %v2009 = vadd.f32 %v809, %v1497
        %v2010 = vadd.f32 %v810, %v1498
        %v2011 = vadd.f32 %v811, %v1499
        %v2012 = vadd.f32 %v812, %v1500
        %v2013 = vadd.f32 %v813, %v1501
        %v2014 = vadd.f32 %v814, %v1502
        %v2015 = vadd.f32 %v815, %v1503
        %v2016 = vadd.f32 %v816, %v1504
        %v2017 = vadd.f32 %v817, %v1505
        %v2018 = vadd.f32 %v818, %v1506
        %v2019 = vadd.f32 %v819, %v1507
        %v2020 = vadd.f32 %v820, %v1508
        %v2021 = vadd.f32 %v821, %v1509
        %v2022 = vadd.f32 %v822, %v1510
        %v2023 = vadd.f32 %v823, %v1511
        %v2024 = vadd.f32 %v824, %v1512
        %v2025 = vadd.f32 %v825, %v1513
        %v2026 = vadd.f32 %v826, %v1514
        %v2027 = vadd.f32 %v827, %v1515
        %v2028 = vadd.f32 %v828, %v1516
        %v2029 = vadd.f32 %v829, %v1517
        %v2030 = vadd.f32 %v830, %v1518
        %v2031 = vadd.f32 %v831, %v1519
        %v2032 = vadd.f32 %v832, %v1520
        %v2033 = vadd.f32 %v833, %v1521
        %v2034 = vadd.f32 %v834, %v1522
        %v2035 = vadd.f32 %v835, %v1523
        %v2036 = vadd.f32 %v836, %v1524
        %v2037 = vadd.f32 %v837, %v1525
        %v2038 = vadd.f32 %v838, %v1526
        %v2039 = vadd.f32 %v839, %v1527
        %v2040 = vadd.f32 %v840, %v1528
        %v2041 = vadd.f32 %v841, %v1529
        %v2042 = vadd.f32 %v842, %v1530
        %v2043 = vadd.f32 %v843, %v1531
        %v2044 = vadd.f32 %v844, %v1532
        %v2045 = vadd.f32 %v845, %v1533
        %v2046 = vadd.f32 %v846, %v1534
        %v2047 = vadd.f32 %v847, %v1535
        %v2048 = vadd.f32 %v848, %v1536
        %v2049 = vadd.f32 %v849, %v1537
        %v2050 = vadd.f32 %v850, %v1538
        %v2051 = vadd.f32 %v851, %v1539
        %v2052 = vadd.f32 %v852, %v1540
        %v2053 = vadd.f32 %v853, %v1541
        %v2054 = vadd.f32 %v854, %v1542
        %v2055 = vadd.f32 %v855, %v1543
        %v2056 = vadd.f32 %v856, %v1544
        %v2057 = vadd.f32 %v857, %v1545
        %v2058 = vadd.f32 %v858, %v1546
        %v2059 = vadd.f32 %v859, %v1547
        %v2060 = vadd.f32 %v860, %v1548
        %v2061 = vadd.f32 %v861, %v1549
        %v2062 = vadd.f32 %v862, %v1550
        %v2063 = vadd.f32 %v863, %v1551
        %v2064 = vadd.f32 %v864, %v1552
        %v2065 = vadd.f32 %v865, %v1553
        %v2066 = vadd.f32 %v866, %v1554
        %v2067 = vadd.f32 %v867, %v1555
        %v2068 = vadd.f32 %v868, %v1556
        %v2069 = vadd.f32 %v869, %v1557
        %v2070 = vadd.f32 %v870, %v1558
        %v2071 = vadd.f32 %v871, %v1559
        %v2072 = vadd.f32 %v872, %v1560
        %v2073 = vadd.f32 %v873, %v1561
        %v2074 = vadd.f32 %v874, %v1562
        %v2075 = vadd.f32 %v875, %v1563
        %v2076 = vadd.f32 %v876, %v1564
        %v2077 = vadd.f32 %v877, %v1565
        %v2078 = vadd.f32 %v878, %v1566
        %v2079 = vadd.f32 %v879, %v1567
        %v2080 = vadd.f32 %v880, %v1568
        %v2081 = vadd.f32 %v881, %v1569
        %v2082 = vadd.f32 %v882, %v1570
        %v2083 = vadd.f32 %v883, %v1571
        %v2084 = vadd.f32 %v884, %v1572
        %v2085 = vadd.f32 %v885, %v1573
        %v2086 = vadd.f32 %v886, %v1574
        %v2087 = vadd.f32 %v887, %v1575
        %v2088 = vadd.f32 %v888, %v1576
        %v2089 = vadd.f32 %v889, %v1577
        %v2090 = vadd.f32 %v890, %v1578
        %v2091 = vadd.f32 %v891, %v1579
        %v2092 = vadd.f32 %v892, %v1580
        %v2093 = vadd.f32 %v893, %v1581
        %v2094 = vadd.f32 %v894, %v1582
        %v2095 = vadd.f32 %v895, %v1583
        %v2096 = vadd.f32 %v896, %v1584
        %v2097 = vadd.f32 %v897, %v1585
        %v2098 = vadd.f32 %v898, %v1586
        %v2099 = vadd.f32 %v899, %v1587
        %v2100 = vadd.f32 %v900, %v1588
        %v2101 = vadd.f32 %v901, %v1589
        %v2102 = vadd.f32 %v902, %v1590
        %v2103 = vadd.f32 %v903, %v1591
        %v2104 = vadd.f32 %v904, %v1592
        %v2105 = vadd.f32 %v905, %v1593
        %v2106 = vadd.f32 %v906, %v1594
        %v2107 = vadd.f32 %v907, %v1595
        %v2108 = vadd.f32 %v908, %v1596
        %v2109 = vadd.f32 %v909, %v1597
        %v2110 = vadd.f32 %v910, %v1598
        %v2111 = vadd.f32 %v911, %v1599
        %v2112 = vadd.f32 %v912, %v1600
        %v2113 = vadd.f32 %v913, %v1601
        %v2114 = vadd.f32 %v914, %v1602
        %v2115 = vadd.f32 %v915, %v1603
        %v2116 = vadd.f32 %v916, %v1604
        %v2117 = vadd.f32 %v917, %v1605
        %v2118 = vadd.f32 %v918, %v1606
        %v2119 = vadd.f32 %v919, %v1607
        %v2120 = vadd.f32 %v920, %v1608
        %v2121 = vadd.f32 %v921, %v1609
        %v2122 = vadd.f32 %v922, %v1610
        %v2123 = vadd.f32 %v923, %v1611
        %v2124 = vadd.f32 %v924, %v1612
        %v2125 = vadd.f32 %v925, %v1613
        %v2126 = vadd.f32 %v926, %v1614
        %v2127 = vadd.f32 %v927, %v1615
        %v2128 = vadd.f32 %v928, %v1616
        %v2129 = vadd.f32 %v929, %v1617
        %v2130 = vadd.f32 %v930, %v1618
        %v2131 = vadd.f32 %v931, %v1619
        %v2132 = vadd.f32 %v932, %v1620
        %v2133 = vadd.f32 %v933, %v1621
        %v2134 = vadd.f32 %v934, %v1622
        %v2135 = vadd.f32 %v935, %v1623
        %v2136 = vadd.f32 %v936, %v1624
        %v2137 = vadd.f32 %v937, %v1625
        %v2138 = vadd.f32 %v938, %v1626
        %v2139 = vadd.f32 %v939, %v1627
        %v2140 = vadd.f32 %v940, %v1628
        %v2141 = vadd.f32 %v941, %v1629
        %v2142 = vadd.f32 %v942, %v1630
        %v2143 = vadd.f32 %v943, %v1631
        %v2144 = vadd.f32 %v944, %v1632
        %v2145 = vadd.f32 %v945, %v1633
        %v2146 = vadd.f32 %v946, %v1634
        %v2147 = vadd.f32 %v947, %v1635
        %v2148 = vadd.f32 %v948, %v1636
        %v2149 = vadd.f32 %v949, %v1637
        %v2150 = vadd.f32 %v950, %v1638
        %v2151 = vadd.f32 %v951, %v1639
        %v2152 = vadd.f32 %v952, %v1640
        %v2153 = vadd.f32 %v953, %v1641
        %v2154 = vadd.f32 %v954, %v1642
        %v2155 = vadd.f32 %v955, %v1643
        %v2156 = vadd.f32 %v956, %v1644
        %v2157 = vadd.f32 %v957, %v1645
        %v2158 = vadd.f32 %v958, %v1646
        %v2159 = vadd.f32 %v959, %v1647
        %v2160 = vadd.f32 %v960, %v1648
        %v2161 = vadd.f32 %v961, %v1649
        %v2162 = vadd.f32 %v962, %v1650
        %v2163 = vadd.f32 %v963, %v1651
        %v2164 = vadd.f32 %v964, %v1652
        %v2165 = vadd.f32 %v965, %v1653
        %v2166 = vadd.f32 %v966, %v1654
        %v2167 = vadd.f32 %v967, %v1655
        %v2168 = vadd.f32 %v968, %v1656
        %v2169 = vadd.f32 %v969, %v1657
        %v2170 = vadd.f32 %v970, %v1658
        %v2171 = vadd.f32 %v971, %v1659
        %v2172 = vadd.f32 %v972, %v1660
        %v2173 = vadd.f32 %v973, %v1661
        %v2174 = vadd.f32 %v974, %v1662
        %v2175 = vadd.f32 %v975, %v1663
        %v2176 = vadd.f32 %v976, %v1664
        %v2177 = vadd.f32 %v977, %v1665
        %v2178 = vadd.f32 %v978, %v1666
        %v2179 = vadd.f32 %v979, %v1667
        %v2180 = vadd.f32 %v980, %v1668
        %v2181 = vadd.f32 %v981, %v1669
        %v2182 = vadd.f32 %v982, %v1670
        %v2183 = vadd.f32 %v983, %v1671
        %v2184 = vadd.f32 %v984, %v1672
        %v2185 = vadd.f32 %v985, %v1673
        %v2186 = vadd.f32 %v986, %v1674
        %v2187 = vadd.f32 %v987, %v1675
        %v2188 = vadd.f32 %v988, %v1676
        %v2189 = vadd.f32 %v989, %v1677
        %v2190 = vadd.f32 %v990, %v1678
        %v2191 = vadd.f32 %v991, %v1679
        %v2192 = vadd.f32 %v992, %v1680
        %v2193 = vadd.f32 %v993, %v1681
        %v2194 = vadd.f32 %v994, %v1682
        %v2195 = vadd.f32 %v995, %v1683
        %v2196 = vadd.f32 %v996, %v1684
        %v2197 = vadd.f32 %v997, %v1685
        %v2198 = vadd.f32 %v998, %v1686
        %v2199 = vadd.f32 %v999, %v1687
        %v2200 = vadd.f32 %v1000, %v1688
        %v2201 = vadd.f32 %v1001, %v1689
        %v2202 = vadd.f32 %v1002, %v1690
        %v2203 = vadd.f32 %v1003, %v1691
        %v2204 = vadd.f32 %v1004, %v1692
        %v2205 = vadd.f32 %v1005, %v1693
        %v2206 = vadd.f32 %v1006, %v1694
        %v2207 = vadd.f32 %v1007, %v1695
        %v2208 = vadd.f32 %v1008, %v1696
        %v2209 = vadd.f32 %v1009, %v1697
        %v2210 = vadd.f32 %v1010, %v1698
        %v2211 = vadd.f32 %v1011, %v1699
        %v2212 = vadd.f32 %v1012, %v1700
        %v2213 = vadd.f32 %v1013, %v1701
        %v2214 = vadd.f32 %v1014, %v1702
        %v2215 = vadd.f32 %v1015, %v1703
        %v2216 = vadd.f32 %v1016, %v1704
        %v2217 = vadd.f32 %v1017, %v1705
        %v2218 = vadd.f32 %v1018, %v1706
        %v2219 = vadd.f32 %v1019, %v1707
        %v2220 = vadd.f32 %v1020, %v1708
        %v2221 = vadd.f32 %v1021, %v1709
        %v2222 = vadd.f32 %v1022, %v1710
        %v2223 = vadd.f32 %v1023, %v1711
        %v2224 = vadd.f32 %v1024, %v1712
        %v2225 = vadd.f32 %v1025, %v1713
        %v2226 = vadd.f32 %v1026, %v1714
        %v2227 = vadd.f32 %v1027, %v1715
        %v2228 = vadd.f32 %v1028, %v1716
        %v2229 = vadd.f32 %v1029, %v1717
        %v2230 = vadd.f32 %v1030, %v1718
        %v2231 = vadd.f32 %v1031, %v1719
        %v2232 = vadd.f32 %v1032, %v1720
        %v2233 = vadd.f32 %v1033, %v1721
        %v2234 = vadd.f32 %v1034, %v1722
        %v2235 = vadd.f32 %v1035, %v1723
        %v2236 = vadd.f32 %v1036, %v1724
        %v2237 = vadd.f32 %v1037, %v1725
        %v2238 = vadd.f32 %v1038, %v1726
        %v2239 = vadd.f32 %v1039, %v1727
        %v2240 = vadd.f32 %v1040, %v1728
        %v2241 = vadd.f32 %v1041, %v1729
        %v2242 = vadd.f32 %v1042, %v1730
        %v2243 = vadd.f32 %v1043, %v1731
        %v2244 = vadd.f32 %v1044, %v1732
        %v2245 = vadd.f32 %v1045, %v1733
        %v2246 = vadd.f32 %v1046, %v1734
        %v2247 = vadd.f32 %v1047, %v1735
        %v2248 = vadd.f32 %v1048, %v1736
        %v2249 = vadd.f32 %v1049, %v1737
        %v2250 = vadd.f32 %v1050, %v1738
        %v2251 = vadd.f32 %v1051, %v1739
        %v2252 = vadd.f32 %v1052, %v1740
        %v2253 = vadd.f32 %v1053, %v1741
        %v2254 = vadd.f32 %v1054, %v1742
        %v2255 = vadd.f32 %v1055, %v1743
        %v2256 = vadd.f32 %v1056, %v1744
        %v2257 = vadd.f32 %v1057, %v1745
        %v2258 = vadd.f32 %v1058, %v1746
        %v2259 = vadd.f32 %v1059, %v1747
        %v2260 = vadd.f32 %v1060, %v1748
        %v2261 = vadd.f32 %v1061, %v1749
        %v2262 = vadd.f32 %v1062, %v1750
        %v2263 = vadd.f32 %v1063, %v1751
        %v2264 = vadd.f32 %v1064, %v1752
        %v2265 = vadd.f32 %v1065, %v1753
        %v2266 = vadd.f32 %v1066, %v1754
        %v2267 = vadd.f32 %v1067, %v1755
        %v2268 = vadd.f32 %v1068, %v1756
        %v2269 = vadd.f32 %v1069, %v1757
        %v2270 = vadd.f32 %v1070, %v1758
        %v2271 = vadd.f32 %v1071, %v1759
        %v2272 = vadd.f32 %v1072, %v1760
        %v2273 = vadd.f32 %v1073, %v1761
        %v2274 = vadd.f32 %v1074, %v1762
        %v2275 = vadd.f32 %v1075, %v1763
        %v2276 = vadd.f32 %v1076, %v1764
        %v2277 = vadd.f32 %v1077, %v1765
        %v2278 = vadd.f32 %v1078, %v1766
        %v2279 = vadd.f32 %v1079, %v1767
        %v2280 = vadd.f32 %v1080, %v1768
        %v2281 = vadd.f32 %v1081, %v1769
        %v2282 = vadd.f32 %v1082, %v1770
        %v2283 = vadd.f32 %v1083, %v1771
        %v2284 = vadd.f32 %v1084, %v1772
        %v2285 = vadd.f32 %v1085, %v1773
        %v2286 = vadd.f32 %v1086, %v1774
        %v2287 = vadd.f32 %v1087, %v1775
        %v2288 = vadd.f32 %v1088, %v1776
        %v2289 = vadd.f32 %v1089, %v1777
        %v2290 = vadd.f32 %v1090, %v1778
        %v2291 = vadd.f32 %v1091, %v1779
        %v2292 = vadd.f32 %v1092, %v1780
        %v2293 = vadd.f32 %v1093, %v1781
        %v2294 = vadd.f32 %v1094, %v1782
        %v2295 = vadd.f32 %v1095, %v1783
        %v2296 = vadd.f32 %v1096, %v1784
        %v2297 = vadd.f32 %v1097, %v1785
        %v2298 = vadd.f32 %v1098, %v1786
        %v2299 = vadd.f32 %v1099, %v1787
        %v2300 = vadd.f32 %v1100, %v1788
        %v2301 = vadd.f32 %v1101, %v1789
        %v2302 = vadd.f32 %v1102, %v1790
        %v2303 = vadd.f32 %v1103, %v1791
        %v2304 = vadd.f32 %v1104, %v1792
        %v2305 = vadd.f32 %v1105, %v1793
        %v2306 = vadd.f32 %v1106, %v1794
        %v2307 = vadd.f32 %v1107, %v1795
        %v2308 = vadd.f32 %v1108, %v1796
        %v2309 = vadd.f32 %v1109, %v1797
        %v2310 = vadd.f32 %v1110, %v1798
        %v2311 = vadd.f32 %v1111, %v1799
        %v2312 = vadd.f32 %v1112, %v1800
        %v2313 = vadd.f32 %v1113, %v1801
        %v2314 = vadd.f32 %v1114, %v1802
        %v2315 = vadd.f32 %v1115, %v1803
        %v2316 = vadd.f32 %v1116, %v1804
        %v2317 = vadd.f32 %v1117, %v1805
        %v2318 = vadd.f32 %v1118, %v1806
        %v2319 = vadd.f32 %v1119, %v1807
        %v2320 = vadd.f32 %v1120, %v1808
        %v2321 = vadd.f32 %v1121, %v1809
        %v2322 = vadd.f32 %v1122, %v1810
        %v2323 = vadd.f32 %v1123, %v1811
        %v2324 = vadd.f32 %v1124, %v1812
        %v2325 = vadd.f32 %v1125, %v1813
        %v2326 = vadd.f32 %v1126, %v1814
        %v2327 = vadd.f32 %v1127, %v1815
        %v2328 = vadd.f32 %v1128, %v1816
        %v2329 = vadd.f32 %v1129, %v1817
        %v2330 = vadd.f32 %v1130, %v1818
        %v2331 = vadd.f32 %v1131, %v1819
        %v2332 = vadd.f32 %v1132, %v1820
        %v2333 = vadd.f32 %v1133, %v1821
        %v2334 = vadd.f32 %v1134, %v1822
        %v2335 = vadd.f32 %v1135, %v1823
        %v2336 = vadd.f32 %v1136, %v1824
        %v2337 = vadd.f32 %v1137, %v1825
        %v2338 = vadd.f32 %v1138, %v1826
        %v2339 = vadd.f32 %v1139, %v1827
        %v2340 = vadd.f32 %v1140, %v1828
        %v2341 = vadd.f32 %v1141, %v1829
        %v2342 = vadd.f32 %v1142, %v1830
        %v2343 = vadd.f32 %v1143, %v1831
        %v2344 = vadd.f32 %v1144, %v1832
        %v2345 = vadd.f32 %v1145, %v1833
        %v2346 = vadd.f32 %v1146, %v1834
        %v2347 = vadd.f32 %v1147, %v1835
        %v2348 = vadd.f32 %v1148, %v1836
        %v2349 = vadd.f32 %v1149, %v1837
        %v2350 = vadd.f32 %v1150, %v1838
        %v2351 = vadd.f32 %v1151, %v1839
        %v2352 = vadd.f32 %v1152, %v1840
        %v2353 = vadd.f32 %v1153, %v1841
        %v2354 = vadd.f32 %v1154, %v1842
        %v2355 = vadd.f32 %v1155, %v1843
        %v2356 = vadd.f32 %v1156, %v1844
        %v2357 = vadd.f32 %v1157, %v1845
        %v2358 = vadd.f32 %v1158, %v1846
        %v2359 = vadd.f32 %v1159, %v1847
        %v2360 = vadd.f32 %v1160, %v1848
        %v2361 = vadd.f32 %v1161, %v1849
        %v2362 = vadd.f32 %v1162, %v1850
        %v2363 = vadd.f32 %v1163, %v1851
        %v2364 = vadd.f32 %v1164, %v1852
        %v2365 = vadd.f32 %v1165, %v1853
        %v2366 = vadd.f32 %v1166, %v1854
        %v2367 = vadd.f32 %v1167, %v1855
        %v2368 = vadd.f32 %v1168, %v1856
        %v2369 = vadd.f32 %v1169, %v1857
        %v2370 = vadd.f32 %v1170, %v1858
        %v2371 = vadd.f32 %v1171, %v1859
        %v2372 = vadd.f32 %v1172, %v1860
        %v2373 = vadd.f32 %v1173, %v1861
        %v2374 = vadd.f32 %v1174, %v1862
        %v2375 = vadd.f32 %v1175, %v1863
        %v2376 = vadd.f32 %v1176, %v1864
        %v2377 = vadd.f32 %v1177, %v1865
        %v2378 = vadd.f32 %v1178, %v1866
        %v2379 = vadd.f32 %v1179, %v1867
        %v2380 = vadd.f32 %v1180, %v1868
        %v2381 = vadd.f32 %v1181, %v1869
        %v2382 = vadd.f32 %v1182, %v1870
        %v2383 = vadd.f32 %v1183, %v1871
        %v2384 = vadd.f32 %v1184, %v1872
        %v2385 = vadd.f32 %v1185, %v1873
        %v2386 = vadd.f32 %v1186, %v1874
        %v2387 = vadd.f32 %v1187, %v1875
        %v2388 = vadd.f32 %v1188, %v1876
        %v2389 = vadd.f32 %v1189, %v1877
        %v2390 = vadd.f32 %v1190, %v1878
        %v2391 = vadd.f32 %v1191, %v1879
        %v2392 = vadd.f32 %v1192, %v1880
        %v2393 = vadd.f32 %v1193, %v1881
        %v2394 = vadd.f32 %v1194, %v1882
        %v2395 = vadd.f32 %v1195, %v1883
        %v2396 = vadd.f32 %v1196, %v1884
        %v2397 = vadd.f32 %v1197, %v1885
        %v2398 = vadd.f32 %v1198, %v1886
        %v2399 = vadd.f32 %v1199, %v1887
        %v2400 = vadd.f32 %v1200, %v1888
        %v2401 = vadd.f32 %v1201, %v1889
        %v2402 = vadd.f32 %v1202, %v1890
        %v2403 = vadd.f32 %v1203, %v1891
        %v2404 = vadd.f32 %v1204, %v1892
        %v2405 = vadd.f32 %v1205, %v1893
        %v2406 = vadd.f32 %v1206, %v1894
        %v2407 = vadd.f32 %v1207, %v1895
        %v2408 = vadd.f32 %v1208, %v1896
        %v2409 = vadd.f32 %v1209, %v1897
        %v2410 = vadd.f32 %v1210, %v1898
        %v2411 = vadd.f32 %v1211, %v1899
        %v2412 = vadd.f32 %v1212, %v1900
        %v2413 = vadd.f32 %v1213, %v1901
        %v2414 = vadd.f32 %v1214, %v1902
        %v2415 = vadd.f32 %v1215, %v1903
        %v2416 = vadd.f32 %v1216, %v1904
        %v2417 = vadd.f32 %v1217, %v1905
        %v2418 = vadd.f32 %v1218, %v1906
        %v2419 = vadd.f32 %v1219, %v1907
        %v2420 = vadd.f32 %v1220, %v1908
        %v2421 = vadd.f32 %v1221, %v1909
        %v2422 = vadd.f32 %v1222, %v1910
        %v2423 = vadd.f32 %v1223, %v1911
        %v2424 = vadd.f32 %v1224, %v1912
        %v2425 = vadd.f32 %v1225, %v1913
        %v2426 = vadd.f32 %v1226, %v1914
        %v2427 = vadd.f32 %v1227, %v1915
        %v2428 = vadd.f32 %v1228, %v1916
        %v2429 = vadd.f32 %v1229, %v1917
        %v2430 = vadd.f32 %v1230, %v1918
        %v2431 = vadd.f32 %v1231, %v1919
        %v2432 = vadd.f32 %v1232, %v1920
        %v2433 = vadd.f32 %v1233, %v1921
        %v2434 = vadd.f32 %v1234, %v1922
        %v2435 = vadd.f32 %v1235, %v1923
        %v2436 = vadd.f32 %v1236, %v1924
        %v2437 = vadd.f32 %v1237, %v1925
        %v2438 = vadd.f32 %v1238, %v1926
        %v2439 = vadd.f32 %v1239, %v1927
        %v2440 = vadd.f32 %v1240, %v1928
        %v2441 = vadd.f32 %v1241, %v1929
        %v2442 = vadd.f32 %v1242, %v1930
        %v2443 = vadd.f32 %v1243, %v1931
        %v2444 = vadd.f32 %v1244, %v1932
        %v2445 = vadd.f32 %v1245, %v1933
        %v2446 = vadd.f32 %v1246, %v1934
        %v2447 = vadd.f32 %v1247, %v1935
        %v2448 = vadd.f32 %v1248, %v1936
        %v2449 = vadd.f32 %v1249, %v1937
        %v2450 = vadd.f32 %v1250, %v1938
        %v2451 = vadd.f32 %v1251, %v1939
        %v2452 = vadd.f32 %v1252, %v1940
        %v2453 = vadd.f32 %v1253, %v1941
        %v2454 = vadd.f32 %v1254, %v1942
        %v2455 = vadd.f32 %v1255, %v1943
        %v2456 = vadd.f32 %v1256, %v1944
        %v2457 = vadd.f32 %v1257, %v1945
        %v2458 = vadd.f32 %v1258, %v1946
        %v2459 = vadd.f32 %v1259, %v1947
        %v2460 = vadd.f32 %v1260, %v1948
        %v2461 = vadd.f32 %v1261, %v1949
        %2462 = vset.pattern.permute.xlu0 2
        %2463 = vperm.xlu0 %2462, %v494
        %v2464 = vpop.permute.xlu0 %2463
        %2466 = vset.pattern.permute.xlu0 2
        %2467 = vperm.xlu0 %2466, %v495
        %v2468 = vpop.permute.xlu0 %2467
        %2470 = vset.pattern.permute.xlu0 2
        %2471 = vperm.xlu0 %2470, %v496
        %v2472 = vpop.permute.xlu0 %2471
        %2474 = vset.pattern.permute.xlu0 2
        %2475 = vperm.xlu0 %2474, %v497
        %v2476 = vpop.permute.xlu0 %2475
        %2478 = vset.pattern.permute.xlu0 2
        %2479 = vperm.xlu0 %2478, %v498
        %v2480 = vpop.permute.xlu0 %2479
        %2482 = vset.pattern.permute.xlu0 2
        %2483 = vperm.xlu0 %2482, %v499
        %v2484 = vpop.permute.xlu0 %2483
        %2486 = vset.pattern.permute.xlu0 2
        %2487 = vperm.xlu0 %2486, %v500
        %v2488 = vpop.permute.xlu0 %2487
        %2490 = vset.pattern.permute.xlu0 2
        %2491 = vperm.xlu0 %2490, %v501
        %v2492 = vpop.permute.xlu0 %2491
        %2494 = vset.pattern.permute.xlu0 2
        %2495 = vperm.xlu0 %2494, %v502
        %v2496 = vpop.permute.xlu0 %2495
        %2498 = vset.pattern.permute.xlu0 2
        %2499 = vperm.xlu0 %2498, %v503
        %v2500 = vpop.permute.xlu0 %2499
        %2502 = vset.pattern.permute.xlu0 2
        %2503 = vperm.xlu0 %2502, %v504
        %v2504 = vpop.permute.xlu0 %2503
        %2506 = vset.pattern.permute.xlu0 2
        %2507 = vperm.xlu0 %2506, %v505
        %v2508 = vpop.permute.xlu0 %2507
        %2510 = vset.pattern.permute.xlu0 2
        %2511 = vperm.xlu0 %2510, %v506
        %v2512 = vpop.permute.xlu0 %2511
        %2514 = vset.pattern.permute.xlu0 2
        %2515 = vperm.xlu0 %2514, %v507
        %v2516 = vpop.permute.xlu0 %2515
        %2518 = vset.pattern.permute.xlu0 2
        %2519 = vperm.xlu0 %2518, %v508
        %v2520 = vpop.permute.xlu0 %2519
        %2522 = vset.pattern.permute.xlu0 2
        %2523 = vperm.xlu0 %2522, %v509
        %v2524 = vpop.permute.xlu0 %2523
        %2526 = vset.pattern.permute.xlu0 2
        %2527 = vperm.xlu0 %2526, %v510
        %v2528 = vpop.permute.xlu0 %2527
        %2530 = vset.pattern.permute.xlu0 2
        %2531 = vperm.xlu0 %2530, %v511
        %v2532 = vpop.permute.xlu0 %2531
        %2534 = vset.pattern.permute.xlu0 2
        %2535 = vperm.xlu0 %2534, %v512
        %v2536 = vpop.permute.xlu0 %2535
        %2538 = vset.pattern.permute.xlu0 2
        %2539 = vperm.xlu0 %2538, %v513
        %v2540 = vpop.permute.xlu0 %2539
        %2542 = vset.pattern.permute.xlu0 2
        %2543 = vperm.xlu0 %2542, %v514
        %v2544 = vpop.permute.xlu0 %2543
        %2546 = vset.pattern.permute.xlu0 2
        %2547 = vperm.xlu0 %2546, %v515
        %v2548 = vpop.permute.xlu0 %2547
        %2550 = vset.pattern.permute.xlu0 2
        %2551 = vperm.xlu0 %2550, %v516
        %v2552 = vpop.permute.xlu0 %2551
        %2554 = vset.pattern.permute.xlu0 2
        %2555 = vperm.xlu0 %2554, %v517
        %v2556 = vpop.permute.xlu0 %2555
        %2558 = vset.pattern.permute.xlu0 2
        %2559 = vperm.xlu0 %2558, %v518
        %v2560 = vpop.permute.xlu0 %2559
        %2562 = vset.pattern.permute.xlu0 2
        %2563 = vperm.xlu0 %2562, %v519
        %v2564 = vpop.permute.xlu0 %2563
        %2566 = vset.pattern.permute.xlu0 2
        %2567 = vperm.xlu0 %2566, %v520
        %v2568 = vpop.permute.xlu0 %2567
        %2570 = vset.pattern.permute.xlu0 2
        %2571 = vperm.xlu0 %2570, %v521
        %v2572 = vpop.permute.xlu0 %2571
        %2574 = vset.pattern.permute.xlu0 2
        %2575 = vperm.xlu0 %2574, %v522
        %v2576 = vpop.permute.xlu0 %2575
        %2578 = vset.pattern.permute.xlu0 2
        %2579 = vperm.xlu0 %2578, %v523
        %v2580 = vpop.permute.xlu0 %2579
        %2582 = vset.pattern.permute.xlu0 2
        %2583 = vperm.xlu0 %2582, %v524
        %v2584 = vpop.permute.xlu0 %2583
        %2586 = vset.pattern.permute.xlu0 2
        %2587 = vperm.xlu0 %2586, %v525
        %v2588 = vpop.permute.xlu0 %2587
        %v2590 = vperm.slane %v526, 2
        %v2591 = vperm.slane %v526, 6
        %v2592 = vperm.slane %v527, 2
        %v2593 = vperm.slane %v527, 6
        %v2594 = vperm.slane %v528, 2
        %v2595 = vperm.slane %v528, 6
        %v2596 = vperm.slane %v529, 2
        %v2597 = vperm.slane %v529, 6
        %v2598 = vperm.slane %v530, 2
        %v2599 = vperm.slane %v530, 6
        %v2600 = vperm.slane %v531, 2
        %v2601 = vperm.slane %v531, 6
        %v2602 = vperm.slane %v532, 2
        %v2603 = vperm.slane %v532, 6
        %v2604 = vperm.slane %v533, 2
        %v2605 = vperm.slane %v533, 6
        %v2622 = vperm.slane %v2590, 2
        %v2623 = vperm.slane %v2591, 2
        %v2624 = vperm.slane %v2592, 2
        %v2625 = vperm.slane %v2593, 2
        %v2626 = vperm.slane %v2594, 2
        %v2627 = vperm.slane %v2595, 2
        %v2628 = vperm.slane %v2596, 2
        %v2629 = vperm.slane %v2597, 2
        %v2630 = vperm.slane %v2598, 2
        %v2631 = vperm.slane %v2599, 2
        %v2632 = vperm.slane %v2600, 2
        %v2633 = vperm.slane %v2601, 2
        %v2634 = vperm.slane %v2602, 2
        %v2635 = vperm.slane %v2603, 2
        %v2636 = vperm.slane %v2604, 2
        %v2637 = vperm.slane %v2605, 2
        %v2638 = vmul.f32 %v2464, %v2622
        %v2639 = vmul.f32 %v2464, %v2623
        %v2640 = vmul.f32 %v2464, %v2624
        %v2641 = vmul.f32 %v2464, %v2625
        %v2642 = vmul.f32 %v2464, %v2626
        %v2643 = vmul.f32 %v2464, %v2627
        %v2644 = vmul.f32 %v2464, %v2628
        %v2645 = vmul.f32 %v2464, %v2629
        %v2646 = vmul.f32 %v2464, %v2630
        %v2647 = vmul.f32 %v2464, %v2631
        %v2648 = vmul.f32 %v2464, %v2632
        %v2649 = vmul.f32 %v2464, %v2633
        %v2650 = vmul.f32 %v2464, %v2634
        %v2651 = vmul.f32 %v2464, %v2635
        %v2652 = vmul.f32 %v2464, %v2636
        %v2653 = vmul.f32 %v2464, %v2637
        %v2654 = vmul.f32 %v2468, %v2622
        %v2655 = vmul.f32 %v2468, %v2623
        %v2656 = vmul.f32 %v2468, %v2624
        %v2657 = vmul.f32 %v2468, %v2625
        %v2658 = vmul.f32 %v2468, %v2626
        %v2659 = vmul.f32 %v2468, %v2627
        %v2660 = vmul.f32 %v2468, %v2628
        %v2661 = vmul.f32 %v2468, %v2629
        %v2662 = vmul.f32 %v2468, %v2630
        %v2663 = vmul.f32 %v2468, %v2631
        %v2664 = vmul.f32 %v2468, %v2632
        %v2665 = vmul.f32 %v2468, %v2633
        %v2666 = vmul.f32 %v2468, %v2634
        %v2667 = vmul.f32 %v2468, %v2635
        %v2668 = vmul.f32 %v2468, %v2636
        %v2669 = vmul.f32 %v2468, %v2637
        %v2670 = vmul.f32 %v2472, %v2622
        %v2671 = vmul.f32 %v2472, %v2623
        %v2672 = vmul.f32 %v2472, %v2624
        %v2673 = vmul.f32 %v2472, %v2625
        %v2674 = vmul.f32 %v2472, %v2626
        %v2675 = vmul.f32 %v2472, %v2627
        %v2676 = vmul.f32 %v2472, %v2628
        %v2677 = vmul.f32 %v2472, %v2629
        %v2678 = vmul.f32 %v2472, %v2630
        %v2679 = vmul.f32 %v2472, %v2631
        %v2680 = vmul.f32 %v2472, %v2632
        %v2681 = vmul.f32 %v2472, %v2633
        %v2682 = vmul.f32 %v2472, %v2634
        %v2683 = vmul.f32 %v2472, %v2635
        %v2684 = vmul.f32 %v2472, %v2636
        %v2685 = vmul.f32 %v2472, %v2637
        %v2686 = vmul.f32 %v2476, %v2622
        %v2687 = vmul.f32 %v2476, %v2623
        %v2688 = vmul.f32 %v2476, %v2624
        %v2689 = vmul.f32 %v2476, %v2625
        %v2690 = vmul.f32 %v2476, %v2626
        %v2691 = vmul.f32 %v2476, %v2627
        %v2692 = vmul.f32 %v2476, %v2628
        %v2693 = vmul.f32 %v2476, %v2629
        %v2694 = vmul.f32 %v2476, %v2630
        %v2695 = vmul.f32 %v2476, %v2631
        %v2696 = vmul.f32 %v2476, %v2632
        %v2697 = vmul.f32 %v2476, %v2633
        %v2698 = vmul.f32 %v2476, %v2634
        %v2699 = vmul.f32 %v2476, %v2635
        %v2700 = vmul.f32 %v2476, %v2636
        %v2701 = vmul.f32 %v2476, %v2637
        %v2702 = vmul.f32 %v2480, %v2622
        %v2703 = vmul.f32 %v2480, %v2623
        %v2704 = vmul.f32 %v2480, %v2624
        %v2705 = vmul.f32 %v2480, %v2625
        %v2706 = vmul.f32 %v2480, %v2626
        %v2707 = vmul.f32 %v2480, %v2627
        %v2708 = vmul.f32 %v2480, %v2628
        %v2709 = vmul.f32 %v2480, %v2629
        %v2710 = vmul.f32 %v2480, %v2630
        %v2711 = vmul.f32 %v2480, %v2631
        %v2712 = vmul.f32 %v2480, %v2632
        %v2713 = vmul.f32 %v2480, %v2633
        %v2714 = vmul.f32 %v2480, %v2634
        %v2715 = vmul.f32 %v2480, %v2635
        %v2716 = vmul.f32 %v2480, %v2636
        %v2717 = vmul.f32 %v2480, %v2637
        %v2718 = vmul.f32 %v2484, %v2622
        %v2719 = vmul.f32 %v2484, %v2623
        %v2720 = vmul.f32 %v2484, %v2624
        %v2721 = vmul.f32 %v2484, %v2625
        %v2722 = vmul.f32 %v2484, %v2626
        %v2723 = vmul.f32 %v2484, %v2627
        %v2724 = vmul.f32 %v2484, %v2628
        %v2725 = vmul.f32 %v2484, %v2629
        %v2726 = vmul.f32 %v2484, %v2630
        %v2727 = vmul.f32 %v2484, %v2631
        %v2728 = vmul.f32 %v2484, %v2632
        %v2729 = vmul.f32 %v2484, %v2633
        %v2730 = vmul.f32 %v2484, %v2634
        %v2731 = vmul.f32 %v2484, %v2635
        %v2732 = vmul.f32 %v2484, %v2636
        %v2733 = vmul.f32 %v2484, %v2637
        %v2734 = vmul.f32 %v2488, %v2622
        %v2735 = vmul.f32 %v2488, %v2623
        %v2736 = vmul.f32 %v2488, %v2624
        %v2737 = vmul.f32 %v2488, %v2625
        %v2738 = vmul.f32 %v2488, %v2626
        %v2739 = vmul.f32 %v2488, %v2627
        %v2740 = vmul.f32 %v2488, %v2628
        %v2741 = vmul.f32 %v2488, %v2629
        %v2742 = vmul.f32 %v2488, %v2630
        %v2743 = vmul.f32 %v2488, %v2631
        %v2744 = vmul.f32 %v2488, %v2632
        %v2745 = vmul.f32 %v2488, %v2633
        %v2746 = vmul.f32 %v2488, %v2634
        %v2747 = vmul.f32 %v2488, %v2635
        %v2748 = vmul.f32 %v2488, %v2636
        %v2749 = vmul.f32 %v2488, %v2637
        %v2750 = vmul.f32 %v2492, %v2622
        %v2751 = vmul.f32 %v2492, %v2623
        %v2752 = vmul.f32 %v2492, %v2624
        %v2753 = vmul.f32 %v2492, %v2625
        %v2754 = vmul.f32 %v2492, %v2626
        %v2755 = vmul.f32 %v2492, %v2627
        %v2756 = vmul.f32 %v2492, %v2628
        %v2757 = vmul.f32 %v2492, %v2629
        %v2758 = vmul.f32 %v2492, %v2630
        %v2759 = vmul.f32 %v2492, %v2631
        %v2760 = vmul.f32 %v2492, %v2632
        %v2761 = vmul.f32 %v2492, %v2633
        %v2762 = vmul.f32 %v2492, %v2634
        %v2763 = vmul.f32 %v2492, %v2635
        %v2764 = vmul.f32 %v2492, %v2636
        %v2765 = vmul.f32 %v2492, %v2637
        %v2766 = vmul.f32 %v2496, %v2622
        %v2767 = vmul.f32 %v2496, %v2623
        %v2768 = vmul.f32 %v2496, %v2624
        %v2769 = vmul.f32 %v2496, %v2625
        %v2770 = vmul.f32 %v2496, %v2626
        %v2771 = vmul.f32 %v2496, %v2627
        %v2772 = vmul.f32 %v2496, %v2628
        %v2773 = vmul.f32 %v2496, %v2629
        %v2774 = vmul.f32 %v2496, %v2630
        %v2775 = vmul.f32 %v2496, %v2631
        %v2776 = vmul.f32 %v2496, %v2632
        %v2777 = vmul.f32 %v2496, %v2633
        %v2778 = vmul.f32 %v2496, %v2634
        %v2779 = vmul.f32 %v2496, %v2635
        %v2780 = vmul.f32 %v2496, %v2636
        %v2781 = vmul.f32 %v2496, %v2637
        %v2782 = vmul.f32 %v2500, %v2622
        %v2783 = vmul.f32 %v2500, %v2623
        %v2784 = vmul.f32 %v2500, %v2624
        %v2785 = vmul.f32 %v2500, %v2625
        %v2786 = vmul.f32 %v2500, %v2626
        %v2787 = vmul.f32 %v2500, %v2627
        %v2788 = vmul.f32 %v2500, %v2628
        %v2789 = vmul.f32 %v2500, %v2629
        %v2790 = vmul.f32 %v2500, %v2630
        %v2791 = vmul.f32 %v2500, %v2631
        %v2792 = vmul.f32 %v2500, %v2632
        %v2793 = vmul.f32 %v2500, %v2633
        %v2794 = vmul.f32 %v2500, %v2634
        %v2795 = vmul.f32 %v2500, %v2635
        %v2796 = vmul.f32 %v2500, %v2636
        %v2797 = vmul.f32 %v2500, %v2637
        %v2798 = vmul.f32 %v2504, %v2622
        %v2799 = vmul.f32 %v2504, %v2623
        %v2800 = vmul.f32 %v2504, %v2624
        %v2801 = vmul.f32 %v2504, %v2625
        %v2802 = vmul.f32 %v2504, %v2626
        %v2803 = vmul.f32 %v2504, %v2627
        %v2804 = vmul.f32 %v2504, %v2628
        %v2805 = vmul.f32 %v2504, %v2629
        %v2806 = vmul.f32 %v2504, %v2630
        %v2807 = vmul.f32 %v2504, %v2631
        %v2808 = vmul.f32 %v2504, %v2632
        %v2809 = vmul.f32 %v2504, %v2633
        %v2810 = vmul.f32 %v2504, %v2634
        %v2811 = vmul.f32 %v2504, %v2635
        %v2812 = vmul.f32 %v2504, %v2636
        %v2813 = vmul.f32 %v2504, %v2637
        %v2814 = vmul.f32 %v2508, %v2622
        %v2815 = vmul.f32 %v2508, %v2623
        %v2816 = vmul.f32 %v2508, %v2624
        %v2817 = vmul.f32 %v2508, %v2625
        %v2818 = vmul.f32 %v2508, %v2626
        %v2819 = vmul.f32 %v2508, %v2627
        %v2820 = vmul.f32 %v2508, %v2628
        %v2821 = vmul.f32 %v2508, %v2629
        %v2822 = vmul.f32 %v2508, %v2630
        %v2823 = vmul.f32 %v2508, %v2631
        %v2824 = vmul.f32 %v2508, %v2632
        %v2825 = vmul.f32 %v2508, %v2633
        %v2826 = vmul.f32 %v2508, %v2634
        %v2827 = vmul.f32 %v2508, %v2635
        %v2828 = vmul.f32 %v2508, %v2636
        %v2829 = vmul.f32 %v2508, %v2637
        %v2830 = vmul.f32 %v2512, %v2622
        %v2831 = vmul.f32 %v2512, %v2623
        %v2832 = vmul.f32 %v2512, %v2624
        %v2833 = vmul.f32 %v2512, %v2625
        %v2834 = vmul.f32 %v2512, %v2626
        %v2835 = vmul.f32 %v2512, %v2627
        %v2836 = vmul.f32 %v2512, %v2628
        %v2837 = vmul.f32 %v2512, %v2629
        %v2838 = vmul.f32 %v2512, %v2630
        %v2839 = vmul.f32 %v2512, %v2631
        %v2840 = vmul.f32 %v2512, %v2632
        %v2841 = vmul.f32 %v2512, %v2633
        %v2842 = vmul.f32 %v2512, %v2634
        %v2843 = vmul.f32 %v2512, %v2635
        %v2844 = vmul.f32 %v2512, %v2636
        %v2845 = vmul.f32 %v2512, %v2637
        %v2846 = vmul.f32 %v2516, %v2622
        %v2847 = vmul.f32 %v2516, %v2623
        %v2848 = vmul.f32 %v2516, %v2624
        %v2849 = vmul.f32 %v2516, %v2625
        %v2850 = vmul.f32 %v2516, %v2626
        %v2851 = vmul.f32 %v2516, %v2627
        %v2852 = vmul.f32 %v2516, %v2628
        %v2853 = vmul.f32 %v2516, %v2629
        %v2854 = vmul.f32 %v2516, %v2630
        %v2855 = vmul.f32 %v2516, %v2631
        %v2856 = vmul.f32 %v2516, %v2632
        %v2857 = vmul.f32 %v2516, %v2633
        %v2858 = vmul.f32 %v2516, %v2634
        %v2859 = vmul.f32 %v2516, %v2635
        %v2860 = vmul.f32 %v2516, %v2636
        %v2861 = vmul.f32 %v2516, %v2637
        %v2862 = vmul.f32 %v2520, %v2622
        %v2863 = vmul.f32 %v2520, %v2623
        %v2864 = vmul.f32 %v2520, %v2624
        %v2865 = vmul.f32 %v2520, %v2625
        %v2866 = vmul.f32 %v2520, %v2626
        %v2867 = vmul.f32 %v2520, %v2627
        %v2868 = vmul.f32 %v2520, %v2628
        %v2869 = vmul.f32 %v2520, %v2629
        %v2870 = vmul.f32 %v2520, %v2630
        %v2871 = vmul.f32 %v2520, %v2631
        %v2872 = vmul.f32 %v2520, %v2632
        %v2873 = vmul.f32 %v2520, %v2633
        %v2874 = vmul.f32 %v2520, %v2634
        %v2875 = vmul.f32 %v2520, %v2635
        %v2876 = vmul.f32 %v2520, %v2636
        %v2877 = vmul.f32 %v2520, %v2637
        %v2878 = vmul.f32 %v2524, %v2622
        %v2879 = vmul.f32 %v2524, %v2623
        %v2880 = vmul.f32 %v2524, %v2624
        %v2881 = vmul.f32 %v2524, %v2625
        %v2882 = vmul.f32 %v2524, %v2626
        %v2883 = vmul.f32 %v2524, %v2627
        %v2884 = vmul.f32 %v2524, %v2628
        %v2885 = vmul.f32 %v2524, %v2629
        %v2886 = vmul.f32 %v2524, %v2630
        %v2887 = vmul.f32 %v2524, %v2631
        %v2888 = vmul.f32 %v2524, %v2632
        %v2889 = vmul.f32 %v2524, %v2633
        %v2890 = vmul.f32 %v2524, %v2634
        %v2891 = vmul.f32 %v2524, %v2635
        %v2892 = vmul.f32 %v2524, %v2636
        %v2893 = vmul.f32 %v2524, %v2637
        %v2894 = vmul.f32 %v2528, %v2622
        %v2895 = vmul.f32 %v2528, %v2623
        %v2896 = vmul.f32 %v2528, %v2624
        %v2897 = vmul.f32 %v2528, %v2625
        %v2898 = vmul.f32 %v2528, %v2626
        %v2899 = vmul.f32 %v2528, %v2627
        %v2900 = vmul.f32 %v2528, %v2628
        %v2901 = vmul.f32 %v2528, %v2629
        %v2902 = vmul.f32 %v2528, %v2630
        %v2903 = vmul.f32 %v2528, %v2631
        %v2904 = vmul.f32 %v2528, %v2632
        %v2905 = vmul.f32 %v2528, %v2633
        %v2906 = vmul.f32 %v2528, %v2634
        %v2907 = vmul.f32 %v2528, %v2635
        %v2908 = vmul.f32 %v2528, %v2636
        %v2909 = vmul.f32 %v2528, %v2637
        %v2910 = vmul.f32 %v2532, %v2622
        %v2911 = vmul.f32 %v2532, %v2623
        %v2912 = vmul.f32 %v2532, %v2624
        %v2913 = vmul.f32 %v2532, %v2625
        %v2914 = vmul.f32 %v2532, %v2626
        %v2915 = vmul.f32 %v2532, %v2627
        %v2916 = vmul.f32 %v2532, %v2628
        %v2917 = vmul.f32 %v2532, %v2629
        %v2918 = vmul.f32 %v2532, %v2630
        %v2919 = vmul.f32 %v2532, %v2631
        %v2920 = vmul.f32 %v2532, %v2632
        %v2921 = vmul.f32 %v2532, %v2633
        %v2922 = vmul.f32 %v2532, %v2634
        %v2923 = vmul.f32 %v2532, %v2635
        %v2924 = vmul.f32 %v2532, %v2636
        %v2925 = vmul.f32 %v2532, %v2637
        %v2926 = vmul.f32 %v2536, %v2622
        %v2927 = vmul.f32 %v2536, %v2623
        %v2928 = vmul.f32 %v2536, %v2624
        %v2929 = vmul.f32 %v2536, %v2625
        %v2930 = vmul.f32 %v2536, %v2626
        %v2931 = vmul.f32 %v2536, %v2627
        %v2932 = vmul.f32 %v2536, %v2628
        %v2933 = vmul.f32 %v2536, %v2629
        %v2934 = vmul.f32 %v2536, %v2630
        %v2935 = vmul.f32 %v2536, %v2631
        %v2936 = vmul.f32 %v2536, %v2632
        %v2937 = vmul.f32 %v2536, %v2633
        %v2938 = vmul.f32 %v2536, %v2634
        %v2939 = vmul.f32 %v2536, %v2635
        %v2940 = vmul.f32 %v2536, %v2636
        %v2941 = vmul.f32 %v2536, %v2637
        %v2942 = vmul.f32 %v2540, %v2622
        %v2943 = vmul.f32 %v2540, %v2623
        %v2944 = vmul.f32 %v2540, %v2624
        %v2945 = vmul.f32 %v2540, %v2625
        %v2946 = vmul.f32 %v2540, %v2626
        %v2947 = vmul.f32 %v2540, %v2627
        %v2948 = vmul.f32 %v2540, %v2628
        %v2949 = vmul.f32 %v2540, %v2629
        %v2950 = vmul.f32 %v2540, %v2630
        %v2951 = vmul.f32 %v2540, %v2631
        %v2952 = vmul.f32 %v2540, %v2632
        %v2953 = vmul.f32 %v2540, %v2633
        %v2954 = vmul.f32 %v2540, %v2634
        %v2955 = vmul.f32 %v2540, %v2635
        %v2956 = vmul.f32 %v2540, %v2636
        %v2957 = vmul.f32 %v2540, %v2637
        %v2958 = vmul.f32 %v2544, %v2622
        %v2959 = vmul.f32 %v2544, %v2623
        %v2960 = vmul.f32 %v2544, %v2624
        %v2961 = vmul.f32 %v2544, %v2625
        %v2962 = vmul.f32 %v2544, %v2626
        %v2963 = vmul.f32 %v2544, %v2627
        %v2964 = vmul.f32 %v2544, %v2628
        %v2965 = vmul.f32 %v2544, %v2629
        %v2966 = vmul.f32 %v2544, %v2630
        %v2967 = vmul.f32 %v2544, %v2631
        %v2968 = vmul.f32 %v2544, %v2632
        %v2969 = vmul.f32 %v2544, %v2633
        %v2970 = vmul.f32 %v2544, %v2634
        %v2971 = vmul.f32 %v2544, %v2635
        %v2972 = vmul.f32 %v2544, %v2636
        %v2973 = vmul.f32 %v2544, %v2637
        %v2974 = vmul.f32 %v2548, %v2622
        %v2975 = vmul.f32 %v2548, %v2623
        %v2976 = vmul.f32 %v2548, %v2624
        %v2977 = vmul.f32 %v2548, %v2625
        %v2978 = vmul.f32 %v2548, %v2626
        %v2979 = vmul.f32 %v2548, %v2627
        %v2980 = vmul.f32 %v2548, %v2628
        %v2981 = vmul.f32 %v2548, %v2629
        %v2982 = vmul.f32 %v2548, %v2630
        %v2983 = vmul.f32 %v2548, %v2631
        %v2984 = vmul.f32 %v2548, %v2632
        %v2985 = vmul.f32 %v2548, %v2633
        %v2986 = vmul.f32 %v2548, %v2634
        %v2987 = vmul.f32 %v2548, %v2635
        %v2988 = vmul.f32 %v2548, %v2636
        %v2989 = vmul.f32 %v2548, %v2637
        %v2990 = vmul.f32 %v2552, %v2622
        %v2991 = vmul.f32 %v2552, %v2623
        %v2992 = vmul.f32 %v2552, %v2624
        %v2993 = vmul.f32 %v2552, %v2625
        %v2994 = vmul.f32 %v2552, %v2626
        %v2995 = vmul.f32 %v2552, %v2627
        %v2996 = vmul.f32 %v2552, %v2628
        %v2997 = vmul.f32 %v2552, %v2629
        %v2998 = vmul.f32 %v2552, %v2630
        %v2999 = vmul.f32 %v2552, %v2631
        %v3000 = vmul.f32 %v2552, %v2632
        %v3001 = vmul.f32 %v2552, %v2633
        %v3002 = vmul.f32 %v2552, %v2634
        %v3003 = vmul.f32 %v2552, %v2635
        %v3004 = vmul.f32 %v2552, %v2636
        %v3005 = vmul.f32 %v2552, %v2637
        %v3006 = vmul.f32 %v2556, %v2622
        %v3007 = vmul.f32 %v2556, %v2623
        %v3008 = vmul.f32 %v2556, %v2624
        %v3009 = vmul.f32 %v2556, %v2625
        %v3010 = vmul.f32 %v2556, %v2626
        %v3011 = vmul.f32 %v2556, %v2627
        %v3012 = vmul.f32 %v2556, %v2628
        %v3013 = vmul.f32 %v2556, %v2629
        %v3014 = vmul.f32 %v2556, %v2630
        %v3015 = vmul.f32 %v2556, %v2631
        %v3016 = vmul.f32 %v2556, %v2632
        %v3017 = vmul.f32 %v2556, %v2633
        %v3018 = vmul.f32 %v2556, %v2634
        %v3019 = vmul.f32 %v2556, %v2635
        %v3020 = vmul.f32 %v2556, %v2636
        %v3021 = vmul.f32 %v2556, %v2637
        %v3022 = vmul.f32 %v2560, %v2622
        %v3023 = vmul.f32 %v2560, %v2623
        %v3024 = vmul.f32 %v2560, %v2624
        %v3025 = vmul.f32 %v2560, %v2625
        %v3026 = vmul.f32 %v2560, %v2626
        %v3027 = vmul.f32 %v2560, %v2627
        %v3028 = vmul.f32 %v2560, %v2628
        %v3029 = vmul.f32 %v2560, %v2629
        %v3030 = vmul.f32 %v2560, %v2630
        %v3031 = vmul.f32 %v2560, %v2631
        %v3032 = vmul.f32 %v2560, %v2632
        %v3033 = vmul.f32 %v2560, %v2633
        %v3034 = vmul.f32 %v2560, %v2634
        %v3035 = vmul.f32 %v2560, %v2635
        %v3036 = vmul.f32 %v2560, %v2636
        %v3037 = vmul.f32 %v2560, %v2637
        %v3038 = vmul.f32 %v2564, %v2622
        %v3039 = vmul.f32 %v2564, %v2623
        %v3040 = vmul.f32 %v2564, %v2624
        %v3041 = vmul.f32 %v2564, %v2625
        %v3042 = vmul.f32 %v2564, %v2626
        %v3043 = vmul.f32 %v2564, %v2627
        %v3044 = vmul.f32 %v2564, %v2628
        %v3045 = vmul.f32 %v2564, %v2629
        %v3046 = vmul.f32 %v2564, %v2630
        %v3047 = vmul.f32 %v2564, %v2631
        %v3048 = vmul.f32 %v2564, %v2632
        %v3049 = vmul.f32 %v2564, %v2633
        %v3050 = vmul.f32 %v2564, %v2634
        %v3051 = vmul.f32 %v2564, %v2635
        %v3052 = vmul.f32 %v2564, %v2636
        %v3053 = vmul.f32 %v2564, %v2637
        %v3054 = vmul.f32 %v2568, %v2622
        %v3055 = vmul.f32 %v2568, %v2623
        %v3056 = vmul.f32 %v2568, %v2624
        %v3057 = vmul.f32 %v2568, %v2625
        %v3058 = vmul.f32 %v2568, %v2626
        %v3059 = vmul.f32 %v2568, %v2627
        %v3060 = vmul.f32 %v2568, %v2628
        %v3061 = vmul.f32 %v2568, %v2629
        %v3062 = vmul.f32 %v2568, %v2630
        %v3063 = vmul.f32 %v2568, %v2631
        %v3064 = vmul.f32 %v2568, %v2632
        %v3065 = vmul.f32 %v2568, %v2633
        %v3066 = vmul.f32 %v2568, %v2634
        %v3067 = vmul.f32 %v2568, %v2635
        %v3068 = vmul.f32 %v2568, %v2636
        %v3069 = vmul.f32 %v2568, %v2637
        %v3070 = vmul.f32 %v2572, %v2622
        %v3071 = vmul.f32 %v2572, %v2623
        %v3072 = vmul.f32 %v2572, %v2624
        %v3073 = vmul.f32 %v2572, %v2625
        %v3074 = vmul.f32 %v2572, %v2626
        %v3075 = vmul.f32 %v2572, %v2627
        %v3076 = vmul.f32 %v2572, %v2628
        %v3077 = vmul.f32 %v2572, %v2629
        %v3078 = vmul.f32 %v2572, %v2630
        %v3079 = vmul.f32 %v2572, %v2631
        %v3080 = vmul.f32 %v2572, %v2632
        %v3081 = vmul.f32 %v2572, %v2633
        %v3082 = vmul.f32 %v2572, %v2634
        %v3083 = vmul.f32 %v2572, %v2635
        %v3084 = vmul.f32 %v2572, %v2636
        %v3085 = vmul.f32 %v2572, %v2637
        %v3086 = vmul.f32 %v2576, %v2622
        %v3087 = vmul.f32 %v2576, %v2623
        %v3088 = vmul.f32 %v2576, %v2624
        %v3089 = vmul.f32 %v2576, %v2625
        %v3090 = vmul.f32 %v2576, %v2626
        %v3091 = vmul.f32 %v2576, %v2627
        %v3092 = vmul.f32 %v2576, %v2628
        %v3093 = vmul.f32 %v2576, %v2629
        %v3094 = vmul.f32 %v2576, %v2630
        %v3095 = vmul.f32 %v2576, %v2631
        %v3096 = vmul.f32 %v2576, %v2632
        %v3097 = vmul.f32 %v2576, %v2633
        %v3098 = vmul.f32 %v2576, %v2634
        %v3099 = vmul.f32 %v2576, %v2635
        %v3100 = vmul.f32 %v2576, %v2636
        %v3101 = vmul.f32 %v2576, %v2637
        %v3102 = vmul.f32 %v2580, %v2622
        %v3103 = vmul.f32 %v2580, %v2623
        %v3104 = vmul.f32 %v2580, %v2624
        %v3105 = vmul.f32 %v2580, %v2625
        %v3106 = vmul.f32 %v2580, %v2626
        %v3107 = vmul.f32 %v2580, %v2627
        %v3108 = vmul.f32 %v2580, %v2628
        %v3109 = vmul.f32 %v2580, %v2629
        %v3110 = vmul.f32 %v2580, %v2630
        %v3111 = vmul.f32 %v2580, %v2631
        %v3112 = vmul.f32 %v2580, %v2632
        %v3113 = vmul.f32 %v2580, %v2633
        %v3114 = vmul.f32 %v2580, %v2634
        %v3115 = vmul.f32 %v2580, %v2635
        %v3116 = vmul.f32 %v2580, %v2636
        %v3117 = vmul.f32 %v2580, %v2637
        %v3118 = vmul.f32 %v2584, %v2622
        %v3119 = vmul.f32 %v2584, %v2623
        %v3120 = vmul.f32 %v2584, %v2624
        %v3121 = vmul.f32 %v2584, %v2625
        %v3122 = vmul.f32 %v2584, %v2626
        %v3123 = vmul.f32 %v2584, %v2627
        %v3124 = vmul.f32 %v2584, %v2628
        %v3125 = vmul.f32 %v2584, %v2629
        %v3126 = vmul.f32 %v2584, %v2630
        %v3127 = vmul.f32 %v2584, %v2631
        %v3128 = vmul.f32 %v2584, %v2632
        %v3129 = vmul.f32 %v2584, %v2633
        %v3130 = vmul.f32 %v2584, %v2634
        %v3131 = vmul.f32 %v2584, %v2635
        %v3132 = vmul.f32 %v2584, %v2636
        %v3133 = vmul.f32 %v2584, %v2637
        %v3134 = vmul.f32 %v2588, %v2622
        %v3135 = vmul.f32 %v2588, %v2623
        %v3136 = vmul.f32 %v2588, %v2624
        %v3137 = vmul.f32 %v2588, %v2625
        %v3138 = vmul.f32 %v2588, %v2626
        %v3139 = vmul.f32 %v2588, %v2627
        %v3140 = vmul.f32 %v2588, %v2628
        %v3141 = vmul.f32 %v2588, %v2629
        %v3142 = vmul.f32 %v2588, %v2630
        %v3143 = vmul.f32 %v2588, %v2631
        %v3144 = vmul.f32 %v2588, %v2632
        %v3145 = vmul.f32 %v2588, %v2633
        %v3146 = vmul.f32 %v2588, %v2634
        %v3147 = vmul.f32 %v2588, %v2635
        %v3148 = vmul.f32 %v2588, %v2636
        %v3149 = vmul.f32 %v2588, %v2637
        %v3150 = vadd.f32 %v1950, %v2638
        %v3151 = vadd.f32 %v1951, %v2639
        %v3152 = vadd.f32 %v1952, %v2640
        %v3153 = vadd.f32 %v1953, %v2641
        %v3154 = vadd.f32 %v1954, %v2642
        %v3155 = vadd.f32 %v1955, %v2643
        %v3156 = vadd.f32 %v1956, %v2644
        %v3157 = vadd.f32 %v1957, %v2645
        %v3158 = vadd.f32 %v1958, %v2646
        %v3159 = vadd.f32 %v1959, %v2647
        %v3160 = vadd.f32 %v1960, %v2648
        %v3161 = vadd.f32 %v1961, %v2649
        %v3162 = vadd.f32 %v1962, %v2650
        %v3163 = vadd.f32 %v1963, %v2651
        %v3164 = vadd.f32 %v1964, %v2652
        %v3165 = vadd.f32 %v1965, %v2653
        %v3166 = vadd.f32 %v1966, %v2654
        %v3167 = vadd.f32 %v1967, %v2655
        %v3168 = vadd.f32 %v1968, %v2656
        %v3169 = vadd.f32 %v1969, %v2657
        %v3170 = vadd.f32 %v1970, %v2658
        %v3171 = vadd.f32 %v1971, %v2659
        %v3172 = vadd.f32 %v1972, %v2660
        %v3173 = vadd.f32 %v1973, %v2661
        %v3174 = vadd.f32 %v1974, %v2662
        %v3175 = vadd.f32 %v1975, %v2663
        %v3176 = vadd.f32 %v1976, %v2664
        %v3177 = vadd.f32 %v1977, %v2665
        %v3178 = vadd.f32 %v1978, %v2666
        %v3179 = vadd.f32 %v1979, %v2667
        %v3180 = vadd.f32 %v1980, %v2668
        %v3181 = vadd.f32 %v1981, %v2669
        %v3182 = vadd.f32 %v1982, %v2670
        %v3183 = vadd.f32 %v1983, %v2671
        %v3184 = vadd.f32 %v1984, %v2672
        %v3185 = vadd.f32 %v1985, %v2673
        %v3186 = vadd.f32 %v1986, %v2674
        %v3187 = vadd.f32 %v1987, %v2675
        %v3188 = vadd.f32 %v1988, %v2676
        %v3189 = vadd.f32 %v1989, %v2677
        %v3190 = vadd.f32 %v1990, %v2678
        %v3191 = vadd.f32 %v1991, %v2679
        %v3192 = vadd.f32 %v1992, %v2680
        %v3193 = vadd.f32 %v1993, %v2681
        %v3194 = vadd.f32 %v1994, %v2682
        %v3195 = vadd.f32 %v1995, %v2683
        %v3196 = vadd.f32 %v1996, %v2684
        %v3197 = vadd.f32 %v1997, %v2685
        %v3198 = vadd.f32 %v1998, %v2686
        %v3199 = vadd.f32 %v1999, %v2687
        %v3200 = vadd.f32 %v2000, %v2688
        %v3201 = vadd.f32 %v2001, %v2689
        %v3202 = vadd.f32 %v2002, %v2690
        %v3203 = vadd.f32 %v2003, %v2691
        %v3204 = vadd.f32 %v2004, %v2692
        %v3205 = vadd.f32 %v2005, %v2693
        %v3206 = vadd.f32 %v2006, %v2694
        %v3207 = vadd.f32 %v2007, %v2695
        %v3208 = vadd.f32 %v2008, %v2696
        %v3209 = vadd.f32 %v2009, %v2697
        %v3210 = vadd.f32 %v2010, %v2698
        %v3211 = vadd.f32 %v2011, %v2699
        %v3212 = vadd.f32 %v2012, %v2700
        %v3213 = vadd.f32 %v2013, %v2701
        %v3214 = vadd.f32 %v2014, %v2702
        %v3215 = vadd.f32 %v2015, %v2703
        %v3216 = vadd.f32 %v2016, %v2704
        %v3217 = vadd.f32 %v2017, %v2705
        %v3218 = vadd.f32 %v2018, %v2706
        %v3219 = vadd.f32 %v2019, %v2707
        %v3220 = vadd.f32 %v2020, %v2708
        %v3221 = vadd.f32 %v2021, %v2709
        %v3222 = vadd.f32 %v2022, %v2710
        %v3223 = vadd.f32 %v2023, %v2711
        %v3224 = vadd.f32 %v2024, %v2712
        %v3225 = vadd.f32 %v2025, %v2713
        %v3226 = vadd.f32 %v2026, %v2714
        %v3227 = vadd.f32 %v2027, %v2715
        %v3228 = vadd.f32 %v2028, %v2716
        %v3229 = vadd.f32 %v2029, %v2717
        %v3230 = vadd.f32 %v2030, %v2718
        %v3231 = vadd.f32 %v2031, %v2719
        %v3232 = vadd.f32 %v2032, %v2720
        %v3233 = vadd.f32 %v2033, %v2721
        %v3234 = vadd.f32 %v2034, %v2722
        %v3235 = vadd.f32 %v2035, %v2723
        %v3236 = vadd.f32 %v2036, %v2724
        %v3237 = vadd.f32 %v2037, %v2725
        %v3238 = vadd.f32 %v2038, %v2726
        %v3239 = vadd.f32 %v2039, %v2727
        %v3240 = vadd.f32 %v2040, %v2728
        %v3241 = vadd.f32 %v2041, %v2729
        %v3242 = vadd.f32 %v2042, %v2730
        %v3243 = vadd.f32 %v2043, %v2731
        %v3244 = vadd.f32 %v2044, %v2732
        %v3245 = vadd.f32 %v2045, %v2733
        %v3246 = vadd.f32 %v2046, %v2734
        %v3247 = vadd.f32 %v2047, %v2735
        %v3248 = vadd.f32 %v2048, %v2736
        %v3249 = vadd.f32 %v2049, %v2737
        %v3250 = vadd.f32 %v2050, %v2738
        %v3251 = vadd.f32 %v2051, %v2739
        %v3252 = vadd.f32 %v2052, %v2740
        %v3253 = vadd.f32 %v2053, %v2741
        %v3254 = vadd.f32 %v2054, %v2742
        %v3255 = vadd.f32 %v2055, %v2743
        %v3256 = vadd.f32 %v2056, %v2744
        %v3257 = vadd.f32 %v2057, %v2745
        %v3258 = vadd.f32 %v2058, %v2746
        %v3259 = vadd.f32 %v2059, %v2747
        %v3260 = vadd.f32 %v2060, %v2748
        %v3261 = vadd.f32 %v2061, %v2749
        %v3262 = vadd.f32 %v2062, %v2750
        %v3263 = vadd.f32 %v2063, %v2751
        %v3264 = vadd.f32 %v2064, %v2752
        %v3265 = vadd.f32 %v2065, %v2753
        %v3266 = vadd.f32 %v2066, %v2754
        %v3267 = vadd.f32 %v2067, %v2755
        %v3268 = vadd.f32 %v2068, %v2756
        %v3269 = vadd.f32 %v2069, %v2757
        %v3270 = vadd.f32 %v2070, %v2758
        %v3271 = vadd.f32 %v2071, %v2759
        %v3272 = vadd.f32 %v2072, %v2760
        %v3273 = vadd.f32 %v2073, %v2761
        %v3274 = vadd.f32 %v2074, %v2762
        %v3275 = vadd.f32 %v2075, %v2763
        %v3276 = vadd.f32 %v2076, %v2764
        %v3277 = vadd.f32 %v2077, %v2765
        %v3278 = vadd.f32 %v2078, %v2766
        %v3279 = vadd.f32 %v2079, %v2767
        %v3280 = vadd.f32 %v2080, %v2768
        %v3281 = vadd.f32 %v2081, %v2769
        %v3282 = vadd.f32 %v2082, %v2770
        %v3283 = vadd.f32 %v2083, %v2771
        %v3284 = vadd.f32 %v2084, %v2772
        %v3285 = vadd.f32 %v2085, %v2773
        %v3286 = vadd.f32 %v2086, %v2774
        %v3287 = vadd.f32 %v2087, %v2775
        %v3288 = vadd.f32 %v2088, %v2776
        %v3289 = vadd.f32 %v2089, %v2777
        %v3290 = vadd.f32 %v2090, %v2778
        %v3291 = vadd.f32 %v2091, %v2779
        %v3292 = vadd.f32 %v2092, %v2780
        %v3293 = vadd.f32 %v2093, %v2781
        %v3294 = vadd.f32 %v2094, %v2782
        %v3295 = vadd.f32 %v2095, %v2783
        %v3296 = vadd.f32 %v2096, %v2784
        %v3297 = vadd.f32 %v2097, %v2785
        %v3298 = vadd.f32 %v2098, %v2786
        %v3299 = vadd.f32 %v2099, %v2787
        %v3300 = vadd.f32 %v2100, %v2788
        %v3301 = vadd.f32 %v2101, %v2789
        %v3302 = vadd.f32 %v2102, %v2790
        %v3303 = vadd.f32 %v2103, %v2791
        %v3304 = vadd.f32 %v2104, %v2792
        %v3305 = vadd.f32 %v2105, %v2793
        %v3306 = vadd.f32 %v2106, %v2794
        %v3307 = vadd.f32 %v2107, %v2795
        %v3308 = vadd.f32 %v2108, %v2796
        %v3309 = vadd.f32 %v2109, %v2797
        %v3310 = vadd.f32 %v2110, %v2798
        %v3311 = vadd.f32 %v2111, %v2799
        %v3312 = vadd.f32 %v2112, %v2800
        %v3313 = vadd.f32 %v2113, %v2801
        %v3314 = vadd.f32 %v2114, %v2802
        %v3315 = vadd.f32 %v2115, %v2803
        %v3316 = vadd.f32 %v2116, %v2804
        %v3317 = vadd.f32 %v2117, %v2805
        %v3318 = vadd.f32 %v2118, %v2806
        %v3319 = vadd.f32 %v2119, %v2807
        %v3320 = vadd.f32 %v2120, %v2808
        %v3321 = vadd.f32 %v2121, %v2809
        %v3322 = vadd.f32 %v2122, %v2810
        %v3323 = vadd.f32 %v2123, %v2811
        %v3324 = vadd.f32 %v2124, %v2812
        %v3325 = vadd.f32 %v2125, %v2813
        %v3326 = vadd.f32 %v2126, %v2814
        %v3327 = vadd.f32 %v2127, %v2815
        %v3328 = vadd.f32 %v2128, %v2816
        %v3329 = vadd.f32 %v2129, %v2817
        %v3330 = vadd.f32 %v2130, %v2818
        %v3331 = vadd.f32 %v2131, %v2819
        %v3332 = vadd.f32 %v2132, %v2820
        %v3333 = vadd.f32 %v2133, %v2821
        %v3334 = vadd.f32 %v2134, %v2822
        %v3335 = vadd.f32 %v2135, %v2823
        %v3336 = vadd.f32 %v2136, %v2824
        %v3337 = vadd.f32 %v2137, %v2825
        %v3338 = vadd.f32 %v2138, %v2826
        %v3339 = vadd.f32 %v2139, %v2827
        %v3340 = vadd.f32 %v2140, %v2828
        %v3341 = vadd.f32 %v2141, %v2829
        %v3342 = vadd.f32 %v2142, %v2830
        %v3343 = vadd.f32 %v2143, %v2831
        %v3344 = vadd.f32 %v2144, %v2832
        %v3345 = vadd.f32 %v2145, %v2833
        %v3346 = vadd.f32 %v2146, %v2834
        %v3347 = vadd.f32 %v2147, %v2835
        %v3348 = vadd.f32 %v2148, %v2836
        %v3349 = vadd.f32 %v2149, %v2837
        %v3350 = vadd.f32 %v2150, %v2838
        %v3351 = vadd.f32 %v2151, %v2839
        %v3352 = vadd.f32 %v2152, %v2840
        %v3353 = vadd.f32 %v2153, %v2841
        %v3354 = vadd.f32 %v2154, %v2842
        %v3355 = vadd.f32 %v2155, %v2843
        %v3356 = vadd.f32 %v2156, %v2844
        %v3357 = vadd.f32 %v2157, %v2845
        %v3358 = vadd.f32 %v2158, %v2846
        %v3359 = vadd.f32 %v2159, %v2847
        %v3360 = vadd.f32 %v2160, %v2848
        %v3361 = vadd.f32 %v2161, %v2849
        %v3362 = vadd.f32 %v2162, %v2850
        %v3363 = vadd.f32 %v2163, %v2851
        %v3364 = vadd.f32 %v2164, %v2852
        %v3365 = vadd.f32 %v2165, %v2853
        %v3366 = vadd.f32 %v2166, %v2854
        %v3367 = vadd.f32 %v2167, %v2855
        %v3368 = vadd.f32 %v2168, %v2856
        %v3369 = vadd.f32 %v2169, %v2857
        %v3370 = vadd.f32 %v2170, %v2858
        %v3371 = vadd.f32 %v2171, %v2859
        %v3372 = vadd.f32 %v2172, %v2860
        %v3373 = vadd.f32 %v2173, %v2861
        %v3374 = vadd.f32 %v2174, %v2862
        %v3375 = vadd.f32 %v2175, %v2863
        %v3376 = vadd.f32 %v2176, %v2864
        %v3377 = vadd.f32 %v2177, %v2865
        %v3378 = vadd.f32 %v2178, %v2866
        %v3379 = vadd.f32 %v2179, %v2867
        %v3380 = vadd.f32 %v2180, %v2868
        %v3381 = vadd.f32 %v2181, %v2869
        %v3382 = vadd.f32 %v2182, %v2870
        %v3383 = vadd.f32 %v2183, %v2871
        %v3384 = vadd.f32 %v2184, %v2872
        %v3385 = vadd.f32 %v2185, %v2873
        %v3386 = vadd.f32 %v2186, %v2874
        %v3387 = vadd.f32 %v2187, %v2875
        %v3388 = vadd.f32 %v2188, %v2876
        %v3389 = vadd.f32 %v2189, %v2877
        %v3390 = vadd.f32 %v2190, %v2878
        %v3391 = vadd.f32 %v2191, %v2879
        %v3392 = vadd.f32 %v2192, %v2880
        %v3393 = vadd.f32 %v2193, %v2881
        %v3394 = vadd.f32 %v2194, %v2882
        %v3395 = vadd.f32 %v2195, %v2883
        %v3396 = vadd.f32 %v2196, %v2884
        %v3397 = vadd.f32 %v2197, %v2885
        %v3398 = vadd.f32 %v2198, %v2886
        %v3399 = vadd.f32 %v2199, %v2887
        %v3400 = vadd.f32 %v2200, %v2888
        %v3401 = vadd.f32 %v2201, %v2889
        %v3402 = vadd.f32 %v2202, %v2890
        %v3403 = vadd.f32 %v2203, %v2891
        %v3404 = vadd.f32 %v2204, %v2892
        %v3405 = vadd.f32 %v2205, %v2893
        %v3406 = vadd.f32 %v2206, %v2894
        %v3407 = vadd.f32 %v2207, %v2895
        %v3408 = vadd.f32 %v2208, %v2896
        %v3409 = vadd.f32 %v2209, %v2897
        %v3410 = vadd.f32 %v2210, %v2898
        %v3411 = vadd.f32 %v2211, %v2899
        %v3412 = vadd.f32 %v2212, %v2900
        %v3413 = vadd.f32 %v2213, %v2901
        %v3414 = vadd.f32 %v2214, %v2902
        %v3415 = vadd.f32 %v2215, %v2903
        %v3416 = vadd.f32 %v2216, %v2904
        %v3417 = vadd.f32 %v2217, %v2905
        %v3418 = vadd.f32 %v2218, %v2906
        %v3419 = vadd.f32 %v2219, %v2907
        %v3420 = vadd.f32 %v2220, %v2908
        %v3421 = vadd.f32 %v2221, %v2909
        %v3422 = vadd.f32 %v2222, %v2910
        %v3423 = vadd.f32 %v2223, %v2911
        %v3424 = vadd.f32 %v2224, %v2912
        %v3425 = vadd.f32 %v2225, %v2913
        %v3426 = vadd.f32 %v2226, %v2914
        %v3427 = vadd.f32 %v2227, %v2915
        %v3428 = vadd.f32 %v2228, %v2916
        %v3429 = vadd.f32 %v2229, %v2917
        %v3430 = vadd.f32 %v2230, %v2918
        %v3431 = vadd.f32 %v2231, %v2919
        %v3432 = vadd.f32 %v2232, %v2920
        %v3433 = vadd.f32 %v2233, %v2921
        %v3434 = vadd.f32 %v2234, %v2922
        %v3435 = vadd.f32 %v2235, %v2923
        %v3436 = vadd.f32 %v2236, %v2924
        %v3437 = vadd.f32 %v2237, %v2925
        %v3438 = vadd.f32 %v2238, %v2926
        %v3439 = vadd.f32 %v2239, %v2927
        %v3440 = vadd.f32 %v2240, %v2928
        %v3441 = vadd.f32 %v2241, %v2929
        %v3442 = vadd.f32 %v2242, %v2930
        %v3443 = vadd.f32 %v2243, %v2931
        %v3444 = vadd.f32 %v2244, %v2932
        %v3445 = vadd.f32 %v2245, %v2933
        %v3446 = vadd.f32 %v2246, %v2934
        %v3447 = vadd.f32 %v2247, %v2935
        %v3448 = vadd.f32 %v2248, %v2936
        %v3449 = vadd.f32 %v2249, %v2937
        %v3450 = vadd.f32 %v2250, %v2938
        %v3451 = vadd.f32 %v2251, %v2939
        %v3452 = vadd.f32 %v2252, %v2940
        %v3453 = vadd.f32 %v2253, %v2941
        %v3454 = vadd.f32 %v2254, %v2942
        %v3455 = vadd.f32 %v2255, %v2943
        %v3456 = vadd.f32 %v2256, %v2944
        %v3457 = vadd.f32 %v2257, %v2945
        %v3458 = vadd.f32 %v2258, %v2946
        %v3459 = vadd.f32 %v2259, %v2947
        %v3460 = vadd.f32 %v2260, %v2948
        %v3461 = vadd.f32 %v2261, %v2949
        %v3462 = vadd.f32 %v2262, %v2950
        %v3463 = vadd.f32 %v2263, %v2951
        %v3464 = vadd.f32 %v2264, %v2952
        %v3465 = vadd.f32 %v2265, %v2953
        %v3466 = vadd.f32 %v2266, %v2954
        %v3467 = vadd.f32 %v2267, %v2955
        %v3468 = vadd.f32 %v2268, %v2956
        %v3469 = vadd.f32 %v2269, %v2957
        %v3470 = vadd.f32 %v2270, %v2958
        %v3471 = vadd.f32 %v2271, %v2959
        %v3472 = vadd.f32 %v2272, %v2960
        %v3473 = vadd.f32 %v2273, %v2961
        %v3474 = vadd.f32 %v2274, %v2962
        %v3475 = vadd.f32 %v2275, %v2963
        %v3476 = vadd.f32 %v2276, %v2964
        %v3477 = vadd.f32 %v2277, %v2965
        %v3478 = vadd.f32 %v2278, %v2966
        %v3479 = vadd.f32 %v2279, %v2967
        %v3480 = vadd.f32 %v2280, %v2968
        %v3481 = vadd.f32 %v2281, %v2969
        %v3482 = vadd.f32 %v2282, %v2970
        %v3483 = vadd.f32 %v2283, %v2971
        %v3484 = vadd.f32 %v2284, %v2972
        %v3485 = vadd.f32 %v2285, %v2973
        %v3486 = vadd.f32 %v2286, %v2974
        %v3487 = vadd.f32 %v2287, %v2975
        %v3488 = vadd.f32 %v2288, %v2976
        %v3489 = vadd.f32 %v2289, %v2977
        %v3490 = vadd.f32 %v2290, %v2978
        %v3491 = vadd.f32 %v2291, %v2979
        %v3492 = vadd.f32 %v2292, %v2980
        %v3493 = vadd.f32 %v2293, %v2981
        %v3494 = vadd.f32 %v2294, %v2982
        %v3495 = vadd.f32 %v2295, %v2983
        %v3496 = vadd.f32 %v2296, %v2984
        %v3497 = vadd.f32 %v2297, %v2985
        %v3498 = vadd.f32 %v2298, %v2986
        %v3499 = vadd.f32 %v2299, %v2987
        %v3500 = vadd.f32 %v2300, %v2988
        %v3501 = vadd.f32 %v2301, %v2989
        %v3502 = vadd.f32 %v2302, %v2990
        %v3503 = vadd.f32 %v2303, %v2991
        %v3504 = vadd.f32 %v2304, %v2992
        %v3505 = vadd.f32 %v2305, %v2993
        %v3506 = vadd.f32 %v2306, %v2994
        %v3507 = vadd.f32 %v2307, %v2995
        %v3508 = vadd.f32 %v2308, %v2996
        %v3509 = vadd.f32 %v2309, %v2997
        %v3510 = vadd.f32 %v2310, %v2998
        %v3511 = vadd.f32 %v2311, %v2999
        %v3512 = vadd.f32 %v2312, %v3000
        %v3513 = vadd.f32 %v2313, %v3001
        %v3514 = vadd.f32 %v2314, %v3002
        %v3515 = vadd.f32 %v2315, %v3003
        %v3516 = vadd.f32 %v2316, %v3004
        %v3517 = vadd.f32 %v2317, %v3005
        %v3518 = vadd.f32 %v2318, %v3006
        %v3519 = vadd.f32 %v2319, %v3007
        %v3520 = vadd.f32 %v2320, %v3008
        %v3521 = vadd.f32 %v2321, %v3009
        %v3522 = vadd.f32 %v2322, %v3010
        %v3523 = vadd.f32 %v2323, %v3011
        %v3524 = vadd.f32 %v2324, %v3012
        %v3525 = vadd.f32 %v2325, %v3013
        %v3526 = vadd.f32 %v2326, %v3014
        %v3527 = vadd.f32 %v2327, %v3015
        %v3528 = vadd.f32 %v2328, %v3016
        %v3529 = vadd.f32 %v2329, %v3017
        %v3530 = vadd.f32 %v2330, %v3018
        %v3531 = vadd.f32 %v2331, %v3019
        %v3532 = vadd.f32 %v2332, %v3020
        %v3533 = vadd.f32 %v2333, %v3021
        %v3534 = vadd.f32 %v2334, %v3022
        %v3535 = vadd.f32 %v2335, %v3023
        %v3536 = vadd.f32 %v2336, %v3024
        %v3537 = vadd.f32 %v2337, %v3025
        %v3538 = vadd.f32 %v2338, %v3026
        %v3539 = vadd.f32 %v2339, %v3027
        %v3540 = vadd.f32 %v2340, %v3028
        %v3541 = vadd.f32 %v2341, %v3029
        %v3542 = vadd.f32 %v2342, %v3030
        %v3543 = vadd.f32 %v2343, %v3031
        %v3544 = vadd.f32 %v2344, %v3032
        %v3545 = vadd.f32 %v2345, %v3033
        %v3546 = vadd.f32 %v2346, %v3034
        %v3547 = vadd.f32 %v2347, %v3035
        %v3548 = vadd.f32 %v2348, %v3036
        %v3549 = vadd.f32 %v2349, %v3037
        %v3550 = vadd.f32 %v2350, %v3038
        %v3551 = vadd.f32 %v2351, %v3039
        %v3552 = vadd.f32 %v2352, %v3040
        %v3553 = vadd.f32 %v2353, %v3041
        %v3554 = vadd.f32 %v2354, %v3042
        %v3555 = vadd.f32 %v2355, %v3043
        %v3556 = vadd.f32 %v2356, %v3044
        %v3557 = vadd.f32 %v2357, %v3045
        %v3558 = vadd.f32 %v2358, %v3046
        %v3559 = vadd.f32 %v2359, %v3047
        %v3560 = vadd.f32 %v2360, %v3048
        %v3561 = vadd.f32 %v2361, %v3049
        %v3562 = vadd.f32 %v2362, %v3050
        %v3563 = vadd.f32 %v2363, %v3051
        %v3564 = vadd.f32 %v2364, %v3052
        %v3565 = vadd.f32 %v2365, %v3053
        %v3566 = vadd.f32 %v2366, %v3054
        %v3567 = vadd.f32 %v2367, %v3055
        %v3568 = vadd.f32 %v2368, %v3056
        %v3569 = vadd.f32 %v2369, %v3057
        %v3570 = vadd.f32 %v2370, %v3058
        %v3571 = vadd.f32 %v2371, %v3059
        %v3572 = vadd.f32 %v2372, %v3060
        %v3573 = vadd.f32 %v2373, %v3061
        %v3574 = vadd.f32 %v2374, %v3062
        %v3575 = vadd.f32 %v2375, %v3063
        %v3576 = vadd.f32 %v2376, %v3064
        %v3577 = vadd.f32 %v2377, %v3065
        %v3578 = vadd.f32 %v2378, %v3066
        %v3579 = vadd.f32 %v2379, %v3067
        %v3580 = vadd.f32 %v2380, %v3068
        %v3581 = vadd.f32 %v2381, %v3069
        %v3582 = vadd.f32 %v2382, %v3070
        %v3583 = vadd.f32 %v2383, %v3071
        %v3584 = vadd.f32 %v2384, %v3072
        %v3585 = vadd.f32 %v2385, %v3073
        %v3586 = vadd.f32 %v2386, %v3074
        %v3587 = vadd.f32 %v2387, %v3075
        %v3588 = vadd.f32 %v2388, %v3076
        %v3589 = vadd.f32 %v2389, %v3077
        %v3590 = vadd.f32 %v2390, %v3078
        %v3591 = vadd.f32 %v2391, %v3079
        %v3592 = vadd.f32 %v2392, %v3080
        %v3593 = vadd.f32 %v2393, %v3081
        %v3594 = vadd.f32 %v2394, %v3082
        %v3595 = vadd.f32 %v2395, %v3083
        %v3596 = vadd.f32 %v2396, %v3084
        %v3597 = vadd.f32 %v2397, %v3085
        %v3598 = vadd.f32 %v2398, %v3086
        %v3599 = vadd.f32 %v2399, %v3087
        %v3600 = vadd.f32 %v2400, %v3088
        %v3601 = vadd.f32 %v2401, %v3089
        %v3602 = vadd.f32 %v2402, %v3090
        %v3603 = vadd.f32 %v2403, %v3091
        %v3604 = vadd.f32 %v2404, %v3092
        %v3605 = vadd.f32 %v2405, %v3093
        %v3606 = vadd.f32 %v2406, %v3094
        %v3607 = vadd.f32 %v2407, %v3095
        %v3608 = vadd.f32 %v2408, %v3096
        %v3609 = vadd.f32 %v2409, %v3097
        %v3610 = vadd.f32 %v2410, %v3098
        %v3611 = vadd.f32 %v2411, %v3099
        %v3612 = vadd.f32 %v2412, %v3100
        %v3613 = vadd.f32 %v2413, %v3101
        %v3614 = vadd.f32 %v2414, %v3102
        %v3615 = vadd.f32 %v2415, %v3103
        %v3616 = vadd.f32 %v2416, %v3104
        %v3617 = vadd.f32 %v2417, %v3105
        %v3618 = vadd.f32 %v2418, %v3106
        %v3619 = vadd.f32 %v2419, %v3107
        %v3620 = vadd.f32 %v2420, %v3108
        %v3621 = vadd.f32 %v2421, %v3109
        %v3622 = vadd.f32 %v2422, %v3110
        %v3623 = vadd.f32 %v2423, %v3111
        %v3624 = vadd.f32 %v2424, %v3112
        %v3625 = vadd.f32 %v2425, %v3113
        %v3626 = vadd.f32 %v2426, %v3114
        %v3627 = vadd.f32 %v2427, %v3115
        %v3628 = vadd.f32 %v2428, %v3116
        %v3629 = vadd.f32 %v2429, %v3117
        %v3630 = vadd.f32 %v2430, %v3118
        %v3631 = vadd.f32 %v2431, %v3119
        %v3632 = vadd.f32 %v2432, %v3120
        %v3633 = vadd.f32 %v2433, %v3121
        %v3634 = vadd.f32 %v2434, %v3122
        %v3635 = vadd.f32 %v2435, %v3123
        %v3636 = vadd.f32 %v2436, %v3124
        %v3637 = vadd.f32 %v2437, %v3125
        %v3638 = vadd.f32 %v2438, %v3126
        %v3639 = vadd.f32 %v2439, %v3127
        %v3640 = vadd.f32 %v2440, %v3128
        %v3641 = vadd.f32 %v2441, %v3129
        %v3642 = vadd.f32 %v2442, %v3130
        %v3643 = vadd.f32 %v2443, %v3131
        %v3644 = vadd.f32 %v2444, %v3132
        %v3645 = vadd.f32 %v2445, %v3133
        %v3646 = vadd.f32 %v2446, %v3134
        %v3647 = vadd.f32 %v2447, %v3135
        %v3648 = vadd.f32 %v2448, %v3136
        %v3649 = vadd.f32 %v2449, %v3137
        %v3650 = vadd.f32 %v2450, %v3138
        %v3651 = vadd.f32 %v2451, %v3139
        %v3652 = vadd.f32 %v2452, %v3140
        %v3653 = vadd.f32 %v2453, %v3141
        %v3654 = vadd.f32 %v2454, %v3142
        %v3655 = vadd.f32 %v2455, %v3143
        %v3656 = vadd.f32 %v2456, %v3144
        %v3657 = vadd.f32 %v2457, %v3145
        %v3658 = vadd.f32 %v2458, %v3146
        %v3659 = vadd.f32 %v2459, %v3147
        %v3660 = vadd.f32 %v2460, %v3148
        %v3661 = vadd.f32 %v2461, %v3149
        %v3662 = vmax.f32 %v3150, 0.0
        %v3663 = vmax.f32 %v3151, 0.0
        %v3664 = vmax.f32 %v3152, 0.0
        %v3665 = vmax.f32 %v3153, 0.0
        %v3666 = vmax.f32 %v3154, 0.0
        %v3667 = vmax.f32 %v3155, 0.0
        %v3668 = vmax.f32 %v3156, 0.0
        %v3669 = vmax.f32 %v3157, 0.0
        %v3670 = vmax.f32 %v3158, 0.0
        %v3671 = vmax.f32 %v3159, 0.0
        %v3672 = vmax.f32 %v3160, 0.0
        %v3673 = vmax.f32 %v3161, 0.0
        %v3674 = vmax.f32 %v3162, 0.0
        %v3675 = vmax.f32 %v3163, 0.0
        %v3676 = vmax.f32 %v3164, 0.0
        %v3677 = vmax.f32 %v3165, 0.0
        %v3678 = vmax.f32 %v3166, 0.0
        %v3679 = vmax.f32 %v3167, 0.0
        %v3680 = vmax.f32 %v3168, 0.0
        %v3681 = vmax.f32 %v3169, 0.0
        %v3682 = vmax.f32 %v3170, 0.0
        %v3683 = vmax.f32 %v3171, 0.0
        %v3684 = vmax.f32 %v3172, 0.0
        %v3685 = vmax.f32 %v3173, 0.0
        %v3686 = vmax.f32 %v3174, 0.0
        %v3687 = vmax.f32 %v3175, 0.0
        %v3688 = vmax.f32 %v3176, 0.0
        %v3689 = vmax.f32 %v3177, 0.0
        %v3690 = vmax.f32 %v3178, 0.0
        %v3691 = vmax.f32 %v3179, 0.0
        %v3692 = vmax.f32 %v3180, 0.0
        %v3693 = vmax.f32 %v3181, 0.0
        %v3694 = vmax.f32 %v3182, 0.0
        %v3695 = vmax.f32 %v3183, 0.0
        %v3696 = vmax.f32 %v3184, 0.0
        %v3697 = vmax.f32 %v3185, 0.0
        %v3698 = vmax.f32 %v3186, 0.0
        %v3699 = vmax.f32 %v3187, 0.0
        %v3700 = vmax.f32 %v3188, 0.0
        %v3701 = vmax.f32 %v3189, 0.0
        %v3702 = vmax.f32 %v3190, 0.0
        %v3703 = vmax.f32 %v3191, 0.0
        %v3704 = vmax.f32 %v3192, 0.0
        %v3705 = vmax.f32 %v3193, 0.0
        %v3706 = vmax.f32 %v3194, 0.0
        %v3707 = vmax.f32 %v3195, 0.0
        %v3708 = vmax.f32 %v3196, 0.0
        %v3709 = vmax.f32 %v3197, 0.0
        %v3710 = vmax.f32 %v3198, 0.0
        %v3711 = vmax.f32 %v3199, 0.0
        %v3712 = vmax.f32 %v3200, 0.0
        %v3713 = vmax.f32 %v3201, 0.0
        %v3714 = vmax.f32 %v3202, 0.0
        %v3715 = vmax.f32 %v3203, 0.0
        %v3716 = vmax.f32 %v3204, 0.0
        %v3717 = vmax.f32 %v3205, 0.0
        %v3718 = vmax.f32 %v3206, 0.0
        %v3719 = vmax.f32 %v3207, 0.0
        %v3720 = vmax.f32 %v3208, 0.0
        %v3721 = vmax.f32 %v3209, 0.0
        %v3722 = vmax.f32 %v3210, 0.0
        %v3723 = vmax.f32 %v3211, 0.0
        %v3724 = vmax.f32 %v3212, 0.0
        %v3725 = vmax.f32 %v3213, 0.0
        %v3726 = vmax.f32 %v3214, 0.0
        %v3727 = vmax.f32 %v3215, 0.0
        %v3728 = vmax.f32 %v3216, 0.0
        %v3729 = vmax.f32 %v3217, 0.0
        %v3730 = vmax.f32 %v3218, 0.0
        %v3731 = vmax.f32 %v3219, 0.0
        %v3732 = vmax.f32 %v3220, 0.0
        %v3733 = vmax.f32 %v3221, 0.0
        %v3734 = vmax.f32 %v3222, 0.0
        %v3735 = vmax.f32 %v3223, 0.0
        %v3736 = vmax.f32 %v3224, 0.0
        %v3737 = vmax.f32 %v3225, 0.0
        %v3738 = vmax.f32 %v3226, 0.0
        %v3739 = vmax.f32 %v3227, 0.0
        %v3740 = vmax.f32 %v3228, 0.0
        %v3741 = vmax.f32 %v3229, 0.0
        %v3742 = vmax.f32 %v3230, 0.0
        %v3743 = vmax.f32 %v3231, 0.0
        %v3744 = vmax.f32 %v3232, 0.0
        %v3745 = vmax.f32 %v3233, 0.0
        %v3746 = vmax.f32 %v3234, 0.0
        %v3747 = vmax.f32 %v3235, 0.0
        %v3748 = vmax.f32 %v3236, 0.0
        %v3749 = vmax.f32 %v3237, 0.0
        %v3750 = vmax.f32 %v3238, 0.0
        %v3751 = vmax.f32 %v3239, 0.0
        %v3752 = vmax.f32 %v3240, 0.0
        %v3753 = vmax.f32 %v3241, 0.0
        %v3754 = vmax.f32 %v3242, 0.0
        %v3755 = vmax.f32 %v3243, 0.0
        %v3756 = vmax.f32 %v3244, 0.0
        %v3757 = vmax.f32 %v3245, 0.0
        %v3758 = vmax.f32 %v3246, 0.0
        %v3759 = vmax.f32 %v3247, 0.0
        %v3760 = vmax.f32 %v3248, 0.0
        %v3761 = vmax.f32 %v3249, 0.0
        %v3762 = vmax.f32 %v3250, 0.0
        %v3763 = vmax.f32 %v3251, 0.0
        %v3764 = vmax.f32 %v3252, 0.0
        %v3765 = vmax.f32 %v3253, 0.0
        %v3766 = vmax.f32 %v3254, 0.0
        %v3767 = vmax.f32 %v3255, 0.0
        %v3768 = vmax.f32 %v3256, 0.0
        %v3769 = vmax.f32 %v3257, 0.0
        %v3770 = vmax.f32 %v3258, 0.0
        %v3771 = vmax.f32 %v3259, 0.0
        %v3772 = vmax.f32 %v3260, 0.0
        %v3773 = vmax.f32 %v3261, 0.0
        %v3774 = vmax.f32 %v3262, 0.0
        %v3775 = vmax.f32 %v3263, 0.0
        %v3776 = vmax.f32 %v3264, 0.0
        %v3777 = vmax.f32 %v3265, 0.0
        %v3778 = vmax.f32 %v3266, 0.0
        %v3779 = vmax.f32 %v3267, 0.0
        %v3780 = vmax.f32 %v3268, 0.0
        %v3781 = vmax.f32 %v3269, 0.0
        %v3782 = vmax.f32 %v3270, 0.0
        %v3783 = vmax.f32 %v3271, 0.0
        %v3784 = vmax.f32 %v3272, 0.0
        %v3785 = vmax.f32 %v3273, 0.0
        %v3786 = vmax.f32 %v3274, 0.0
        %v3787 = vmax.f32 %v3275, 0.0
        %v3788 = vmax.f32 %v3276, 0.0
        %v3789 = vmax.f32 %v3277, 0.0
        %v3790 = vmax.f32 %v3278, 0.0
        %v3791 = vmax.f32 %v3279, 0.0
        %v3792 = vmax.f32 %v3280, 0.0
        %v3793 = vmax.f32 %v3281, 0.0
        %v3794 = vmax.f32 %v3282, 0.0
        %v3795 = vmax.f32 %v3283, 0.0
        %v3796 = vmax.f32 %v3284, 0.0
        %v3797 = vmax.f32 %v3285, 0.0
        %v3798 = vmax.f32 %v3286, 0.0
        %v3799 = vmax.f32 %v3287, 0.0
        %v3800 = vmax.f32 %v3288, 0.0
        %v3801 = vmax.f32 %v3289, 0.0
        %v3802 = vmax.f32 %v3290, 0.0
        %v3803 = vmax.f32 %v3291, 0.0
        %v3804 = vmax.f32 %v3292, 0.0
        %v3805 = vmax.f32 %v3293, 0.0
        %v3806 = vmax.f32 %v3294, 0.0
        %v3807 = vmax.f32 %v3295, 0.0
        %v3808 = vmax.f32 %v3296, 0.0
        %v3809 = vmax.f32 %v3297, 0.0
        %v3810 = vmax.f32 %v3298, 0.0
        %v3811 = vmax.f32 %v3299, 0.0
        %v3812 = vmax.f32 %v3300, 0.0
        %v3813 = vmax.f32 %v3301, 0.0
        %v3814 = vmax.f32 %v3302, 0.0
        %v3815 = vmax.f32 %v3303, 0.0
        %v3816 = vmax.f32 %v3304, 0.0
        %v3817 = vmax.f32 %v3305, 0.0
        %v3818 = vmax.f32 %v3306, 0.0
        %v3819 = vmax.f32 %v3307, 0.0
        %v3820 = vmax.f32 %v3308, 0.0
        %v3821 = vmax.f32 %v3309, 0.0
        %v3822 = vmax.f32 %v3310, 0.0
        %v3823 = vmax.f32 %v3311, 0.0
        %v3824 = vmax.f32 %v3312, 0.0
        %v3825 = vmax.f32 %v3313, 0.0
        %v3826 = vmax.f32 %v3314, 0.0
        %v3827 = vmax.f32 %v3315, 0.0
        %v3828 = vmax.f32 %v3316, 0.0
        %v3829 = vmax.f32 %v3317, 0.0
        %v3830 = vmax.f32 %v3318, 0.0
        %v3831 = vmax.f32 %v3319, 0.0
        %v3832 = vmax.f32 %v3320, 0.0
        %v3833 = vmax.f32 %v3321, 0.0
        %v3834 = vmax.f32 %v3322, 0.0
        %v3835 = vmax.f32 %v3323, 0.0
        %v3836 = vmax.f32 %v3324, 0.0
        %v3837 = vmax.f32 %v3325, 0.0
        %v3838 = vmax.f32 %v3326, 0.0
        %v3839 = vmax.f32 %v3327, 0.0
        %v3840 = vmax.f32 %v3328, 0.0
        %v3841 = vmax.f32 %v3329, 0.0
        %v3842 = vmax.f32 %v3330, 0.0
        %v3843 = vmax.f32 %v3331, 0.0
        %v3844 = vmax.f32 %v3332, 0.0
        %v3845 = vmax.f32 %v3333, 0.0
        %v3846 = vmax.f32 %v3334, 0.0
        %v3847 = vmax.f32 %v3335, 0.0
        %v3848 = vmax.f32 %v3336, 0.0
        %v3849 = vmax.f32 %v3337, 0.0
        %v3850 = vmax.f32 %v3338, 0.0
        %v3851 = vmax.f32 %v3339, 0.0
        %v3852 = vmax.f32 %v3340, 0.0
        %v3853 = vmax.f32 %v3341, 0.0
        %v3854 = vmax.f32 %v3342, 0.0
        %v3855 = vmax.f32 %v3343, 0.0
        %v3856 = vmax.f32 %v3344, 0.0
        %v3857 = vmax.f32 %v3345, 0.0
        %v3858 = vmax.f32 %v3346, 0.0
        %v3859 = vmax.f32 %v3347, 0.0
        %v3860 = vmax.f32 %v3348, 0.0
        %v3861 = vmax.f32 %v3349, 0.0
        %v3862 = vmax.f32 %v3350, 0.0
        %v3863 = vmax.f32 %v3351, 0.0
        %v3864 = vmax.f32 %v3352, 0.0
        %v3865 = vmax.f32 %v3353, 0.0
        %v3866 = vmax.f32 %v3354, 0.0
        %v3867 = vmax.f32 %v3355, 0.0
        %v3868 = vmax.f32 %v3356, 0.0
        %v3869 = vmax.f32 %v3357, 0.0
        %v3870 = vmax.f32 %v3358, 0.0
        %v3871 = vmax.f32 %v3359, 0.0
        %v3872 = vmax.f32 %v3360, 0.0
        %v3873 = vmax.f32 %v3361, 0.0
        %v3874 = vmax.f32 %v3362, 0.0
        %v3875 = vmax.f32 %v3363, 0.0
        %v3876 = vmax.f32 %v3364, 0.0
        %v3877 = vmax.f32 %v3365, 0.0
        %v3878 = vmax.f32 %v3366, 0.0
        %v3879 = vmax.f32 %v3367, 0.0
        %v3880 = vmax.f32 %v3368, 0.0
        %v3881 = vmax.f32 %v3369, 0.0
        %v3882 = vmax.f32 %v3370, 0.0
        %v3883 = vmax.f32 %v3371, 0.0
        %v3884 = vmax.f32 %v3372, 0.0
        %v3885 = vmax.f32 %v3373, 0.0
        %v3886 = vmax.f32 %v3374, 0.0
        %v3887 = vmax.f32 %v3375, 0.0
        %v3888 = vmax.f32 %v3376, 0.0
        %v3889 = vmax.f32 %v3377, 0.0
        %v3890 = vmax.f32 %v3378, 0.0
        %v3891 = vmax.f32 %v3379, 0.0
        %v3892 = vmax.f32 %v3380, 0.0
        %v3893 = vmax.f32 %v3381, 0.0
        %v3894 = vmax.f32 %v3382, 0.0
        %v3895 = vmax.f32 %v3383, 0.0
        %v3896 = vmax.f32 %v3384, 0.0
        %v3897 = vmax.f32 %v3385, 0.0
        %v3898 = vmax.f32 %v3386, 0.0
        %v3899 = vmax.f32 %v3387, 0.0
        %v3900 = vmax.f32 %v3388, 0.0
        %v3901 = vmax.f32 %v3389, 0.0
        %v3902 = vmax.f32 %v3390, 0.0
        %v3903 = vmax.f32 %v3391, 0.0
        %v3904 = vmax.f32 %v3392, 0.0
        %v3905 = vmax.f32 %v3393, 0.0
        %v3906 = vmax.f32 %v3394, 0.0
        %v3907 = vmax.f32 %v3395, 0.0
        %v3908 = vmax.f32 %v3396, 0.0
        %v3909 = vmax.f32 %v3397, 0.0
        %v3910 = vmax.f32 %v3398, 0.0
        %v3911 = vmax.f32 %v3399, 0.0
        %v3912 = vmax.f32 %v3400, 0.0
        %v3913 = vmax.f32 %v3401, 0.0
        %v3914 = vmax.f32 %v3402, 0.0
        %v3915 = vmax.f32 %v3403, 0.0
        %v3916 = vmax.f32 %v3404, 0.0
        %v3917 = vmax.f32 %v3405, 0.0
        %v3918 = vmax.f32 %v3406, 0.0
        %v3919 = vmax.f32 %v3407, 0.0
        %v3920 = vmax.f32 %v3408, 0.0
        %v3921 = vmax.f32 %v3409, 0.0
        %v3922 = vmax.f32 %v3410, 0.0
        %v3923 = vmax.f32 %v3411, 0.0
        %v3924 = vmax.f32 %v3412, 0.0
        %v3925 = vmax.f32 %v3413, 0.0
        %v3926 = vmax.f32 %v3414, 0.0
        %v3927 = vmax.f32 %v3415, 0.0
        %v3928 = vmax.f32 %v3416, 0.0
        %v3929 = vmax.f32 %v3417, 0.0
        %v3930 = vmax.f32 %v3418, 0.0
        %v3931 = vmax.f32 %v3419, 0.0
        %v3932 = vmax.f32 %v3420, 0.0
        %v3933 = vmax.f32 %v3421, 0.0
        %v3934 = vmax.f32 %v3422, 0.0
        %v3935 = vmax.f32 %v3423, 0.0
        %v3936 = vmax.f32 %v3424, 0.0
        %v3937 = vmax.f32 %v3425, 0.0
        %v3938 = vmax.f32 %v3426, 0.0
        %v3939 = vmax.f32 %v3427, 0.0
        %v3940 = vmax.f32 %v3428, 0.0
        %v3941 = vmax.f32 %v3429, 0.0
        %v3942 = vmax.f32 %v3430, 0.0
        %v3943 = vmax.f32 %v3431, 0.0
        %v3944 = vmax.f32 %v3432, 0.0
        %v3945 = vmax.f32 %v3433, 0.0
        %v3946 = vmax.f32 %v3434, 0.0
        %v3947 = vmax.f32 %v3435, 0.0
        %v3948 = vmax.f32 %v3436, 0.0
        %v3949 = vmax.f32 %v3437, 0.0
        %v3950 = vmax.f32 %v3438, 0.0
        %v3951 = vmax.f32 %v3439, 0.0
        %v3952 = vmax.f32 %v3440, 0.0
        %v3953 = vmax.f32 %v3441, 0.0
        %v3954 = vmax.f32 %v3442, 0.0
        %v3955 = vmax.f32 %v3443, 0.0
        %v3956 = vmax.f32 %v3444, 0.0
        %v3957 = vmax.f32 %v3445, 0.0
        %v3958 = vmax.f32 %v3446, 0.0
        %v3959 = vmax.f32 %v3447, 0.0
        %v3960 = vmax.f32 %v3448, 0.0
        %v3961 = vmax.f32 %v3449, 0.0
        %v3962 = vmax.f32 %v3450, 0.0
        %v3963 = vmax.f32 %v3451, 0.0
        %v3964 = vmax.f32 %v3452, 0.0
        %v3965 = vmax.f32 %v3453, 0.0
        %v3966 = vmax.f32 %v3454, 0.0
        %v3967 = vmax.f32 %v3455, 0.0
        %v3968 = vmax.f32 %v3456, 0.0
        %v3969 = vmax.f32 %v3457, 0.0
        %v3970 = vmax.f32 %v3458, 0.0
        %v3971 = vmax.f32 %v3459, 0.0
        %v3972 = vmax.f32 %v3460, 0.0
        %v3973 = vmax.f32 %v3461, 0.0
        %v3974 = vmax.f32 %v3462, 0.0
        %v3975 = vmax.f32 %v3463, 0.0
        %v3976 = vmax.f32 %v3464, 0.0
        %v3977 = vmax.f32 %v3465, 0.0
        %v3978 = vmax.f32 %v3466, 0.0
        %v3979 = vmax.f32 %v3467, 0.0
        %v3980 = vmax.f32 %v3468, 0.0
        %v3981 = vmax.f32 %v3469, 0.0
        %v3982 = vmax.f32 %v3470, 0.0
        %v3983 = vmax.f32 %v3471, 0.0
        %v3984 = vmax.f32 %v3472, 0.0
        %v3985 = vmax.f32 %v3473, 0.0
        %v3986 = vmax.f32 %v3474, 0.0
        %v3987 = vmax.f32 %v3475, 0.0
        %v3988 = vmax.f32 %v3476, 0.0
        %v3989 = vmax.f32 %v3477, 0.0
        %v3990 = vmax.f32 %v3478, 0.0
        %v3991 = vmax.f32 %v3479, 0.0
        %v3992 = vmax.f32 %v3480, 0.0
        %v3993 = vmax.f32 %v3481, 0.0
        %v3994 = vmax.f32 %v3482, 0.0
        %v3995 = vmax.f32 %v3483, 0.0
        %v3996 = vmax.f32 %v3484, 0.0
        %v3997 = vmax.f32 %v3485, 0.0
        %v3998 = vmax.f32 %v3486, 0.0
        %v3999 = vmax.f32 %v3487, 0.0
        %v4000 = vmax.f32 %v3488, 0.0
        %v4001 = vmax.f32 %v3489, 0.0
        %v4002 = vmax.f32 %v3490, 0.0
        %v4003 = vmax.f32 %v3491, 0.0
        %v4004 = vmax.f32 %v3492, 0.0
        %v4005 = vmax.f32 %v3493, 0.0
        %v4006 = vmax.f32 %v3494, 0.0
        %v4007 = vmax.f32 %v3495, 0.0
        %v4008 = vmax.f32 %v3496, 0.0
        %v4009 = vmax.f32 %v3497, 0.0
        %v4010 = vmax.f32 %v3498, 0.0
        %v4011 = vmax.f32 %v3499, 0.0
        %v4012 = vmax.f32 %v3500, 0.0
        %v4013 = vmax.f32 %v3501, 0.0
        %v4014 = vmax.f32 %v3502, 0.0
        %v4015 = vmax.f32 %v3503, 0.0
        %v4016 = vmax.f32 %v3504, 0.0
        %v4017 = vmax.f32 %v3505, 0.0
        %v4018 = vmax.f32 %v3506, 0.0
        %v4019 = vmax.f32 %v3507, 0.0
        %v4020 = vmax.f32 %v3508, 0.0
        %v4021 = vmax.f32 %v3509, 0.0
        %v4022 = vmax.f32 %v3510, 0.0
        %v4023 = vmax.f32 %v3511, 0.0
        %v4024 = vmax.f32 %v3512, 0.0
        %v4025 = vmax.f32 %v3513, 0.0
        %v4026 = vmax.f32 %v3514, 0.0
        %v4027 = vmax.f32 %v3515, 0.0
        %v4028 = vmax.f32 %v3516, 0.0
        %v4029 = vmax.f32 %v3517, 0.0
        %v4030 = vmax.f32 %v3518, 0.0
        %v4031 = vmax.f32 %v3519, 0.0
        %v4032 = vmax.f32 %v3520, 0.0
        %v4033 = vmax.f32 %v3521, 0.0
        %v4034 = vmax.f32 %v3522, 0.0
        %v4035 = vmax.f32 %v3523, 0.0
        %v4036 = vmax.f32 %v3524, 0.0
        %v4037 = vmax.f32 %v3525, 0.0
        %v4038 = vmax.f32 %v3526, 0.0
        %v4039 = vmax.f32 %v3527, 0.0
        %v4040 = vmax.f32 %v3528, 0.0
        %v4041 = vmax.f32 %v3529, 0.0
        %v4042 = vmax.f32 %v3530, 0.0
        %v4043 = vmax.f32 %v3531, 0.0
        %v4044 = vmax.f32 %v3532, 0.0
        %v4045 = vmax.f32 %v3533, 0.0
        %v4046 = vmax.f32 %v3534, 0.0
        %v4047 = vmax.f32 %v3535, 0.0
        %v4048 = vmax.f32 %v3536, 0.0
        %v4049 = vmax.f32 %v3537, 0.0
        %v4050 = vmax.f32 %v3538, 0.0
        %v4051 = vmax.f32 %v3539, 0.0
        %v4052 = vmax.f32 %v3540, 0.0
        %v4053 = vmax.f32 %v3541, 0.0
        %v4054 = vmax.f32 %v3542, 0.0
        %v4055 = vmax.f32 %v3543, 0.0
        %v4056 = vmax.f32 %v3544, 0.0
        %v4057 = vmax.f32 %v3545, 0.0
        %v4058 = vmax.f32 %v3546, 0.0
        %v4059 = vmax.f32 %v3547, 0.0
        %v4060 = vmax.f32 %v3548, 0.0
        %v4061 = vmax.f32 %v3549, 0.0
        %v4062 = vmax.f32 %v3550, 0.0
        %v4063 = vmax.f32 %v3551, 0.0
        %v4064 = vmax.f32 %v3552, 0.0
        %v4065 = vmax.f32 %v3553, 0.0
        %v4066 = vmax.f32 %v3554, 0.0
        %v4067 = vmax.f32 %v3555, 0.0
        %v4068 = vmax.f32 %v3556, 0.0
        %v4069 = vmax.f32 %v3557, 0.0
        %v4070 = vmax.f32 %v3558, 0.0
        %v4071 = vmax.f32 %v3559, 0.0
        %v4072 = vmax.f32 %v3560, 0.0
        %v4073 = vmax.f32 %v3561, 0.0
        %v4074 = vmax.f32 %v3562, 0.0
        %v4075 = vmax.f32 %v3563, 0.0
        %v4076 = vmax.f32 %v3564, 0.0
        %v4077 = vmax.f32 %v3565, 0.0
        %v4078 = vmax.f32 %v3566, 0.0
        %v4079 = vmax.f32 %v3567, 0.0
        %v4080 = vmax.f32 %v3568, 0.0
        %v4081 = vmax.f32 %v3569, 0.0
        %v4082 = vmax.f32 %v3570, 0.0
        %v4083 = vmax.f32 %v3571, 0.0
        %v4084 = vmax.f32 %v3572, 0.0
        %v4085 = vmax.f32 %v3573, 0.0
        %v4086 = vmax.f32 %v3574, 0.0
        %v4087 = vmax.f32 %v3575, 0.0
        %v4088 = vmax.f32 %v3576, 0.0
        %v4089 = vmax.f32 %v3577, 0.0
        %v4090 = vmax.f32 %v3578, 0.0
        %v4091 = vmax.f32 %v3579, 0.0
        %v4092 = vmax.f32 %v3580, 0.0
        %v4093 = vmax.f32 %v3581, 0.0
        %v4094 = vmax.f32 %v3582, 0.0
        %v4095 = vmax.f32 %v3583, 0.0
        %v4096 = vmax.f32 %v3584, 0.0
        %v4097 = vmax.f32 %v3585, 0.0
        %v4098 = vmax.f32 %v3586, 0.0
        %v4099 = vmax.f32 %v3587, 0.0
        %v4100 = vmax.f32 %v3588, 0.0
        %v4101 = vmax.f32 %v3589, 0.0
        %v4102 = vmax.f32 %v3590, 0.0
        %v4103 = vmax.f32 %v3591, 0.0
        %v4104 = vmax.f32 %v3592, 0.0
        %v4105 = vmax.f32 %v3593, 0.0
        %v4106 = vmax.f32 %v3594, 0.0
        %v4107 = vmax.f32 %v3595, 0.0
        %v4108 = vmax.f32 %v3596, 0.0
        %v4109 = vmax.f32 %v3597, 0.0
        %v4110 = vmax.f32 %v3598, 0.0
        %v4111 = vmax.f32 %v3599, 0.0
        %v4112 = vmax.f32 %v3600, 0.0
        %v4113 = vmax.f32 %v3601, 0.0
        %v4114 = vmax.f32 %v3602, 0.0
        %v4115 = vmax.f32 %v3603, 0.0
        %v4116 = vmax.f32 %v3604, 0.0
        %v4117 = vmax.f32 %v3605, 0.0
        %v4118 = vmax.f32 %v3606, 0.0
        %v4119 = vmax.f32 %v3607, 0.0
        %v4120 = vmax.f32 %v3608, 0.0
        %v4121 = vmax.f32 %v3609, 0.0
        %v4122 = vmax.f32 %v3610, 0.0
        %v4123 = vmax.f32 %v3611, 0.0
        %v4124 = vmax.f32 %v3612, 0.0
        %v4125 = vmax.f32 %v3613, 0.0
        %v4126 = vmax.f32 %v3614, 0.0
        %v4127 = vmax.f32 %v3615, 0.0
        %v4128 = vmax.f32 %v3616, 0.0
        %v4129 = vmax.f32 %v3617, 0.0
        %v4130 = vmax.f32 %v3618, 0.0
        %v4131 = vmax.f32 %v3619, 0.0
        %v4132 = vmax.f32 %v3620, 0.0
        %v4133 = vmax.f32 %v3621, 0.0
        %v4134 = vmax.f32 %v3622, 0.0
        %v4135 = vmax.f32 %v3623, 0.0
        %v4136 = vmax.f32 %v3624, 0.0
        %v4137 = vmax.f32 %v3625, 0.0
        %v4138 = vmax.f32 %v3626, 0.0
        %v4139 = vmax.f32 %v3627, 0.0
        %v4140 = vmax.f32 %v3628, 0.0
        %v4141 = vmax.f32 %v3629, 0.0
        %v4142 = vmax.f32 %v3630, 0.0
        %v4143 = vmax.f32 %v3631, 0.0
        %v4144 = vmax.f32 %v3632, 0.0
        %v4145 = vmax.f32 %v3633, 0.0
        %v4146 = vmax.f32 %v3634, 0.0
        %v4147 = vmax.f32 %v3635, 0.0
        %v4148 = vmax.f32 %v3636, 0.0
        %v4149 = vmax.f32 %v3637, 0.0
        %v4150 = vmax.f32 %v3638, 0.0
        %v4151 = vmax.f32 %v3639, 0.0
        %v4152 = vmax.f32 %v3640, 0.0
        %v4153 = vmax.f32 %v3641, 0.0
        %v4154 = vmax.f32 %v3642, 0.0
        %v4155 = vmax.f32 %v3643, 0.0
        %v4156 = vmax.f32 %v3644, 0.0
        %v4157 = vmax.f32 %v3645, 0.0
        %v4158 = vmax.f32 %v3646, 0.0
        %v4159 = vmax.f32 %v3647, 0.0
        %v4160 = vmax.f32 %v3648, 0.0
        %v4161 = vmax.f32 %v3649, 0.0
        %v4162 = vmax.f32 %v3650, 0.0
        %v4163 = vmax.f32 %v3651, 0.0
        %v4164 = vmax.f32 %v3652, 0.0
        %v4165 = vmax.f32 %v3653, 0.0
        %v4166 = vmax.f32 %v3654, 0.0
        %v4167 = vmax.f32 %v3655, 0.0
        %v4168 = vmax.f32 %v3656, 0.0
        %v4169 = vmax.f32 %v3657, 0.0
        %v4170 = vmax.f32 %v3658, 0.0
        %v4171 = vmax.f32 %v3659, 0.0
        %v4172 = vmax.f32 %v3660, 0.0
        %v4173 = vmax.f32 %v3661, 0.0
        %v4174 = vld [vmem:[#allocation2] sm:$0xff]
        %v4175 = vld [vmem:[#allocation2 + $0x8] sm:$0xff]
        %v4176 = vld [vmem:[#allocation2 + $0x10] sm:$0xff]
        %v4177 = vld [vmem:[#allocation2 + $0x18] sm:$0xff]
        %v4178 = vadd.f32 %v3662, %v3678
        %v4179 = vadd.f32 %v4178, %v3694
        %v4180 = vadd.f32 %v4179, %v3710
        %v4181 = vadd.f32 %v4180, %v3726
        %v4182 = vadd.f32 %v4181, %v3742
        %v4183 = vadd.f32 %v4182, %v3758
        %v4184 = vadd.f32 %v4183, %v3774
        %v4185 = vadd.f32 %v4184, %v3790
        %v4186 = vadd.f32 %v4185, %v3806
        %v4187 = vadd.f32 %v4186, %v3822
        %v4188 = vadd.f32 %v4187, %v3838
        %v4189 = vadd.f32 %v4188, %v3854
        %v4190 = vadd.f32 %v4189, %v3870
        %v4191 = vadd.f32 %v4190, %v3886
        %v4192 = vadd.f32 %v4191, %v3902
        %v4193 = vrot.slane %v4192, 4
        %v4194 = vadd.f32 %v4192, %v4193
        %v4195 = vrot.slane %v4194, 2
        %v4196 = vadd.f32 %v4194, %v4195
        %v4197 = vrot.slane %v4196, 1
        %v4198 = vadd.f32 %v4196, %v4197
        %v4199 = vadd.f32 %v3663, %v3679
        %v4200 = vadd.f32 %v4199, %v3695
        %v4201 = vadd.f32 %v4200, %v3711
        %v4202 = vadd.f32 %v4201, %v3727
        %v4203 = vadd.f32 %v4202, %v3743
        %v4204 = vadd.f32 %v4203, %v3759
        %v4205 = vadd.f32 %v4204, %v3775
        %v4206 = vadd.f32 %v4205, %v3791
        %v4207 = vadd.f32 %v4206, %v3807
        %v4208 = vadd.f32 %v4207, %v3823
        %v4209 = vadd.f32 %v4208, %v3839
        %v4210 = vadd.f32 %v4209, %v3855
        %v4211 = vadd.f32 %v4210, %v3871
        %v4212 = vadd.f32 %v4211, %v3887
        %v4213 = vadd.f32 %v4212, %v3903
        %v4214 = vrot.slane %v4213, 4
        %v4215 = vadd.f32 %v4213, %v4214
        %v4216 = vrot.slane %v4215, 2
        %v4217 = vadd.f32 %v4215, %v4216
        %v4218 = vrot.slane %v4217, 1
        %v4219 = vadd.f32 %v4217, %v4218
        %v4220 = vadd.f32 %v3664, %v3680
        %v4221 = vadd.f32 %v4220, %v3696
        %v4222 = vadd.f32 %v4221, %v3712
        %v4223 = vadd.f32 %v4222, %v3728
        %v4224 = vadd.f32 %v4223, %v3744
        %v4225 = vadd.f32 %v4224, %v3760
        %v4226 = vadd.f32 %v4225, %v3776
        %v4227 = vadd.f32 %v4226, %v3792
        %v4228 = vadd.f32 %v4227, %v3808
        %v4229 = vadd.f32 %v4228, %v3824
        %v4230 = vadd.f32 %v4229, %v3840
        %v4231 = vadd.f32 %v4230, %v3856
        %v4232 = vadd.f32 %v4231, %v3872
        %v4233 = vadd.f32 %v4232, %v3888
        %v4234 = vadd.f32 %v4233, %v3904
        %v4235 = vrot.slane %v4234, 4
        %v4236 = vadd.f32 %v4234, %v4235
        %v4237 = vrot.slane %v4236, 2
        %v4238 = vadd.f32 %v4236, %v4237
        %v4239 = vrot.slane %v4238, 1
        %v4240 = vadd.f32 %v4238, %v4239
        %v4241 = vadd.f32 %v3665, %v3681
        %v4242 = vadd.f32 %v4241, %v3697
        %v4243 = vadd.f32 %v4242, %v3713
        %v4244 = vadd.f32 %v4243, %v3729
        %v4245 = vadd.f32 %v4244, %v3745
        %v4246 = vadd.f32 %v4245, %v3761
        %v4247 = vadd.f32 %v4246, %v3777
        %v4248 = vadd.f32 %v4247, %v3793
        %v4249 = vadd.f32 %v4248, %v3809
        %v4250 = vadd.f32 %v4249, %v3825
        %v4251 = vadd.f32 %v4250, %v3841
        %v4252 = vadd.f32 %v4251, %v3857
        %v4253 = vadd.f32 %v4252, %v3873
        %v4254 = vadd.f32 %v4253, %v3889
        %v4255 = vadd.f32 %v4254, %v3905
        %v4256 = vrot.slane %v4255, 4
        %v4257 = vadd.f32 %v4255, %v4256
        %v4258 = vrot.slane %v4257, 2
        %v4259 = vadd.f32 %v4257, %v4258
        %v4260 = vrot.slane %v4259, 1
        %v4261 = vadd.f32 %v4259, %v4260
        %v4262 = vadd.f32 %v3666, %v3682
        %v4263 = vadd.f32 %v4262, %v3698
        %v4264 = vadd.f32 %v4263, %v3714
        %v4265 = vadd.f32 %v4264, %v3730
        %v4266 = vadd.f32 %v4265, %v3746
        %v4267 = vadd.f32 %v4266, %v3762
        %v4268 = vadd.f32 %v4267, %v3778
        %v4269 = vadd.f32 %v4268, %v3794
        %v4270 = vadd.f32 %v4269, %v3810
        %v4271 = vadd.f32 %v4270, %v3826
        %v4272 = vadd.f32 %v4271, %v3842
        %v4273 = vadd.f32 %v4272, %v3858
        %v4274 = vadd.f32 %v4273, %v3874
        %v4275 = vadd.f32 %v4274, %v3890
        %v4276 = vadd.f32 %v4275, %v3906
        %v4277 = vrot.slane %v4276, 4
        %v4278 = vadd.f32 %v4276, %v4277
        %v4279 = vrot.slane %v4278, 2
        %v4280 = vadd.f32 %v4278, %v4279
        %v4281 = vrot.slane %v4280, 1
        %v4282 = vadd.f32 %v4280, %v4281
        %v4283 = vadd.f32 %v3667, %v3683
        %v4284 = vadd.f32 %v4283, %v3699
        %v4285 = vadd.f32 %v4284, %v3715
        %v4286 = vadd.f32 %v4285, %v3731
        %v4287 = vadd.f32 %v4286, %v3747
        %v4288 = vadd.f32 %v4287, %v3763
        %v4289 = vadd.f32 %v4288, %v3779
        %v4290 = vadd.f32 %v4289, %v3795
        %v4291 = vadd.f32 %v4290, %v3811
        %v4292 = vadd.f32 %v4291, %v3827
        %v4293 = vadd.f32 %v4292, %v3843
        %v4294 = vadd.f32 %v4293, %v3859
        %v4295 = vadd.f32 %v4294, %v3875
        %v4296 = vadd.f32 %v4295, %v3891
        %v4297 = vadd.f32 %v4296, %v3907
        %v4298 = vrot.slane %v4297, 4
        %v4299 = vadd.f32 %v4297, %v4298
        %v4300 = vrot.slane %v4299, 2
        %v4301 = vadd.f32 %v4299, %v4300
        %v4302 = vrot.slane %v4301, 1
        %v4303 = vadd.f32 %v4301, %v4302
        %v4304 = vadd.f32 %v3668, %v3684
        %v4305 = vadd.f32 %v4304, %v3700
        %v4306 = vadd.f32 %v4305, %v3716
        %v4307 = vadd.f32 %v4306, %v3732
        %v4308 = vadd.f32 %v4307, %v3748
        %v4309 = vadd.f32 %v4308, %v3764
        %v4310 = vadd.f32 %v4309, %v3780
        %v4311 = vadd.f32 %v4310, %v3796
        %v4312 = vadd.f32 %v4311, %v3812
        %v4313 = vadd.f32 %v4312, %v3828
        %v4314 = vadd.f32 %v4313, %v3844
        %v4315 = vadd.f32 %v4314, %v3860
        %v4316 = vadd.f32 %v4315, %v3876
        %v4317 = vadd.f32 %v4316, %v3892
        %v4318 = vadd.f32 %v4317, %v3908
        %v4319 = vrot.slane %v4318, 4
        %v4320 = vadd.f32 %v4318, %v4319
        %v4321 = vrot.slane %v4320, 2
        %v4322 = vadd.f32 %v4320, %v4321
        %v4323 = vrot.slane %v4322, 1
        %v4324 = vadd.f32 %v4322, %v4323
        %v4325 = vadd.f32 %v3669, %v3685
        %v4326 = vadd.f32 %v4325, %v3701
        %v4327 = vadd.f32 %v4326, %v3717
        %v4328 = vadd.f32 %v4327, %v3733
        %v4329 = vadd.f32 %v4328, %v3749
        %v4330 = vadd.f32 %v4329, %v3765
        %v4331 = vadd.f32 %v4330, %v3781
        %v4332 = vadd.f32 %v4331, %v3797
        %v4333 = vadd.f32 %v4332, %v3813
        %v4334 = vadd.f32 %v4333, %v3829
        %v4335 = vadd.f32 %v4334, %v3845
        %v4336 = vadd.f32 %v4335, %v3861
        %v4337 = vadd.f32 %v4336, %v3877
        %v4338 = vadd.f32 %v4337, %v3893
        %v4339 = vadd.f32 %v4338, %v3909
        %v4340 = vrot.slane %v4339, 4
        %v4341 = vadd.f32 %v4339, %v4340
        %v4342 = vrot.slane %v4341, 2
        %v4343 = vadd.f32 %v4341, %v4342
        %v4344 = vrot.slane %v4343, 1
        %v4345 = vadd.f32 %v4343, %v4344
        %v4346 = vadd.f32 %v3670, %v3686
        %v4347 = vadd.f32 %v4346, %v3702
        %v4348 = vadd.f32 %v4347, %v3718
        %v4349 = vadd.f32 %v4348, %v3734
        %v4350 = vadd.f32 %v4349, %v3750
        %v4351 = vadd.f32 %v4350, %v3766
        %v4352 = vadd.f32 %v4351, %v3782
        %v4353 = vadd.f32 %v4352, %v3798
        %v4354 = vadd.f32 %v4353, %v3814
        %v4355 = vadd.f32 %v4354, %v3830
        %v4356 = vadd.f32 %v4355, %v3846
        %v4357 = vadd.f32 %v4356, %v3862
        %v4358 = vadd.f32 %v4357, %v3878
        %v4359 = vadd.f32 %v4358, %v3894
        %v4360 = vadd.f32 %v4359, %v3910
        %v4361 = vrot.slane %v4360, 4
        %v4362 = vadd.f32 %v4360, %v4361
        %v4363 = vrot.slane %v4362, 2
        %v4364 = vadd.f32 %v4362, %v4363
        %v4365 = vrot.slane %v4364, 1
        %v4366 = vadd.f32 %v4364, %v4365
        %v4367 = vadd.f32 %v3671, %v3687
        %v4368 = vadd.f32 %v4367, %v3703
        %v4369 = vadd.f32 %v4368, %v3719
        %v4370 = vadd.f32 %v4369, %v3735
        %v4371 = vadd.f32 %v4370, %v3751
        %v4372 = vadd.f32 %v4371, %v3767
        %v4373 = vadd.f32 %v4372, %v3783
        %v4374 = vadd.f32 %v4373, %v3799
        %v4375 = vadd.f32 %v4374, %v3815
        %v4376 = vadd.f32 %v4375, %v3831
        %v4377 = vadd.f32 %v4376, %v3847
        %v4378 = vadd.f32 %v4377, %v3863
        %v4379 = vadd.f32 %v4378, %v3879
        %v4380 = vadd.f32 %v4379, %v3895
        %v4381 = vadd.f32 %v4380, %v3911
        %v4382 = vrot.slane %v4381, 4
        %v4383 = vadd.f32 %v4381, %v4382
        %v4384 = vrot.slane %v4383, 2
        %v4385 = vadd.f32 %v4383, %v4384
        %v4386 = vrot.slane %v4385, 1
        %v4387 = vadd.f32 %v4385, %v4386
        %v4388 = vadd.f32 %v3672, %v3688
        %v4389 = vadd.f32 %v4388, %v3704
        %v4390 = vadd.f32 %v4389, %v3720
        %v4391 = vadd.f32 %v4390, %v3736
        %v4392 = vadd.f32 %v4391, %v3752
        %v4393 = vadd.f32 %v4392, %v3768
        %v4394 = vadd.f32 %v4393, %v3784
        %v4395 = vadd.f32 %v4394, %v3800
        %v4396 = vadd.f32 %v4395, %v3816
        %v4397 = vadd.f32 %v4396, %v3832
        %v4398 = vadd.f32 %v4397, %v3848
        %v4399 = vadd.f32 %v4398, %v3864
        %v4400 = vadd.f32 %v4399, %v3880
        %v4401 = vadd.f32 %v4400, %v3896
        %v4402 = vadd.f32 %v4401, %v3912
        %v4403 = vrot.slane %v4402, 4
        %v4404 = vadd.f32 %v4402, %v4403
        %v4405 = vrot.slane %v4404, 2
        %v4406 = vadd.f32 %v4404, %v4405
        %v4407 = vrot.slane %v4406, 1
        %v4408 = vadd.f32 %v4406, %v4407
        %v4409 = vadd.f32 %v3673, %v3689
        %v4410 = vadd.f32 %v4409, %v3705
        %v4411 = vadd.f32 %v4410, %v3721
        %v4412 = vadd.f32 %v4411, %v3737
        %v4413 = vadd.f32 %v4412, %v3753
        %v4414 = vadd.f32 %v4413, %v3769
        %v4415 = vadd.f32 %v4414, %v3785
        %v4416 = vadd.f32 %v4415, %v3801
        %v4417 = vadd.f32 %v4416, %v3817
        %v4418 = vadd.f32 %v4417, %v3833
        %v4419 = vadd.f32 %v4418, %v3849
        %v4420 = vadd.f32 %v4419, %v3865
        %v4421 = vadd.f32 %v4420, %v3881
        %v4422 = vadd.f32 %v4421, %v3897
        %v4423 = vadd.f32 %v4422, %v3913
        %v4424 = vrot.slane %v4423, 4
        %v4425 = vadd.f32 %v4423, %v4424
        %v4426 = vrot.slane %v4425, 2
        %v4427 = vadd.f32 %v4425, %v4426
        %v4428 = vrot.slane %v4427, 1
        %v4429 = vadd.f32 %v4427, %v4428
        %v4430 = vadd.f32 %v3674, %v3690
        %v4431 = vadd.f32 %v4430, %v3706
        %v4432 = vadd.f32 %v4431, %v3722
        %v4433 = vadd.f32 %v4432, %v3738
        %v4434 = vadd.f32 %v4433, %v3754
        %v4435 = vadd.f32 %v4434, %v3770
        %v4436 = vadd.f32 %v4435, %v3786
        %v4437 = vadd.f32 %v4436, %v3802
        %v4438 = vadd.f32 %v4437, %v3818
        %v4439 = vadd.f32 %v4438, %v3834
        %v4440 = vadd.f32 %v4439, %v3850
        %v4441 = vadd.f32 %v4440, %v3866
        %v4442 = vadd.f32 %v4441, %v3882
        %v4443 = vadd.f32 %v4442, %v3898
        %v4444 = vadd.f32 %v4443, %v3914
        %v4445 = vrot.slane %v4444, 4
        %v4446 = vadd.f32 %v4444, %v4445
        %v4447 = vrot.slane %v4446, 2
        %v4448 = vadd.f32 %v4446, %v4447
        %v4449 = vrot.slane %v4448, 1
        %v4450 = vadd.f32 %v4448, %v4449
        %v4451 = vadd.f32 %v3675, %v3691
        %v4452 = vadd.f32 %v4451, %v3707
        %v4453 = vadd.f32 %v4452, %v3723
        %v4454 = vadd.f32 %v4453, %v3739
        %v4455 = vadd.f32 %v4454, %v3755
        %v4456 = vadd.f32 %v4455, %v3771
        %v4457 = vadd.f32 %v4456, %v3787
        %v4458 = vadd.f32 %v4457, %v3803
        %v4459 = vadd.f32 %v4458, %v3819
        %v4460 = vadd.f32 %v4459, %v3835
        %v4461 = vadd.f32 %v4460, %v3851
        %v4462 = vadd.f32 %v4461, %v3867
        %v4463 = vadd.f32 %v4462, %v3883
        %v4464 = vadd.f32 %v4463, %v3899
        %v4465 = vadd.f32 %v4464, %v3915
        %v4466 = vrot.slane %v4465, 4
        %v4467 = vadd.f32 %v4465, %v4466
        %v4468 = vrot.slane %v4467, 2
        %v4469 = vadd.f32 %v4467, %v4468
        %v4470 = vrot.slane %v4469, 1
        %v4471 = vadd.f32 %v4469, %v4470
        %v4472 = vadd.f32 %v3676, %v3692
        %v4473 = vadd.f32 %v4472, %v3708
        %v4474 = vadd.f32 %v4473, %v3724
        %v4475 = vadd.f32 %v4474, %v3740
        %v4476 = vadd.f32 %v4475, %v3756
        %v4477 = vadd.f32 %v4476, %v3772
        %v4478 = vadd.f32 %v4477, %v3788
        %v4479 = vadd.f32 %v4478, %v3804
        %v4480 = vadd.f32 %v4479, %v3820
        %v4481 = vadd.f32 %v4480, %v3836
        %v4482 = vadd.f32 %v4481, %v3852
        %v4483 = vadd.f32 %v4482, %v3868
        %v4484 = vadd.f32 %v4483, %v3884
        %v4485 = vadd.f32 %v4484, %v3900
        %v4486 = vadd.f32 %v4485, %v3916
        %v4487 = vrot.slane %v4486, 4
        %v4488 = vadd.f32 %v4486, %v4487
        %v4489 = vrot.slane %v4488, 2
        %v4490 = vadd.f32 %v4488, %v4489
        %v4491 = vrot.slane %v4490, 1
        %v4492 = vadd.f32 %v4490, %v4491
        %v4493 = vadd.f32 %v3677, %v3693
        %v4494 = vadd.f32 %v4493, %v3709
        %v4495 = vadd.f32 %v4494, %v3725
        %v4496 = vadd.f32 %v4495, %v3741
        %v4497 = vadd.f32 %v4496, %v3757
        %v4498 = vadd.f32 %v4497, %v3773
        %v4499 = vadd.f32 %v4498, %v3789
        %v4500 = vadd.f32 %v4499, %v3805
        %v4501 = vadd.f32 %v4500, %v3821
        %v4502 = vadd.f32 %v4501, %v3837
        %v4503 = vadd.f32 %v4502, %v3853
        %v4504 = vadd.f32 %v4503, %v3869
        %v4505 = vadd.f32 %v4504, %v3885
        %v4506 = vadd.f32 %v4505, %v3901
        %v4507 = vadd.f32 %v4506, %v3917
        %v4508 = vrot.slane %v4507, 4
        %v4509 = vadd.f32 %v4507, %v4508
        %v4510 = vrot.slane %v4509, 2
        %v4511 = vadd.f32 %v4509, %v4510
        %v4512 = vrot.slane %v4511, 1
        %v4513 = vadd.f32 %v4511, %v4512
        %v4514 = vadd.f32 %v3918, %v3934
        %v4515 = vadd.f32 %v4514, %v3950
        %v4516 = vadd.f32 %v4515, %v3966
        %v4517 = vadd.f32 %v4516, %v3982
        %v4518 = vadd.f32 %v4517, %v3998
        %v4519 = vadd.f32 %v4518, %v4014
        %v4520 = vadd.f32 %v4519, %v4030
        %v4521 = vadd.f32 %v4520, %v4046
        %v4522 = vadd.f32 %v4521, %v4062
        %v4523 = vadd.f32 %v4522, %v4078
        %v4524 = vadd.f32 %v4523, %v4094
        %v4525 = vadd.f32 %v4524, %v4110
        %v4526 = vadd.f32 %v4525, %v4126
        %v4527 = vadd.f32 %v4526, %v4142
        %v4528 = vadd.f32 %v4527, %v4158
        %v4529 = vrot.slane %v4528, 4
        %v4530 = vadd.f32 %v4528, %v4529
        %v4531 = vrot.slane %v4530, 2
        %v4532 = vadd.f32 %v4530, %v4531
        %v4533 = vrot.slane %v4532, 1
        %v4534 = vadd.f32 %v4532, %v4533
        %v4535 = vadd.f32 %v3919, %v3935
        %v4536 = vadd.f32 %v4535, %v3951
        %v4537 = vadd.f32 %v4536, %v3967
        %v4538 = vadd.f32 %v4537, %v3983
        %v4539 = vadd.f32 %v4538, %v3999
        %v4540 = vadd.f32 %v4539, %v4015
        %v4541 = vadd.f32 %v4540, %v4031
        %v4542 = vadd.f32 %v4541, %v4047
        %v4543 = vadd.f32 %v4542, %v4063
        %v4544 = vadd.f32 %v4543, %v4079
        %v4545 = vadd.f32 %v4544, %v4095
        %v4546 = vadd.f32 %v4545, %v4111
        %v4547 = vadd.f32 %v4546, %v4127
        %v4548 = vadd.f32 %v4547, %v4143
        %v4549 = vadd.f32 %v4548, %v4159
        %v4550 = vrot.slane %v4549, 4
        %v4551 = vadd.f32 %v4549, %v4550
        %v4552 = vrot.slane %v4551, 2
        %v4553 = vadd.f32 %v4551, %v4552
        %v4554 = vrot.slane %v4553, 1
        %v4555 = vadd.f32 %v4553, %v4554
        %v4556 = vadd.f32 %v3920, %v3936
        %v4557 = vadd.f32 %v4556, %v3952
        %v4558 = vadd.f32 %v4557, %v3968
        %v4559 = vadd.f32 %v4558, %v3984
        %v4560 = vadd.f32 %v4559, %v4000
        %v4561 = vadd.f32 %v4560, %v4016
        %v4562 = vadd.f32 %v4561, %v4032
        %v4563 = vadd.f32 %v4562, %v4048
        %v4564 = vadd.f32 %v4563, %v4064
        %v4565 = vadd.f32 %v4564, %v4080
        %v4566 = vadd.f32 %v4565, %v4096
        %v4567 = vadd.f32 %v4566, %v4112
        %v4568 = vadd.f32 %v4567, %v4128
        %v4569 = vadd.f32 %v4568, %v4144
        %v4570 = vadd.f32 %v4569, %v4160
        %v4571 = vrot.slane %v4570, 4
        %v4572 = vadd.f32 %v4570, %v4571
        %v4573 = vrot.slane %v4572, 2
        %v4574 = vadd.f32 %v4572, %v4573
        %v4575 = vrot.slane %v4574, 1
        %v4576 = vadd.f32 %v4574, %v4575
        %v4577 = vadd.f32 %v3921, %v3937
        %v4578 = vadd.f32 %v4577, %v3953
        %v4579 = vadd.f32 %v4578, %v3969
        %v4580 = vadd.f32 %v4579, %v3985
        %v4581 = vadd.f32 %v4580, %v4001
        %v4582 = vadd.f32 %v4581, %v4017
        %v4583 = vadd.f32 %v4582, %v4033
        %v4584 = vadd.f32 %v4583, %v4049
        %v4585 = vadd.f32 %v4584, %v4065
        %v4586 = vadd.f32 %v4585, %v4081
        %v4587 = vadd.f32 %v4586, %v4097
        %v4588 = vadd.f32 %v4587, %v4113
        %v4589 = vadd.f32 %v4588, %v4129
        %v4590 = vadd.f32 %v4589, %v4145
        %v4591 = vadd.f32 %v4590, %v4161
        %v4592 = vrot.slane %v4591, 4
        %v4593 = vadd.f32 %v4591, %v4592
        %v4594 = vrot.slane %v4593, 2
        %v4595 = vadd.f32 %v4593, %v4594
        %v4596 = vrot.slane %v4595, 1
        %v4597 = vadd.f32 %v4595, %v4596
        %v4598 = vadd.f32 %v3922, %v3938
        %v4599 = vadd.f32 %v4598, %v3954
        %v4600 = vadd.f32 %v4599, %v3970
        %v4601 = vadd.f32 %v4600, %v3986
        %v4602 = vadd.f32 %v4601, %v4002
        %v4603 = vadd.f32 %v4602, %v4018
        %v4604 = vadd.f32 %v4603, %v4034
        %v4605 = vadd.f32 %v4604, %v4050
        %v4606 = vadd.f32 %v4605, %v4066
        %v4607 = vadd.f32 %v4606, %v4082
        %v4608 = vadd.f32 %v4607, %v4098
        %v4609 = vadd.f32 %v4608, %v4114
        %v4610 = vadd.f32 %v4609, %v4130
        %v4611 = vadd.f32 %v4610, %v4146
        %v4612 = vadd.f32 %v4611, %v4162
        %v4613 = vrot.slane %v4612, 4
        %v4614 = vadd.f32 %v4612, %v4613
        %v4615 = vrot.slane %v4614, 2
        %v4616 = vadd.f32 %v4614, %v4615
        %v4617 = vrot.slane %v4616, 1
        %v4618 = vadd.f32 %v4616, %v4617
        %v4619 = vadd.f32 %v3923, %v3939
        %v4620 = vadd.f32 %v4619, %v3955
        %v4621 = vadd.f32 %v4620, %v3971
        %v4622 = vadd.f32 %v4621, %v3987
        %v4623 = vadd.f32 %v4622, %v4003
        %v4624 = vadd.f32 %v4623, %v4019
        %v4625 = vadd.f32 %v4624, %v4035
        %v4626 = vadd.f32 %v4625, %v4051
        %v4627 = vadd.f32 %v4626, %v4067
        %v4628 = vadd.f32 %v4627, %v4083
        %v4629 = vadd.f32 %v4628, %v4099
        %v4630 = vadd.f32 %v4629, %v4115
        %v4631 = vadd.f32 %v4630, %v4131
        %v4632 = vadd.f32 %v4631, %v4147
        %v4633 = vadd.f32 %v4632, %v4163
        %v4634 = vrot.slane %v4633, 4
        %v4635 = vadd.f32 %v4633, %v4634
        %v4636 = vrot.slane %v4635, 2
        %v4637 = vadd.f32 %v4635, %v4636
        %v4638 = vrot.slane %v4637, 1
        %v4639 = vadd.f32 %v4637, %v4638
        %v4640 = vadd.f32 %v3924, %v3940
        %v4641 = vadd.f32 %v4640, %v3956
        %v4642 = vadd.f32 %v4641, %v3972
        %v4643 = vadd.f32 %v4642, %v3988
        %v4644 = vadd.f32 %v4643, %v4004
        %v4645 = vadd.f32 %v4644, %v4020
        %v4646 = vadd.f32 %v4645, %v4036
        %v4647 = vadd.f32 %v4646, %v4052
        %v4648 = vadd.f32 %v4647, %v4068
        %v4649 = vadd.f32 %v4648, %v4084
        %v4650 = vadd.f32 %v4649, %v4100
        %v4651 = vadd.f32 %v4650, %v4116
        %v4652 = vadd.f32 %v4651, %v4132
        %v4653 = vadd.f32 %v4652, %v4148
        %v4654 = vadd.f32 %v4653, %v4164
        %v4655 = vrot.slane %v4654, 4
        %v4656 = vadd.f32 %v4654, %v4655
        %v4657 = vrot.slane %v4656, 2
        %v4658 = vadd.f32 %v4656, %v4657
        %v4659 = vrot.slane %v4658, 1
        %v4660 = vadd.f32 %v4658, %v4659
        %v4661 = vadd.f32 %v3925, %v3941
        %v4662 = vadd.f32 %v4661, %v3957
        %v4663 = vadd.f32 %v4662, %v3973
        %v4664 = vadd.f32 %v4663, %v3989
        %v4665 = vadd.f32 %v4664, %v4005
        %v4666 = vadd.f32 %v4665, %v4021
        %v4667 = vadd.f32 %v4666, %v4037
        %v4668 = vadd.f32 %v4667, %v4053
        %v4669 = vadd.f32 %v4668, %v4069
        %v4670 = vadd.f32 %v4669, %v4085
        %v4671 = vadd.f32 %v4670, %v4101
        %v4672 = vadd.f32 %v4671, %v4117
        %v4673 = vadd.f32 %v4672, %v4133
        %v4674 = vadd.f32 %v4673, %v4149
        %v4675 = vadd.f32 %v4674, %v4165
        %v4676 = vrot.slane %v4675, 4
        %v4677 = vadd.f32 %v4675, %v4676
        %v4678 = vrot.slane %v4677, 2
        %v4679 = vadd.f32 %v4677, %v4678
        %v4680 = vrot.slane %v4679, 1
        %v4681 = vadd.f32 %v4679, %v4680
        %v4682 = vadd.f32 %v3926, %v3942
        %v4683 = vadd.f32 %v4682, %v3958
        %v4684 = vadd.f32 %v4683, %v3974
        %v4685 = vadd.f32 %v4684, %v3990
        %v4686 = vadd.f32 %v4685, %v4006
        %v4687 = vadd.f32 %v4686, %v4022
        %v4688 = vadd.f32 %v4687, %v4038
        %v4689 = vadd.f32 %v4688, %v4054
        %v4690 = vadd.f32 %v4689, %v4070
        %v4691 = vadd.f32 %v4690, %v4086
        %v4692 = vadd.f32 %v4691, %v4102
        %v4693 = vadd.f32 %v4692, %v4118
        %v4694 = vadd.f32 %v4693, %v4134
        %v4695 = vadd.f32 %v4694, %v4150
        %v4696 = vadd.f32 %v4695, %v4166
        %v4697 = vrot.slane %v4696, 4
        %v4698 = vadd.f32 %v4696, %v4697
        %v4699 = vrot.slane %v4698, 2
        %v4700 = vadd.f32 %v4698, %v4699
        %v4701 = vrot.slane %v4700, 1
        %v4702 = vadd.f32 %v4700, %v4701
        %v4703 = vadd.f32 %v3927, %v3943
        %v4704 = vadd.f32 %v4703, %v3959
        %v4705 = vadd.f32 %v4704, %v3975
        %v4706 = vadd.f32 %v4705, %v3991
        %v4707 = vadd.f32 %v4706, %v4007
        %v4708 = vadd.f32 %v4707, %v4023
        %v4709 = vadd.f32 %v4708, %v4039
        %v4710 = vadd.f32 %v4709, %v4055
        %v4711 = vadd.f32 %v4710, %v4071
        %v4712 = vadd.f32 %v4711, %v4087
        %v4713 = vadd.f32 %v4712, %v4103
        %v4714 = vadd.f32 %v4713, %v4119
        %v4715 = vadd.f32 %v4714, %v4135
        %v4716 = vadd.f32 %v4715, %v4151
        %v4717 = vadd.f32 %v4716, %v4167
        %v4718 = vrot.slane %v4717, 4
        %v4719 = vadd.f32 %v4717, %v4718
        %v4720 = vrot.slane %v4719, 2
        %v4721 = vadd.f32 %v4719, %v4720
        %v4722 = vrot.slane %v4721, 1
        %v4723 = vadd.f32 %v4721, %v4722
        %v4724 = vadd.f32 %v3928, %v3944
        %v4725 = vadd.f32 %v4724, %v3960
        %v4726 = vadd.f32 %v4725, %v3976
        %v4727 = vadd.f32 %v4726, %v3992
        %v4728 = vadd.f32 %v4727, %v4008
        %v4729 = vadd.f32 %v4728, %v4024
        %v4730 = vadd.f32 %v4729, %v4040
        %v4731 = vadd.f32 %v4730, %v4056
        %v4732 = vadd.f32 %v4731, %v4072
        %v4733 = vadd.f32 %v4732, %v4088
        %v4734 = vadd.f32 %v4733, %v4104
        %v4735 = vadd.f32 %v4734, %v4120
        %v4736 = vadd.f32 %v4735, %v4136
        %v4737 = vadd.f32 %v4736, %v4152
        %v4738 = vadd.f32 %v4737, %v4168
        %v4739 = vrot.slane %v4738, 4
        %v4740 = vadd.f32 %v4738, %v4739
        %v4741 = vrot.slane %v4740, 2
        %v4742 = vadd.f32 %v4740, %v4741
        %v4743 = vrot.slane %v4742, 1
        %v4744 = vadd.f32 %v4742, %v4743
        %v4745 = vadd.f32 %v3929, %v3945
        %v4746 = vadd.f32 %v4745, %v3961
        %v4747 = vadd.f32 %v4746, %v3977
        %v4748 = vadd.f32 %v4747, %v3993
        %v4749 = vadd.f32 %v4748, %v4009
        %v4750 = vadd.f32 %v4749, %v4025
        %v4751 = vadd.f32 %v4750, %v4041
        %v4752 = vadd.f32 %v4751, %v4057
        %v4753 = vadd.f32 %v4752, %v4073
        %v4754 = vadd.f32 %v4753, %v4089
        %v4755 = vadd.f32 %v4754, %v4105
        %v4756 = vadd.f32 %v4755, %v4121
        %v4757 = vadd.f32 %v4756, %v4137
        %v4758 = vadd.f32 %v4757, %v4153
        %v4759 = vadd.f32 %v4758, %v4169
        %v4760 = vrot.slane %v4759, 4
        %v4761 = vadd.f32 %v4759, %v4760
        %v4762 = vrot.slane %v4761, 2
        %v4763 = vadd.f32 %v4761, %v4762
        %v4764 = vrot.slane %v4763, 1
        %v4765 = vadd.f32 %v4763, %v4764
        %v4766 = vadd.f32 %v3930, %v3946
        %v4767 = vadd.f32 %v4766, %v3962
        %v4768 = vadd.f32 %v4767, %v3978
        %v4769 = vadd.f32 %v4768, %v3994
        %v4770 = vadd.f32 %v4769, %v4010
        %v4771 = vadd.f32 %v4770, %v4026
        %v4772 = vadd.f32 %v4771, %v4042
        %v4773 = vadd.f32 %v4772, %v4058
        %v4774 = vadd.f32 %v4773, %v4074
        %v4775 = vadd.f32 %v4774, %v4090
        %v4776 = vadd.f32 %v4775, %v4106
        %v4777 = vadd.f32 %v4776, %v4122
        %v4778 = vadd.f32 %v4777, %v4138
        %v4779 = vadd.f32 %v4778, %v4154
        %v4780 = vadd.f32 %v4779, %v4170
        %v4781 = vrot.slane %v4780, 4
        %v4782 = vadd.f32 %v4780, %v4781
        %v4783 = vrot.slane %v4782, 2
        %v4784 = vadd.f32 %v4782, %v4783
        %v4785 = vrot.slane %v4784, 1
        %v4786 = vadd.f32 %v4784, %v4785
        %v4787 = vadd.f32 %v3931, %v3947
        %v4788 = vadd.f32 %v4787, %v3963
        %v4789 = vadd.f32 %v4788, %v3979
        %v4790 = vadd.f32 %v4789, %v3995
        %v4791 = vadd.f32 %v4790, %v4011
        %v4792 = vadd.f32 %v4791, %v4027
        %v4793 = vadd.f32 %v4792, %v4043
        %v4794 = vadd.f32 %v4793, %v4059
        %v4795 = vadd.f32 %v4794, %v4075
        %v4796 = vadd.f32 %v4795, %v4091
        %v4797 = vadd.f32 %v4796, %v4107
        %v4798 = vadd.f32 %v4797, %v4123
        %v4799 = vadd.f32 %v4798, %v4139
        %v4800 = vadd.f32 %v4799, %v4155
        %v4801 = vadd.f32 %v4800, %v4171
        %v4802 = vrot.slane %v4801, 4
        %v4803 = vadd.f32 %v4801, %v4802
        %v4804 = vrot.slane %v4803, 2
        %v4805 = vadd.f32 %v4803, %v4804
        %v4806 = vrot.slane %v4805, 1
        %v4807 = vadd.f32 %v4805, %v4806
        %v4808 = vadd.f32 %v3932, %v3948
        %v4809 = vadd.f32 %v4808, %v3964
        %v4810 = vadd.f32 %v4809, %v3980
        %v4811 = vadd.f32 %v4810, %v3996
        %v4812 = vadd.f32 %v4811, %v4012
        %v4813 = vadd.f32 %v4812, %v4028
        %v4814 = vadd.f32 %v4813, %v4044
        %v4815 = vadd.f32 %v4814, %v4060
        %v4816 = vadd.f32 %v4815, %v4076
        %v4817 = vadd.f32 %v4816, %v4092
        %v4818 = vadd.f32 %v4817, %v4108
        %v4819 = vadd.f32 %v4818, %v4124
        %v4820 = vadd.f32 %v4819, %v4140
        %v4821 = vadd.f32 %v4820, %v4156
        %v4822 = vadd.f32 %v4821, %v4172
        %v4823 = vrot.slane %v4822, 4
        %v4824 = vadd.f32 %v4822, %v4823
        %v4825 = vrot.slane %v4824, 2
        %v4826 = vadd.f32 %v4824, %v4825
        %v4827 = vrot.slane %v4826, 1
        %v4828 = vadd.f32 %v4826, %v4827
        %v4829 = vadd.f32 %v3933, %v3949
        %v4830 = vadd.f32 %v4829, %v3965
        %v4831 = vadd.f32 %v4830, %v3981
        %v4832 = vadd.f32 %v4831, %v3997
        %v4833 = vadd.f32 %v4832, %v4013
        %v4834 = vadd.f32 %v4833, %v4029
        %v4835 = vadd.f32 %v4834, %v4045
        %v4836 = vadd.f32 %v4835, %v4061
        %v4837 = vadd.f32 %v4836, %v4077
        %v4838 = vadd.f32 %v4837, %v4093
        %v4839 = vadd.f32 %v4838, %v4109
        %v4840 = vadd.f32 %v4839, %v4125
        %v4841 = vadd.f32 %v4840, %v4141
        %v4842 = vadd.f32 %v4841, %v4157
        %v4843 = vadd.f32 %v4842, %v4173
        %v4844 = vrot.slane %v4843, 4
        %v4845 = vadd.f32 %v4843, %v4844
        %v4846 = vrot.slane %v4845, 2
        %v4847 = vadd.f32 %v4845, %v4846
        %v4848 = vrot.slane %v4847, 1
        %v4849 = vadd.f32 %v4847, %v4848
        %v4882 = vrot.slane %v4219, 6
        %v4883 = vrot.slane %v4240, 4
        %v4884 = vrot.slane %v4261, 2
        %v4885 = vrot.slane %v4303, 6
        %v4886 = vrot.slane %v4324, 4
        %v4887 = vrot.slane %v4345, 2
        %v4888 = vrot.slane %v4387, 6
        %v4889 = vrot.slane %v4408, 4
        %v4890 = vrot.slane %v4429, 2
        %v4891 = vrot.slane %v4471, 6
        %v4892 = vrot.slane %v4492, 4
        %v4893 = vrot.slane %v4513, 2
        %v4894 = vrot.slane %v4555, 6
        %v4895 = vrot.slane %v4576, 4
        %v4896 = vrot.slane %v4597, 2
        %v4897 = vrot.slane %v4639, 6
        %v4898 = vrot.slane %v4660, 4
        %v4899 = vrot.slane %v4681, 2
        %v4900 = vrot.slane %v4723, 6
        %v4901 = vrot.slane %v4744, 4
        %v4902 = vrot.slane %v4765, 2
        %v4903 = vrot.slane %v4807, 6
        %v4904 = vrot.slane %v4828, 4
        %v4905 = vrot.slane %v4849, 2
        %vm4906 = vcmask 1041408
        %v4907 = vsel %vm4906, %v4198, %v4882
        %vm4908 = vcmask 1045508
        %v4909 = vsel %vm4908, %v4883, %v4884
        %vm4910 = vcmask 1043456
        %v4911 = vsel %vm4910, %v4907, %v4909
        %v4912 = vsel %vm4906, %v4282, %v4885
        %v4913 = vsel %vm4908, %v4886, %v4887
        %v4914 = vsel %vm4910, %v4912, %v4913
        %v4915 = vsel %vm4906, %v4366, %v4888
        %v4916 = vsel %vm4908, %v4889, %v4890
        %v4917 = vsel %vm4910, %v4915, %v4916
        %v4918 = vsel %vm4906, %v4450, %v4891
        %v4919 = vsel %vm4908, %v4892, %v4893
        %v4920 = vsel %vm4910, %v4918, %v4919
        %v4921 = vsel %vm4906, %v4534, %v4894
        %v4922 = vsel %vm4908, %v4895, %v4896
        %v4923 = vsel %vm4910, %v4921, %v4922
        %v4924 = vsel %vm4906, %v4618, %v4897
        %v4925 = vsel %vm4908, %v4898, %v4899
        %v4926 = vsel %vm4910, %v4924, %v4925
        %v4927 = vsel %vm4906, %v4702, %v4900
        %v4928 = vsel %vm4908, %v4901, %v4902
        %v4929 = vsel %vm4910, %v4927, %v4928
        %v4930 = vsel %vm4906, %v4786, %v4903
        %v4931 = vsel %vm4908, %v4904, %v4905
        %v4932 = vsel %vm4910, %v4930, %v4931
        %vm4933 = vcmask 1044484
        %v4934 = vsel %vm4933, %v4911, %v4911
        %vm4935 = vcmask 1046534
        %v4936 = vsel %vm4935, %v4911, %v4934
        %v4937 = vrot.slane %v4923, 7
        %vm4938 = vcmask 1041409
        %v4939 = vsel %vm4938, %v4937, %v4936
        %vm4940 = vcmask 1043459
        %v4941 = vsel %vm4940, %v4937, %v4939
        %vm4942 = vcmask 1045509
        %v4943 = vsel %vm4942, %v4937, %v4941
        %vm4944 = vcmask 1047559
        %v4945 = vsel %vm4944, %v4937, %v4943
        %v4946 = vsel %vm4933, %v4914, %v4914
        %v4947 = vsel %vm4935, %v4914, %v4946
        %v4948 = vrot.slane %v4926, 7
        %v4949 = vsel %vm4938, %v4948, %v4947
        %v4950 = vsel %vm4940, %v4948, %v4949
        %v4951 = vsel %vm4942, %v4948, %v4950
        %v4952 = vsel %vm4944, %v4948, %v4951
        %v4953 = vsel %vm4933, %v4917, %v4917
        %v4954 = vsel %vm4935, %v4917, %v4953
        %v4955 = vrot.slane %v4929, 7
        %v4956 = vsel %vm4938, %v4955, %v4954
        %v4957 = vsel %vm4940, %v4955, %v4956
        %v4958 = vsel %vm4942, %v4955, %v4957
        %v4959 = vsel %vm4944, %v4955, %v4958
        %v4960 = vsel %vm4933, %v4920, %v4920
        %v4961 = vsel %vm4935, %v4920, %v4960
        %v4962 = vrot.slane %v4932, 7
        %v4963 = vsel %vm4938, %v4962, %v4961
        %v4964 = vsel %vm4940, %v4962, %v4963
        %v4965 = vsel %vm4942, %v4962, %v4964
        %v4966 = vsel %vm4944, %v4962, %v4965
        %v4971 = vadd.f32 %v4174, %v4945
        %v4972 = vadd.f32 %v4175, %v4952
        %v4973 = vadd.f32 %v4176, %v4959
        %v4974 = vadd.f32 %v4177, %v4966
        %4975 = vst [vmem:[#allocation2] sm:$0xff] %v4971
        %4976 = vst [vmem:[#allocation2 + $0x8] sm:$0xff] %v4972
        %4977 = vst [vmem:[#allocation2 + $0x10] sm:$0xff] %v4973
        %4978 = vst [vmem:[#allocation2 + $0x18] sm:$0xff] %v4974
        %p4979 = scmp.eq.s32.totalorder %s26, 1
        // Predicated region
        $region94: #{tpu_custom_call.1} parent=80 // pred_check
          %p4980 = pneg %p4979
        $region95: #{tpu_custom_call.1} parent=80 // pred_check_branch
          %4982 = sbr.rel (%p4980) target = $region97
        $region96: #{tpu_custom_call.1} parent=80 // pred_region
          %v4983 = vld [vmem:[#allocation2] sm:$0xff]
          %v4984 = vld [vmem:[#allocation2 + $0x8] sm:$0xff]
          %v4985 = vld [vmem:[#allocation2 + $0x10] sm:$0xff]
          %v4986 = vld [vmem:[#allocation2 + $0x18] sm:$0xff]
          %4991 = vst [vmem:[#allocation1] ss:$4 sm:$0xff] %v4983
          %s4992 = scalar_lea.vmem [#allocation1], 32
          %4993 = vst [vmem:[%s4992] ss:$4 sm:$0xff] %v4984
          %v4994 = vld.sshfl [vmem:[#allocation1] sm:$0xff pattern:$0x73625140]
          %v4995 = vld.sshfl [vmem:[#allocation1 + $0x8] sm:$0xff pattern:$0x73625140]
          %v4996 = vld.sshfl [vmem:[#allocation1 + $0x10] sm:$0xff pattern:$0x73625140]
          %v4997 = vld.sshfl [vmem:[#allocation1 + $0x18] sm:$0xff pattern:$0x73625140]
          %v4998 = vld.sshfl [vmem:[#allocation1 + $0x20] sm:$0xff pattern:$0x73625140]
          %v4999 = vld.sshfl [vmem:[#allocation1 + $0x28] sm:$0xff pattern:$0x73625140]
          %v5000 = vld.sshfl [vmem:[#allocation1 + $0x30] sm:$0xff pattern:$0x73625140]
          %v5001 = vld.sshfl [vmem:[#allocation1 + $0x38] sm:$0xff pattern:$0x73625140]
          %5002 = vst [vmem:[#allocation1] ss:$4 sm:$0xff] %v4985
          %5003 = vst [vmem:[%s4992] ss:$4 sm:$0xff] %v4986
          %v5004 = vld.sshfl [vmem:[#allocation1] sm:$0xff pattern:$0x73625140]
          %v5005 = vld.sshfl [vmem:[#allocation1 + $0x8] sm:$0xff pattern:$0x73625140]
          %v5006 = vld.sshfl [vmem:[#allocation1 + $0x10] sm:$0xff pattern:$0x73625140]
          %v5007 = vld.sshfl [vmem:[#allocation1 + $0x18] sm:$0xff pattern:$0x73625140]
          %v5008 = vld.sshfl [vmem:[#allocation1 + $0x20] sm:$0xff pattern:$0x73625140]
          %v5009 = vld.sshfl [vmem:[#allocation1 + $0x28] sm:$0xff pattern:$0x73625140]
          %v5010 = vld.sshfl [vmem:[#allocation1 + $0x30] sm:$0xff pattern:$0x73625140]
          %v5011 = vld.sshfl [vmem:[#allocation1 + $0x38] sm:$0xff pattern:$0x73625140]
          %v5028 = vpack.c.bf16 %v4994, %v4994
          %v5029 = vpack.c.bf16 %v4995, %v4995
          %v5030 = vpack.c.bf16 %v4996, %v4996
          %v5031 = vpack.c.bf16 %v4997, %v4997
          %v5032 = vpack.c.bf16 %v4998, %v4998
          %v5033 = vpack.c.bf16 %v4999, %v4999
          %v5034 = vpack.c.bf16 %v5000, %v5000
          %v5035 = vpack.c.bf16 %v5001, %v5001
          %v5036 = vpack.c.bf16 %v5004, %v5004
          %v5037 = vpack.c.bf16 %v5005, %v5005
          %v5038 = vpack.c.bf16 %v5006, %v5006
          %v5039 = vpack.c.bf16 %v5007, %v5007
          %v5040 = vpack.c.bf16 %v5008, %v5008
          %v5041 = vpack.c.bf16 %v5009, %v5009
          %v5042 = vpack.c.bf16 %v5010, %v5010
          %v5043 = vpack.c.bf16 %v5011, %v5011
          %v5044 = vld [vmem:[#allocation4] sm:$0xf]
          %v5045 = vld [vmem:[#allocation4 + $0x4] sm:$0xf]
          %v5046 = vld [vmem:[#allocation4 + $0x8] sm:$0xf]
          %v5047 = vld [vmem:[#allocation4 + $0xc] sm:$0xf]
          %v5048 = vld [vmem:[#allocation4 + $0x10] sm:$0xf]
          %v5049 = vld [vmem:[#allocation4 + $0x14] sm:$0xf]
          %v5050 = vld [vmem:[#allocation4 + $0x18] sm:$0xf]
          %v5051 = vld [vmem:[#allocation4 + $0x1c] sm:$0xf]
          %v5052 = vld [vmem:[#allocation4 + $0x20] sm:$0xf]
          %v5053 = vld [vmem:[#allocation4 + $0x24] sm:$0xf]
          %v5054 = vld [vmem:[#allocation4 + $0x28] sm:$0xf]
          %v5055 = vld [vmem:[#allocation4 + $0x2c] sm:$0xf]
          %v5056 = vld [vmem:[#allocation4 + $0x30] sm:$0xf]
          %v5057 = vld [vmem:[#allocation4 + $0x34] sm:$0xf]
          %v5058 = vld [vmem:[#allocation4 + $0x38] sm:$0xf]
          %v5059 = vld [vmem:[#allocation4 + $0x3c] sm:$0xf]
          %v5060 = vld [vmem:[#allocation4 + $0x40] sm:$0xf]
          %v5061 = vld [vmem:[#allocation4 + $0x44] sm:$0xf]
          %v5062 = vld [vmem:[#allocation4 + $0x48] sm:$0xf]
          %v5063 = vld [vmem:[#allocation4 + $0x4c] sm:$0xf]
          %v5064 = vld [vmem:[#allocation4 + $0x50] sm:$0xf]
          %v5065 = vld [vmem:[#allocation4 + $0x54] sm:$0xf]
          %v5066 = vld [vmem:[#allocation4 + $0x58] sm:$0xf]
          %v5067 = vld [vmem:[#allocation4 + $0x5c] sm:$0xf]
          %v5068 = vld [vmem:[#allocation4 + $0x60] sm:$0xf]
          %v5069 = vld [vmem:[#allocation4 + $0x64] sm:$0xf]
          %v5070 = vld [vmem:[#allocation4 + $0x68] sm:$0xf]
          %v5071 = vld [vmem:[#allocation4 + $0x6c] sm:$0xf]
          %v5072 = vld [vmem:[#allocation4 + $0x70] sm:$0xf]
          %v5073 = vld [vmem:[#allocation4 + $0x74] sm:$0xf]
          %v5074 = vld [vmem:[#allocation4 + $0x78] sm:$0xf]
          %v5075 = vld [vmem:[#allocation4 + $0x7c] sm:$0xf]
          %v5076 = vld [vmem:[#allocation4 + $0x80] sm:$0xf]
          %v5077 = vld [vmem:[#allocation4 + $0x84] sm:$0xf]
          %v5078 = vld [vmem:[#allocation4 + $0x88] sm:$0xf]
          %v5079 = vld [vmem:[#allocation4 + $0x8c] sm:$0xf]
          %v5080 = vld [vmem:[#allocation4 + $0x90] sm:$0xf]
          %v5081 = vld [vmem:[#allocation4 + $0x94] sm:$0xf]
          %v5082 = vld [vmem:[#allocation4 + $0x98] sm:$0xf]
          %v5083 = vld [vmem:[#allocation4 + $0x9c] sm:$0xf]
          %v5084 = vld [vmem:[#allocation4 + $0xa0] sm:$0xf]
          %v5085 = vld [vmem:[#allocation4 + $0xa4] sm:$0xf]
          %v5086 = vld [vmem:[#allocation4 + $0xa8] sm:$0xf]
          %v5087 = vld [vmem:[#allocation4 + $0xac] sm:$0xf]
          %v5088 = vld [vmem:[#allocation4 + $0xb0] sm:$0xf]
          %v5089 = vld [vmem:[#allocation4 + $0xb4] sm:$0xf]
          %v5090 = vld [vmem:[#allocation4 + $0xb8] sm:$0xf]
          %v5091 = vld [vmem:[#allocation4 + $0xbc] sm:$0xf]
          %v5092 = vld [vmem:[#allocation4 + $0xc0] sm:$0xf]
          %v5093 = vld [vmem:[#allocation4 + $0xc4] sm:$0xf]
          %v5094 = vld [vmem:[#allocation4 + $0xc8] sm:$0xf]
          %v5095 = vld [vmem:[#allocation4 + $0xcc] sm:$0xf]
          %v5096 = vld [vmem:[#allocation4 + $0xd0] sm:$0xf]
          %v5097 = vld [vmem:[#allocation4 + $0xd4] sm:$0xf]
          %v5098 = vld [vmem:[#allocation4 + $0xd8] sm:$0xf]
          %v5099 = vld [vmem:[#allocation4 + $0xdc] sm:$0xf]
          %v5100 = vld [vmem:[#allocation4 + $0xe0] sm:$0xf]
          %v5101 = vld [vmem:[#allocation4 + $0xe4] sm:$0xf]
          %v5102 = vld [vmem:[#allocation4 + $0xe8] sm:$0xf]
          %v5103 = vld [vmem:[#allocation4 + $0xec] sm:$0xf]
          %v5104 = vld [vmem:[#allocation4 + $0xf0] sm:$0xf]
          %v5105 = vld [vmem:[#allocation4 + $0xf4] sm:$0xf]
          %v5106 = vld [vmem:[#allocation4 + $0xf8] sm:$0xf]
          %v5107 = vld [vmem:[#allocation4 + $0xfc] sm:$0xf]
          %v5108 = vld [vmem:[#allocation4 + $0x100] sm:$0xf]
          %v5109 = vld [vmem:[#allocation4 + $0x104] sm:$0xf]
          %v5110 = vld [vmem:[#allocation4 + $0x108] sm:$0xf]
          %v5111 = vld [vmem:[#allocation4 + $0x10c] sm:$0xf]
          %v5112 = vld [vmem:[#allocation4 + $0x110] sm:$0xf]
          %v5113 = vld [vmem:[#allocation4 + $0x114] sm:$0xf]
          %v5114 = vld [vmem:[#allocation4 + $0x118] sm:$0xf]
          %v5115 = vld [vmem:[#allocation4 + $0x11c] sm:$0xf]
          %v5116 = vld [vmem:[#allocation4 + $0x120] sm:$0xf]
          %v5117 = vld [vmem:[#allocation4 + $0x124] sm:$0xf]
          %v5118 = vld [vmem:[#allocation4 + $0x128] sm:$0xf]
          %v5119 = vld [vmem:[#allocation4 + $0x12c] sm:$0xf]
          %v5120 = vld [vmem:[#allocation4 + $0x130] sm:$0xf]
          %v5121 = vld [vmem:[#allocation4 + $0x134] sm:$0xf]
          %v5122 = vld [vmem:[#allocation4 + $0x138] sm:$0xf]
          %v5123 = vld [vmem:[#allocation4 + $0x13c] sm:$0xf]
          %v5124 = vld [vmem:[#allocation4 + $0x140] sm:$0xf]
          %v5125 = vld [vmem:[#allocation4 + $0x144] sm:$0xf]
          %v5126 = vld [vmem:[#allocation4 + $0x148] sm:$0xf]
          %v5127 = vld [vmem:[#allocation4 + $0x14c] sm:$0xf]
          %v5128 = vld [vmem:[#allocation4 + $0x150] sm:$0xf]
          %v5129 = vld [vmem:[#allocation4 + $0x154] sm:$0xf]
          %v5130 = vld [vmem:[#allocation4 + $0x158] sm:$0xf]
          %v5131 = vld [vmem:[#allocation4 + $0x15c] sm:$0xf]
          %v5132 = vld [vmem:[#allocation4 + $0x160] sm:$0xf]
          %v5133 = vld [vmem:[#allocation4 + $0x164] sm:$0xf]
          %v5134 = vld [vmem:[#allocation4 + $0x168] sm:$0xf]
          %v5135 = vld [vmem:[#allocation4 + $0x16c] sm:$0xf]
          %v5136 = vld [vmem:[#allocation4 + $0x170] sm:$0xf]
          %v5137 = vld [vmem:[#allocation4 + $0x174] sm:$0xf]
          %v5138 = vld [vmem:[#allocation4 + $0x178] sm:$0xf]
          %v5139 = vld [vmem:[#allocation4 + $0x17c] sm:$0xf]
          %v5140 = vld [vmem:[#allocation4 + $0x180] sm:$0xf]
          %v5141 = vld [vmem:[#allocation4 + $0x184] sm:$0xf]
          %v5142 = vld [vmem:[#allocation4 + $0x188] sm:$0xf]
          %v5143 = vld [vmem:[#allocation4 + $0x18c] sm:$0xf]
          %v5144 = vld [vmem:[#allocation4 + $0x190] sm:$0xf]
          %v5145 = vld [vmem:[#allocation4 + $0x194] sm:$0xf]
          %v5146 = vld [vmem:[#allocation4 + $0x198] sm:$0xf]
          %v5147 = vld [vmem:[#allocation4 + $0x19c] sm:$0xf]
          %v5148 = vld [vmem:[#allocation4 + $0x1a0] sm:$0xf]
          %v5149 = vld [vmem:[#allocation4 + $0x1a4] sm:$0xf]
          %v5150 = vld [vmem:[#allocation4 + $0x1a8] sm:$0xf]
          %v5151 = vld [vmem:[#allocation4 + $0x1ac] sm:$0xf]
          %v5152 = vld [vmem:[#allocation4 + $0x1b0] sm:$0xf]
          %v5153 = vld [vmem:[#allocation4 + $0x1b4] sm:$0xf]
          %v5154 = vld [vmem:[#allocation4 + $0x1b8] sm:$0xf]
          %v5155 = vld [vmem:[#allocation4 + $0x1bc] sm:$0xf]
          %v5156 = vld [vmem:[#allocation4 + $0x1c0] sm:$0xf]
          %v5157 = vld [vmem:[#allocation4 + $0x1c4] sm:$0xf]
          %v5158 = vld [vmem:[#allocation4 + $0x1c8] sm:$0xf]
          %v5159 = vld [vmem:[#allocation4 + $0x1cc] sm:$0xf]
          %v5160 = vld [vmem:[#allocation4 + $0x1d0] sm:$0xf]
          %v5161 = vld [vmem:[#allocation4 + $0x1d4] sm:$0xf]
          %v5162 = vld [vmem:[#allocation4 + $0x1d8] sm:$0xf]
          %v5163 = vld [vmem:[#allocation4 + $0x1dc] sm:$0xf]
          %v5164 = vld [vmem:[#allocation4 + $0x1e0] sm:$0xf]
          %v5165 = vld [vmem:[#allocation4 + $0x1e4] sm:$0xf]
          %v5166 = vld [vmem:[#allocation4 + $0x1e8] sm:$0xf]
          %v5167 = vld [vmem:[#allocation4 + $0x1ec] sm:$0xf]
          %v5168 = vld [vmem:[#allocation4 + $0x1f0] sm:$0xf]
          %v5169 = vld [vmem:[#allocation4 + $0x1f4] sm:$0xf]
          %v5170 = vld [vmem:[#allocation4 + $0x1f8] sm:$0xf]
          %v5171 = vld [vmem:[#allocation4 + $0x1fc] sm:$0xf]
          %v5172 = vld [vmem:[#allocation4 + $0x200] sm:$0xf]
          %v5173 = vld [vmem:[#allocation4 + $0x204] sm:$0xf]
          %v5174 = vld [vmem:[#allocation4 + $0x208] sm:$0xf]
          %v5175 = vld [vmem:[#allocation4 + $0x20c] sm:$0xf]
          %v5176 = vld [vmem:[#allocation4 + $0x210] sm:$0xf]
          %v5177 = vld [vmem:[#allocation4 + $0x214] sm:$0xf]
          %v5178 = vld [vmem:[#allocation4 + $0x218] sm:$0xf]
          %v5179 = vld [vmem:[#allocation4 + $0x21c] sm:$0xf]
          %v5180 = vld [vmem:[#allocation4 + $0x220] sm:$0xf]
          %v5181 = vld [vmem:[#allocation4 + $0x224] sm:$0xf]
          %v5182 = vld [vmem:[#allocation4 + $0x228] sm:$0xf]
          %v5183 = vld [vmem:[#allocation4 + $0x22c] sm:$0xf]
          %v5184 = vld [vmem:[#allocation4 + $0x230] sm:$0xf]
          %v5185 = vld [vmem:[#allocation4 + $0x234] sm:$0xf]
          %v5186 = vld [vmem:[#allocation4 + $0x238] sm:$0xf]
          %v5187 = vld [vmem:[#allocation4 + $0x23c] sm:$0xf]
          %v5188 = vld [vmem:[#allocation4 + $0x240] sm:$0xf]
          %v5189 = vld [vmem:[#allocation4 + $0x244] sm:$0xf]
          %v5190 = vld [vmem:[#allocation4 + $0x248] sm:$0xf]
          %v5191 = vld [vmem:[#allocation4 + $0x24c] sm:$0xf]
          %v5192 = vld [vmem:[#allocation4 + $0x250] sm:$0xf]
          %v5193 = vld [vmem:[#allocation4 + $0x254] sm:$0xf]
          %v5194 = vld [vmem:[#allocation4 + $0x258] sm:$0xf]
          %v5195 = vld [vmem:[#allocation4 + $0x25c] sm:$0xf]
          %v5196 = vld [vmem:[#allocation4 + $0x260] sm:$0xf]
          %v5197 = vld [vmem:[#allocation4 + $0x264] sm:$0xf]
          %v5198 = vld [vmem:[#allocation4 + $0x268] sm:$0xf]
          %v5199 = vld [vmem:[#allocation4 + $0x26c] sm:$0xf]
          %v5200 = vld [vmem:[#allocation4 + $0x270] sm:$0xf]
          %v5201 = vld [vmem:[#allocation4 + $0x274] sm:$0xf]
          %v5202 = vld [vmem:[#allocation4 + $0x278] sm:$0xf]
          %v5203 = vld [vmem:[#allocation4 + $0x27c] sm:$0xf]
          %v5204 = vld [vmem:[#allocation4 + $0x280] sm:$0xf]
          %v5205 = vld [vmem:[#allocation4 + $0x284] sm:$0xf]
          %v5206 = vld [vmem:[#allocation4 + $0x288] sm:$0xf]
          %v5207 = vld [vmem:[#allocation4 + $0x28c] sm:$0xf]
          %v5208 = vld [vmem:[#allocation4 + $0x290] sm:$0xf]
          %v5209 = vld [vmem:[#allocation4 + $0x294] sm:$0xf]
          %v5210 = vld [vmem:[#allocation4 + $0x298] sm:$0xf]
          %v5211 = vld [vmem:[#allocation4 + $0x29c] sm:$0xf]
          %v5212 = vld [vmem:[#allocation4 + $0x2a0] sm:$0xf]
          %v5213 = vld [vmem:[#allocation4 + $0x2a4] sm:$0xf]
          %v5214 = vld [vmem:[#allocation4 + $0x2a8] sm:$0xf]
          %v5215 = vld [vmem:[#allocation4 + $0x2ac] sm:$0xf]
          %v5216 = vld [vmem:[#allocation4 + $0x2b0] sm:$0xf]
          %v5217 = vld [vmem:[#allocation4 + $0x2b4] sm:$0xf]
          %v5218 = vld [vmem:[#allocation4 + $0x2b8] sm:$0xf]
          %v5219 = vld [vmem:[#allocation4 + $0x2bc] sm:$0xf]
          %v5220 = vld [vmem:[#allocation4 + $0x2c0] sm:$0xf]
          %v5221 = vld [vmem:[#allocation4 + $0x2c4] sm:$0xf]
          %v5222 = vld [vmem:[#allocation4 + $0x2c8] sm:$0xf]
          %v5223 = vld [vmem:[#allocation4 + $0x2cc] sm:$0xf]
          %v5224 = vld [vmem:[#allocation4 + $0x2d0] sm:$0xf]
          %v5225 = vld [vmem:[#allocation4 + $0x2d4] sm:$0xf]
          %v5226 = vld [vmem:[#allocation4 + $0x2d8] sm:$0xf]
          %v5227 = vld [vmem:[#allocation4 + $0x2dc] sm:$0xf]
          %v5228 = vld [vmem:[#allocation4 + $0x2e0] sm:$0xf]
          %v5229 = vld [vmem:[#allocation4 + $0x2e4] sm:$0xf]
          %v5230 = vld [vmem:[#allocation4 + $0x2e8] sm:$0xf]
          %v5231 = vld [vmem:[#allocation4 + $0x2ec] sm:$0xf]
          %v5232 = vld [vmem:[#allocation4 + $0x2f0] sm:$0xf]
          %v5233 = vld [vmem:[#allocation4 + $0x2f4] sm:$0xf]
          %v5234 = vld [vmem:[#allocation4 + $0x2f8] sm:$0xf]
          %v5235 = vld [vmem:[#allocation4 + $0x2fc] sm:$0xf]
          %v5236 = vld [vmem:[#allocation4 + $0x300] sm:$0xf]
          %v5237 = vld [vmem:[#allocation4 + $0x304] sm:$0xf]
          %v5238 = vld [vmem:[#allocation4 + $0x308] sm:$0xf]
          %v5239 = vld [vmem:[#allocation4 + $0x30c] sm:$0xf]
          %v5240 = vld [vmem:[#allocation4 + $0x310] sm:$0xf]
          %v5241 = vld [vmem:[#allocation4 + $0x314] sm:$0xf]
          %v5242 = vld [vmem:[#allocation4 + $0x318] sm:$0xf]
          %v5243 = vld [vmem:[#allocation4 + $0x31c] sm:$0xf]
          %v5244 = vld [vmem:[#allocation4 + $0x320] sm:$0xf]
          %v5245 = vld [vmem:[#allocation4 + $0x324] sm:$0xf]
          %v5246 = vld [vmem:[#allocation4 + $0x328] sm:$0xf]
          %v5247 = vld [vmem:[#allocation4 + $0x32c] sm:$0xf]
          %v5248 = vld [vmem:[#allocation4 + $0x330] sm:$0xf]
          %v5249 = vld [vmem:[#allocation4 + $0x334] sm:$0xf]
          %v5250 = vld [vmem:[#allocation4 + $0x338] sm:$0xf]
          %v5251 = vld [vmem:[#allocation4 + $0x33c] sm:$0xf]
          %v5252 = vld [vmem:[#allocation4 + $0x340] sm:$0xf]
          %v5253 = vld [vmem:[#allocation4 + $0x344] sm:$0xf]
          %v5254 = vld [vmem:[#allocation4 + $0x348] sm:$0xf]
          %v5255 = vld [vmem:[#allocation4 + $0x34c] sm:$0xf]
          %v5256 = vld [vmem:[#allocation4 + $0x350] sm:$0xf]
          %v5257 = vld [vmem:[#allocation4 + $0x354] sm:$0xf]
          %v5258 = vld [vmem:[#allocation4 + $0x358] sm:$0xf]
          %v5259 = vld [vmem:[#allocation4 + $0x35c] sm:$0xf]
          %v5260 = vld [vmem:[#allocation4 + $0x360] sm:$0xf]
          %v5261 = vld [vmem:[#allocation4 + $0x364] sm:$0xf]
          %v5262 = vld [vmem:[#allocation4 + $0x368] sm:$0xf]
          %v5263 = vld [vmem:[#allocation4 + $0x36c] sm:$0xf]
          %v5264 = vld [vmem:[#allocation4 + $0x370] sm:$0xf]
          %v5265 = vld [vmem:[#allocation4 + $0x374] sm:$0xf]
          %v5266 = vld [vmem:[#allocation4 + $0x378] sm:$0xf]
          %v5267 = vld [vmem:[#allocation4 + $0x37c] sm:$0xf]
          %v5268 = vld [vmem:[#allocation4 + $0x380] sm:$0xf]
          %v5269 = vld [vmem:[#allocation4 + $0x384] sm:$0xf]
          %v5270 = vld [vmem:[#allocation4 + $0x388] sm:$0xf]
          %v5271 = vld [vmem:[#allocation4 + $0x38c] sm:$0xf]
          %v5272 = vld [vmem:[#allocation4 + $0x390] sm:$0xf]
          %v5273 = vld [vmem:[#allocation4 + $0x394] sm:$0xf]
          %v5274 = vld [vmem:[#allocation4 + $0x398] sm:$0xf]
          %v5275 = vld [vmem:[#allocation4 + $0x39c] sm:$0xf]
          %v5276 = vld [vmem:[#allocation4 + $0x3a0] sm:$0xf]
          %v5277 = vld [vmem:[#allocation4 + $0x3a4] sm:$0xf]
          %v5278 = vld [vmem:[#allocation4 + $0x3a8] sm:$0xf]
          %v5279 = vld [vmem:[#allocation4 + $0x3ac] sm:$0xf]
          %v5280 = vld [vmem:[#allocation4 + $0x3b0] sm:$0xf]
          %v5281 = vld [vmem:[#allocation4 + $0x3b4] sm:$0xf]
          %v5282 = vld [vmem:[#allocation4 + $0x3b8] sm:$0xf]
          %v5283 = vld [vmem:[#allocation4 + $0x3bc] sm:$0xf]
          %v5284 = vld [vmem:[#allocation4 + $0x3c0] sm:$0xf]
          %v5285 = vld [vmem:[#allocation4 + $0x3c4] sm:$0xf]
          %v5286 = vld [vmem:[#allocation4 + $0x3c8] sm:$0xf]
          %v5287 = vld [vmem:[#allocation4 + $0x3cc] sm:$0xf]
          %v5288 = vld [vmem:[#allocation4 + $0x3d0] sm:$0xf]
          %v5289 = vld [vmem:[#allocation4 + $0x3d4] sm:$0xf]
          %v5290 = vld [vmem:[#allocation4 + $0x3d8] sm:$0xf]
          %v5291 = vld [vmem:[#allocation4 + $0x3dc] sm:$0xf]
          %v5292 = vld [vmem:[#allocation4 + $0x3e0] sm:$0xf]
          %v5293 = vld [vmem:[#allocation4 + $0x3e4] sm:$0xf]
          %v5294 = vld [vmem:[#allocation4 + $0x3e8] sm:$0xf]
          %v5295 = vld [vmem:[#allocation4 + $0x3ec] sm:$0xf]
          %v5296 = vld [vmem:[#allocation4 + $0x3f0] sm:$0xf]
          %v5297 = vld [vmem:[#allocation4 + $0x3f4] sm:$0xf]
          %v5298 = vld [vmem:[#allocation4 + $0x3f8] sm:$0xf]
          %v5299 = vld [vmem:[#allocation4 + $0x3fc] sm:$0xf]
          %v5300 = vld [vmem:[%s3] sm:$0x1]
          %v5302 = vperm.slane %v5300, 0
          %v5560 = vunpack.c.l.b16 %v5044
          %v5561 = vunpack.c.l.b16 %v5045
          %v5562 = vunpack.c.l.b16 %v5046
          %v5563 = vunpack.c.l.b16 %v5047
          %v5564 = vunpack.c.l.b16 %v5048
          %v5565 = vunpack.c.l.b16 %v5049
          %v5566 = vunpack.c.l.b16 %v5050
          %v5567 = vunpack.c.l.b16 %v5051
          %v5568 = vunpack.c.l.b16 %v5052
          %v5569 = vunpack.c.l.b16 %v5053
          %v5570 = vunpack.c.l.b16 %v5054
          %v5571 = vunpack.c.l.b16 %v5055
          %v5572 = vunpack.c.l.b16 %v5056
          %v5573 = vunpack.c.l.b16 %v5057
          %v5574 = vunpack.c.l.b16 %v5058
          %v5575 = vunpack.c.l.b16 %v5059
          %v5576 = vunpack.c.l.b16 %v5060
          %v5577 = vunpack.c.l.b16 %v5061
          %v5578 = vunpack.c.l.b16 %v5062
          %v5579 = vunpack.c.l.b16 %v5063
          %v5580 = vunpack.c.l.b16 %v5064
          %v5581 = vunpack.c.l.b16 %v5065
          %v5582 = vunpack.c.l.b16 %v5066
          %v5583 = vunpack.c.l.b16 %v5067
          %v5584 = vunpack.c.l.b16 %v5068
          %v5585 = vunpack.c.l.b16 %v5069
          %v5586 = vunpack.c.l.b16 %v5070
          %v5587 = vunpack.c.l.b16 %v5071
          %v5588 = vunpack.c.l.b16 %v5072
          %v5589 = vunpack.c.l.b16 %v5073
          %v5590 = vunpack.c.l.b16 %v5074
          %v5591 = vunpack.c.l.b16 %v5075
          %v5592 = vunpack.c.l.b16 %v5076
          %v5593 = vunpack.c.l.b16 %v5077
          %v5594 = vunpack.c.l.b16 %v5078
          %v5595 = vunpack.c.l.b16 %v5079
          %v5596 = vunpack.c.l.b16 %v5080
          %v5597 = vunpack.c.l.b16 %v5081
          %v5598 = vunpack.c.l.b16 %v5082
          %v5599 = vunpack.c.l.b16 %v5083
          %v5600 = vunpack.c.l.b16 %v5084
          %v5601 = vunpack.c.l.b16 %v5085
          %v5602 = vunpack.c.l.b16 %v5086
          %v5603 = vunpack.c.l.b16 %v5087
          %v5604 = vunpack.c.l.b16 %v5088
          %v5605 = vunpack.c.l.b16 %v5089
          %v5606 = vunpack.c.l.b16 %v5090
          %v5607 = vunpack.c.l.b16 %v5091
          %v5608 = vunpack.c.l.b16 %v5092
          %v5609 = vunpack.c.l.b16 %v5093
          %v5610 = vunpack.c.l.b16 %v5094
          %v5611 = vunpack.c.l.b16 %v5095
          %v5612 = vunpack.c.l.b16 %v5096
          %v5613 = vunpack.c.l.b16 %v5097
          %v5614 = vunpack.c.l.b16 %v5098
          %v5615 = vunpack.c.l.b16 %v5099
          %v5616 = vunpack.c.l.b16 %v5100
          %v5617 = vunpack.c.l.b16 %v5101
          %v5618 = vunpack.c.l.b16 %v5102
          %v5619 = vunpack.c.l.b16 %v5103
          %v5620 = vunpack.c.l.b16 %v5104
          %v5621 = vunpack.c.l.b16 %v5105
          %v5622 = vunpack.c.l.b16 %v5106
          %v5623 = vunpack.c.l.b16 %v5107
          %v5624 = vunpack.c.l.b16 %v5108
          %v5625 = vunpack.c.l.b16 %v5109
          %v5626 = vunpack.c.l.b16 %v5110
          %v5627 = vunpack.c.l.b16 %v5111
          %v5628 = vunpack.c.l.b16 %v5112
          %v5629 = vunpack.c.l.b16 %v5113
          %v5630 = vunpack.c.l.b16 %v5114
          %v5631 = vunpack.c.l.b16 %v5115
          %v5632 = vunpack.c.l.b16 %v5116
          %v5633 = vunpack.c.l.b16 %v5117
          %v5634 = vunpack.c.l.b16 %v5118
          %v5635 = vunpack.c.l.b16 %v5119
          %v5636 = vunpack.c.l.b16 %v5120
          %v5637 = vunpack.c.l.b16 %v5121
          %v5638 = vunpack.c.l.b16 %v5122
          %v5639 = vunpack.c.l.b16 %v5123
          %v5640 = vunpack.c.l.b16 %v5124
          %v5641 = vunpack.c.l.b16 %v5125
          %v5642 = vunpack.c.l.b16 %v5126
          %v5643 = vunpack.c.l.b16 %v5127
          %v5644 = vunpack.c.l.b16 %v5128
          %v5645 = vunpack.c.l.b16 %v5129
          %v5646 = vunpack.c.l.b16 %v5130
          %v5647 = vunpack.c.l.b16 %v5131
          %v5648 = vunpack.c.l.b16 %v5132
          %v5649 = vunpack.c.l.b16 %v5133
          %v5650 = vunpack.c.l.b16 %v5134
          %v5651 = vunpack.c.l.b16 %v5135
          %v5652 = vunpack.c.l.b16 %v5136
          %v5653 = vunpack.c.l.b16 %v5137
          %v5654 = vunpack.c.l.b16 %v5138
          %v5655 = vunpack.c.l.b16 %v5139
          %v5656 = vunpack.c.l.b16 %v5140
          %v5657 = vunpack.c.l.b16 %v5141
          %v5658 = vunpack.c.l.b16 %v5142
          %v5659 = vunpack.c.l.b16 %v5143
          %v5660 = vunpack.c.l.b16 %v5144
          %v5661 = vunpack.c.l.b16 %v5145
          %v5662 = vunpack.c.l.b16 %v5146
          %v5663 = vunpack.c.l.b16 %v5147
          %v5664 = vunpack.c.l.b16 %v5148
          %v5665 = vunpack.c.l.b16 %v5149
          %v5666 = vunpack.c.l.b16 %v5150
          %v5667 = vunpack.c.l.b16 %v5151
          %v5668 = vunpack.c.l.b16 %v5152
          %v5669 = vunpack.c.l.b16 %v5153
          %v5670 = vunpack.c.l.b16 %v5154
          %v5671 = vunpack.c.l.b16 %v5155
          %v5672 = vunpack.c.l.b16 %v5156
          %v5673 = vunpack.c.l.b16 %v5157
          %v5674 = vunpack.c.l.b16 %v5158
          %v5675 = vunpack.c.l.b16 %v5159
          %v5676 = vunpack.c.l.b16 %v5160
          %v5677 = vunpack.c.l.b16 %v5161
          %v5678 = vunpack.c.l.b16 %v5162
          %v5679 = vunpack.c.l.b16 %v5163
          %v5680 = vunpack.c.l.b16 %v5164
          %v5681 = vunpack.c.l.b16 %v5165
          %v5682 = vunpack.c.l.b16 %v5166
          %v5683 = vunpack.c.l.b16 %v5167
          %v5684 = vunpack.c.l.b16 %v5168
          %v5685 = vunpack.c.l.b16 %v5169
          %v5686 = vunpack.c.l.b16 %v5170
          %v5687 = vunpack.c.l.b16 %v5171
          %v5688 = vunpack.c.l.b16 %v5172
          %v5689 = vunpack.c.l.b16 %v5173
          %v5690 = vunpack.c.l.b16 %v5174
          %v5691 = vunpack.c.l.b16 %v5175
          %v5692 = vunpack.c.l.b16 %v5176
          %v5693 = vunpack.c.l.b16 %v5177
          %v5694 = vunpack.c.l.b16 %v5178
          %v5695 = vunpack.c.l.b16 %v5179
          %v5696 = vunpack.c.l.b16 %v5180
          %v5697 = vunpack.c.l.b16 %v5181
          %v5698 = vunpack.c.l.b16 %v5182
          %v5699 = vunpack.c.l.b16 %v5183
          %v5700 = vunpack.c.l.b16 %v5184
          %v5701 = vunpack.c.l.b16 %v5185
          %v5702 = vunpack.c.l.b16 %v5186
          %v5703 = vunpack.c.l.b16 %v5187
          %v5704 = vunpack.c.l.b16 %v5188
          %v5705 = vunpack.c.l.b16 %v5189
          %v5706 = vunpack.c.l.b16 %v5190
          %v5707 = vunpack.c.l.b16 %v5191
          %v5708 = vunpack.c.l.b16 %v5192
          %v5709 = vunpack.c.l.b16 %v5193
          %v5710 = vunpack.c.l.b16 %v5194
          %v5711 = vunpack.c.l.b16 %v5195
          %v5712 = vunpack.c.l.b16 %v5196
          %v5713 = vunpack.c.l.b16 %v5197
          %v5714 = vunpack.c.l.b16 %v5198
          %v5715 = vunpack.c.l.b16 %v5199
          %v5716 = vunpack.c.l.b16 %v5200
          %v5717 = vunpack.c.l.b16 %v5201
          %v5718 = vunpack.c.l.b16 %v5202
          %v5719 = vunpack.c.l.b16 %v5203
          %v5720 = vunpack.c.l.b16 %v5204
          %v5721 = vunpack.c.l.b16 %v5205
          %v5722 = vunpack.c.l.b16 %v5206
          %v5723 = vunpack.c.l.b16 %v5207
          %v5724 = vunpack.c.l.b16 %v5208
          %v5725 = vunpack.c.l.b16 %v5209
          %v5726 = vunpack.c.l.b16 %v5210
          %v5727 = vunpack.c.l.b16 %v5211
          %v5728 = vunpack.c.l.b16 %v5212
          %v5729 = vunpack.c.l.b16 %v5213
          %v5730 = vunpack.c.l.b16 %v5214
          %v5731 = vunpack.c.l.b16 %v5215
          %v5732 = vunpack.c.l.b16 %v5216
          %v5733 = vunpack.c.l.b16 %v5217
          %v5734 = vunpack.c.l.b16 %v5218
          %v5735 = vunpack.c.l.b16 %v5219
          %v5736 = vunpack.c.l.b16 %v5220
          %v5737 = vunpack.c.l.b16 %v5221
          %v5738 = vunpack.c.l.b16 %v5222
          %v5739 = vunpack.c.l.b16 %v5223
          %v5740 = vunpack.c.l.b16 %v5224
          %v5741 = vunpack.c.l.b16 %v5225
          %v5742 = vunpack.c.l.b16 %v5226
          %v5743 = vunpack.c.l.b16 %v5227
          %v5744 = vunpack.c.l.b16 %v5228
          %v5745 = vunpack.c.l.b16 %v5229
          %v5746 = vunpack.c.l.b16 %v5230
          %v5747 = vunpack.c.l.b16 %v5231
          %v5748 = vunpack.c.l.b16 %v5232
          %v5749 = vunpack.c.l.b16 %v5233
          %v5750 = vunpack.c.l.b16 %v5234
          %v5751 = vunpack.c.l.b16 %v5235
          %v5752 = vunpack.c.l.b16 %v5236
          %v5753 = vunpack.c.l.b16 %v5237
          %v5754 = vunpack.c.l.b16 %v5238
          %v5755 = vunpack.c.l.b16 %v5239
          %v5756 = vunpack.c.l.b16 %v5240
          %v5757 = vunpack.c.l.b16 %v5241
          %v5758 = vunpack.c.l.b16 %v5242
          %v5759 = vunpack.c.l.b16 %v5243
          %v5760 = vunpack.c.l.b16 %v5244
          %v5761 = vunpack.c.l.b16 %v5245
          %v5762 = vunpack.c.l.b16 %v5246
          %v5763 = vunpack.c.l.b16 %v5247
          %v5764 = vunpack.c.l.b16 %v5248
          %v5765 = vunpack.c.l.b16 %v5249
          %v5766 = vunpack.c.l.b16 %v5250
          %v5767 = vunpack.c.l.b16 %v5251
          %v5768 = vunpack.c.l.b16 %v5252
          %v5769 = vunpack.c.l.b16 %v5253
          %v5770 = vunpack.c.l.b16 %v5254
          %v5771 = vunpack.c.l.b16 %v5255
          %v5772 = vunpack.c.l.b16 %v5256
          %v5773 = vunpack.c.l.b16 %v5257
          %v5774 = vunpack.c.l.b16 %v5258
          %v5775 = vunpack.c.l.b16 %v5259
          %v5776 = vunpack.c.l.b16 %v5260
          %v5777 = vunpack.c.l.b16 %v5261
          %v5778 = vunpack.c.l.b16 %v5262
          %v5779 = vunpack.c.l.b16 %v5263
          %v5780 = vunpack.c.l.b16 %v5264
          %v5781 = vunpack.c.l.b16 %v5265
          %v5782 = vunpack.c.l.b16 %v5266
          %v5783 = vunpack.c.l.b16 %v5267
          %v5784 = vunpack.c.l.b16 %v5268
          %v5785 = vunpack.c.l.b16 %v5269
          %v5786 = vunpack.c.l.b16 %v5270
          %v5787 = vunpack.c.l.b16 %v5271
          %v5788 = vunpack.c.l.b16 %v5272
          %v5789 = vunpack.c.l.b16 %v5273
          %v5790 = vunpack.c.l.b16 %v5274
          %v5791 = vunpack.c.l.b16 %v5275
          %v5792 = vunpack.c.l.b16 %v5276
          %v5793 = vunpack.c.l.b16 %v5277
          %v5794 = vunpack.c.l.b16 %v5278
          %v5795 = vunpack.c.l.b16 %v5279
          %v5796 = vunpack.c.l.b16 %v5280
          %v5797 = vunpack.c.l.b16 %v5281
          %v5798 = vunpack.c.l.b16 %v5282
          %v5799 = vunpack.c.l.b16 %v5283
          %v5800 = vunpack.c.l.b16 %v5284
          %v5801 = vunpack.c.l.b16 %v5285
          %v5802 = vunpack.c.l.b16 %v5286
          %v5803 = vunpack.c.l.b16 %v5287
          %v5804 = vunpack.c.l.b16 %v5288
          %v5805 = vunpack.c.l.b16 %v5289
          %v5806 = vunpack.c.l.b16 %v5290
          %v5807 = vunpack.c.l.b16 %v5291
          %v5808 = vunpack.c.l.b16 %v5292
          %v5809 = vunpack.c.l.b16 %v5293
          %v5810 = vunpack.c.l.b16 %v5294
          %v5811 = vunpack.c.l.b16 %v5295
          %v5812 = vunpack.c.l.b16 %v5296
          %v5813 = vunpack.c.l.b16 %v5297
          %v5814 = vunpack.c.l.b16 %v5298
          %v5815 = vunpack.c.l.b16 %v5299
          %v5816 = vpack.c.b16 %v5561, %v5560
          %v5817 = vpack.c.b16 %v5563, %v5562
          %v5818 = vpack.c.b16 %v5565, %v5564
          %v5819 = vpack.c.b16 %v5567, %v5566
          %v5820 = vpack.c.b16 %v5569, %v5568
          %v5821 = vpack.c.b16 %v5571, %v5570
          %v5822 = vpack.c.b16 %v5573, %v5572
          %v5823 = vpack.c.b16 %v5575, %v5574
          %v5824 = vpack.c.b16 %v5577, %v5576
          %v5825 = vpack.c.b16 %v5579, %v5578
          %v5826 = vpack.c.b16 %v5581, %v5580
          %v5827 = vpack.c.b16 %v5583, %v5582
          %v5828 = vpack.c.b16 %v5585, %v5584
          %v5829 = vpack.c.b16 %v5587, %v5586
          %v5830 = vpack.c.b16 %v5589, %v5588
          %v5831 = vpack.c.b16 %v5591, %v5590
          %v5832 = vpack.c.b16 %v5593, %v5592
          %v5833 = vpack.c.b16 %v5595, %v5594
          %v5834 = vpack.c.b16 %v5597, %v5596
          %v5835 = vpack.c.b16 %v5599, %v5598
          %v5836 = vpack.c.b16 %v5601, %v5600
          %v5837 = vpack.c.b16 %v5603, %v5602
          %v5838 = vpack.c.b16 %v5605, %v5604
          %v5839 = vpack.c.b16 %v5607, %v5606
          %v5840 = vpack.c.b16 %v5609, %v5608
          %v5841 = vpack.c.b16 %v5611, %v5610
          %v5842 = vpack.c.b16 %v5613, %v5612
          %v5843 = vpack.c.b16 %v5615, %v5614
          %v5844 = vpack.c.b16 %v5617, %v5616
          %v5845 = vpack.c.b16 %v5619, %v5618
          %v5846 = vpack.c.b16 %v5621, %v5620
          %v5847 = vpack.c.b16 %v5623, %v5622
          %v5848 = vpack.c.b16 %v5625, %v5624
          %v5849 = vpack.c.b16 %v5627, %v5626
          %v5850 = vpack.c.b16 %v5629, %v5628
          %v5851 = vpack.c.b16 %v5631, %v5630
          %v5852 = vpack.c.b16 %v5633, %v5632
          %v5853 = vpack.c.b16 %v5635, %v5634
          %v5854 = vpack.c.b16 %v5637, %v5636
          %v5855 = vpack.c.b16 %v5639, %v5638
          %v5856 = vpack.c.b16 %v5641, %v5640
          %v5857 = vpack.c.b16 %v5643, %v5642
          %v5858 = vpack.c.b16 %v5645, %v5644
          %v5859 = vpack.c.b16 %v5647, %v5646
          %v5860 = vpack.c.b16 %v5649, %v5648
          %v5861 = vpack.c.b16 %v5651, %v5650
          %v5862 = vpack.c.b16 %v5653, %v5652
          %v5863 = vpack.c.b16 %v5655, %v5654
          %v5864 = vpack.c.b16 %v5657, %v5656
          %v5865 = vpack.c.b16 %v5659, %v5658
          %v5866 = vpack.c.b16 %v5661, %v5660
          %v5867 = vpack.c.b16 %v5663, %v5662
          %v5868 = vpack.c.b16 %v5665, %v5664
          %v5869 = vpack.c.b16 %v5667, %v5666
          %v5870 = vpack.c.b16 %v5669, %v5668
          %v5871 = vpack.c.b16 %v5671, %v5670
          %v5872 = vpack.c.b16 %v5673, %v5672
          %v5873 = vpack.c.b16 %v5675, %v5674
          %v5874 = vpack.c.b16 %v5677, %v5676
          %v5875 = vpack.c.b16 %v5679, %v5678
          %v5876 = vpack.c.b16 %v5681, %v5680
          %v5877 = vpack.c.b16 %v5683, %v5682
          %v5878 = vpack.c.b16 %v5685, %v5684
          %v5879 = vpack.c.b16 %v5687, %v5686
          %v5880 = vpack.c.b16 %v5689, %v5688
          %v5881 = vpack.c.b16 %v5691, %v5690
          %v5882 = vpack.c.b16 %v5693, %v5692
          %v5883 = vpack.c.b16 %v5695, %v5694
          %v5884 = vpack.c.b16 %v5697, %v5696
          %v5885 = vpack.c.b16 %v5699, %v5698
          %v5886 = vpack.c.b16 %v5701, %v5700
          %v5887 = vpack.c.b16 %v5703, %v5702
          %v5888 = vpack.c.b16 %v5705, %v5704
          %v5889 = vpack.c.b16 %v5707, %v5706
          %v5890 = vpack.c.b16 %v5709, %v5708
          %v5891 = vpack.c.b16 %v5711, %v5710
          %v5892 = vpack.c.b16 %v5713, %v5712
          %v5893 = vpack.c.b16 %v5715, %v5714
          %v5894 = vpack.c.b16 %v5717, %v5716
          %v5895 = vpack.c.b16 %v5719, %v5718
          %v5896 = vpack.c.b16 %v5721, %v5720
          %v5897 = vpack.c.b16 %v5723, %v5722
          %v5898 = vpack.c.b16 %v5725, %v5724
          %v5899 = vpack.c.b16 %v5727, %v5726
          %v5900 = vpack.c.b16 %v5729, %v5728
          %v5901 = vpack.c.b16 %v5731, %v5730
          %v5902 = vpack.c.b16 %v5733, %v5732
          %v5903 = vpack.c.b16 %v5735, %v5734
          %v5904 = vpack.c.b16 %v5737, %v5736
          %v5905 = vpack.c.b16 %v5739, %v5738
          %v5906 = vpack.c.b16 %v5741, %v5740
          %v5907 = vpack.c.b16 %v5743, %v5742
          %v5908 = vpack.c.b16 %v5745, %v5744
          %v5909 = vpack.c.b16 %v5747, %v5746
          %v5910 = vpack.c.b16 %v5749, %v5748
          %v5911 = vpack.c.b16 %v5751, %v5750
          %v5912 = vpack.c.b16 %v5753, %v5752
          %v5913 = vpack.c.b16 %v5755, %v5754
          %v5914 = vpack.c.b16 %v5757, %v5756
          %v5915 = vpack.c.b16 %v5759, %v5758
          %v5916 = vpack.c.b16 %v5761, %v5760
          %v5917 = vpack.c.b16 %v5763, %v5762
          %v5918 = vpack.c.b16 %v5765, %v5764
          %v5919 = vpack.c.b16 %v5767, %v5766
          %v5920 = vpack.c.b16 %v5769, %v5768
          %v5921 = vpack.c.b16 %v5771, %v5770
          %v5922 = vpack.c.b16 %v5773, %v5772
          %v5923 = vpack.c.b16 %v5775, %v5774
          %v5924 = vpack.c.b16 %v5777, %v5776
          %v5925 = vpack.c.b16 %v5779, %v5778
          %v5926 = vpack.c.b16 %v5781, %v5780
          %v5927 = vpack.c.b16 %v5783, %v5782
          %v5928 = vpack.c.b16 %v5785, %v5784
          %v5929 = vpack.c.b16 %v5787, %v5786
          %v5930 = vpack.c.b16 %v5789, %v5788
          %v5931 = vpack.c.b16 %v5791, %v5790
          %v5932 = vpack.c.b16 %v5793, %v5792
          %v5933 = vpack.c.b16 %v5795, %v5794
          %v5934 = vpack.c.b16 %v5797, %v5796
          %v5935 = vpack.c.b16 %v5799, %v5798
          %v5936 = vpack.c.b16 %v5801, %v5800
          %v5937 = vpack.c.b16 %v5803, %v5802
          %v5938 = vpack.c.b16 %v5805, %v5804
          %v5939 = vpack.c.b16 %v5807, %v5806
          %v5940 = vpack.c.b16 %v5809, %v5808
          %v5941 = vpack.c.b16 %v5811, %v5810
          %v5942 = vpack.c.b16 %v5813, %v5812
          %v5943 = vpack.c.b16 %v5815, %v5814
          %6072 = vmatpush.bf16.msra.mxu0 %v5823
          %6073 = vmatpush.bf16.msra.mxu0 %v5822
          %6074 = vmatpush.bf16.msra.mxu0 %v5821
          %6075 = vmatpush.bf16.msra.mxu0 %v5820
          %6076 = vmatpush.bf16.msra.mxu0 %v5819
          %6077 = vmatpush.bf16.msra.mxu0 %v5818
          %6078 = vmatpush.bf16.msra.mxu0 %v5817
          %6079 = vmatpush.bf16.msra.mxu0 %v5816
          %6080 = vmatmul.bf16.gmra.mxu0 %v5028
          %v6081 = vpop.f32.mrf.mxu0
          %v6082 = vadd.f32 %v5302, %v6081
          %v6083 = vpop.f32.mrf.mxu0
          %6084 = vdwg.mxu0
          %6085 = vmatpush.bf16.msra.mxu0 %v5831
          %6086 = vmatpush.bf16.msra.mxu0 %v5830
          %6087 = vmatpush.bf16.msra.mxu0 %v5829
          %6088 = vmatpush.bf16.msra.mxu0 %v5828
          %6089 = vmatpush.bf16.msra.mxu0 %v5827
          %6090 = vmatpush.bf16.msra.mxu0 %v5826
          %6091 = vmatpush.bf16.msra.mxu0 %v5825
          %6092 = vmatpush.bf16.msra.mxu0 %v5824
          %6093 = vmatmul.bf16.gmra.mxu0 %v5029
          %v6094 = vpop.f32.mrf.mxu0
          %v6095 = vadd.f32 %v6082, %v6094
          %v6096 = vpop.f32.mrf.mxu0
          %6097 = vdwg.mxu0
          %6098 = vmatpush.bf16.msra.mxu0 %v5839
          %6099 = vmatpush.bf16.msra.mxu0 %v5838
          %6100 = vmatpush.bf16.msra.mxu0 %v5837
          %6101 = vmatpush.bf16.msra.mxu0 %v5836
          %6102 = vmatpush.bf16.msra.mxu0 %v5835
          %6103 = vmatpush.bf16.msra.mxu0 %v5834
          %6104 = vmatpush.bf16.msra.mxu0 %v5833
          %6105 = vmatpush.bf16.msra.mxu0 %v5832
          %6106 = vmatmul.bf16.gmra.mxu0 %v5030
          %v6107 = vpop.f32.mrf.mxu0
          %v6108 = vadd.f32 %v6095, %v6107
          %v6109 = vpop.f32.mrf.mxu0
          %6110 = vdwg.mxu0
          %6111 = vmatpush.bf16.msra.mxu0 %v5847
          %6112 = vmatpush.bf16.msra.mxu0 %v5846
          %6113 = vmatpush.bf16.msra.mxu0 %v5845
          %6114 = vmatpush.bf16.msra.mxu0 %v5844
          %6115 = vmatpush.bf16.msra.mxu0 %v5843
          %6116 = vmatpush.bf16.msra.mxu0 %v5842
          %6117 = vmatpush.bf16.msra.mxu0 %v5841
          %6118 = vmatpush.bf16.msra.mxu0 %v5840
          %6119 = vmatmul.bf16.gmra.mxu0 %v5031
          %v6120 = vpop.f32.mrf.mxu0
          %v6121 = vadd.f32 %v6108, %v6120
          %v6122 = vpop.f32.mrf.mxu0
          %6123 = vdwg.mxu0
          %6124 = vmatpush.bf16.msra.mxu0 %v5855
          %6125 = vmatpush.bf16.msra.mxu0 %v5854
          %6126 = vmatpush.bf16.msra.mxu0 %v5853
          %6127 = vmatpush.bf16.msra.mxu0 %v5852
          %6128 = vmatpush.bf16.msra.mxu0 %v5851
          %6129 = vmatpush.bf16.msra.mxu0 %v5850
          %6130 = vmatpush.bf16.msra.mxu0 %v5849
          %6131 = vmatpush.bf16.msra.mxu0 %v5848
          %6132 = vmatmul.bf16.gmra.mxu0 %v5032
          %v6133 = vpop.f32.mrf.mxu0
          %v6134 = vadd.f32 %v6121, %v6133
          %v6135 = vpop.f32.mrf.mxu0
          %6136 = vdwg.mxu0
          %6137 = vmatpush.bf16.msra.mxu0 %v5863
          %6138 = vmatpush.bf16.msra.mxu0 %v5862
          %6139 = vmatpush.bf16.msra.mxu0 %v5861
          %6140 = vmatpush.bf16.msra.mxu0 %v5860
          %6141 = vmatpush.bf16.msra.mxu0 %v5859
          %6142 = vmatpush.bf16.msra.mxu0 %v5858
          %6143 = vmatpush.bf16.msra.mxu0 %v5857
          %6144 = vmatpush.bf16.msra.mxu0 %v5856
          %6145 = vmatmul.bf16.gmra.mxu0 %v5033
          %v6146 = vpop.f32.mrf.mxu0
          %v6147 = vadd.f32 %v6134, %v6146
          %v6148 = vpop.f32.mrf.mxu0
          %6149 = vdwg.mxu0
          %6150 = vmatpush.bf16.msra.mxu0 %v5871
          %6151 = vmatpush.bf16.msra.mxu0 %v5870
          %6152 = vmatpush.bf16.msra.mxu0 %v5869
          %6153 = vmatpush.bf16.msra.mxu0 %v5868
          %6154 = vmatpush.bf16.msra.mxu0 %v5867
          %6155 = vmatpush.bf16.msra.mxu0 %v5866
          %6156 = vmatpush.bf16.msra.mxu0 %v5865
          %6157 = vmatpush.bf16.msra.mxu0 %v5864
          %6158 = vmatmul.bf16.gmra.mxu0 %v5034
          %v6159 = vpop.f32.mrf.mxu0
          %v6160 = vadd.f32 %v6147, %v6159
          %v6161 = vpop.f32.mrf.mxu0
          %6162 = vdwg.mxu0
          %6163 = vmatpush.bf16.msra.mxu0 %v5879
          %6164 = vmatpush.bf16.msra.mxu0 %v5878
          %6165 = vmatpush.bf16.msra.mxu0 %v5877
          %6166 = vmatpush.bf16.msra.mxu0 %v5876
          %6167 = vmatpush.bf16.msra.mxu0 %v5875
          %6168 = vmatpush.bf16.msra.mxu0 %v5874
          %6169 = vmatpush.bf16.msra.mxu0 %v5873
          %6170 = vmatpush.bf16.msra.mxu0 %v5872
          %6171 = vmatmul.bf16.gmra.mxu0 %v5035
          %v6172 = vpop.f32.mrf.mxu0
          %v6173 = vadd.f32 %v6160, %v6172
          %v6174 = vpop.f32.mrf.mxu0
          %6175 = vdwg.mxu0
          %6176 = vmatpush.bf16.msra.mxu0 %v5887
          %6177 = vmatpush.bf16.msra.mxu0 %v5886
          %6178 = vmatpush.bf16.msra.mxu0 %v5885
          %6179 = vmatpush.bf16.msra.mxu0 %v5884
          %6180 = vmatpush.bf16.msra.mxu0 %v5883
          %6181 = vmatpush.bf16.msra.mxu0 %v5882
          %6182 = vmatpush.bf16.msra.mxu0 %v5881
          %6183 = vmatpush.bf16.msra.mxu0 %v5880
          %6184 = vmatmul.bf16.gmra.mxu0 %v5036
          %v6185 = vpop.f32.mrf.mxu0
          %v6186 = vadd.f32 %v6173, %v6185
          %v6187 = vpop.f32.mrf.mxu0
          %6188 = vdwg.mxu0
          %6189 = vmatpush.bf16.msra.mxu0 %v5895
          %6190 = vmatpush.bf16.msra.mxu0 %v5894
          %6191 = vmatpush.bf16.msra.mxu0 %v5893
          %6192 = vmatpush.bf16.msra.mxu0 %v5892
          %6193 = vmatpush.bf16.msra.mxu0 %v5891
          %6194 = vmatpush.bf16.msra.mxu0 %v5890
          %6195 = vmatpush.bf16.msra.mxu0 %v5889
          %6196 = vmatpush.bf16.msra.mxu0 %v5888
          %6197 = vmatmul.bf16.gmra.mxu0 %v5037
          %v6198 = vpop.f32.mrf.mxu0
          %v6199 = vadd.f32 %v6186, %v6198
          %v6200 = vpop.f32.mrf.mxu0
          %6201 = vdwg.mxu0
          %6202 = vmatpush.bf16.msra.mxu0 %v5903
          %6203 = vmatpush.bf16.msra.mxu0 %v5902
          %6204 = vmatpush.bf16.msra.mxu0 %v5901
          %6205 = vmatpush.bf16.msra.mxu0 %v5900
          %6206 = vmatpush.bf16.msra.mxu0 %v5899
          %6207 = vmatpush.bf16.msra.mxu0 %v5898
          %6208 = vmatpush.bf16.msra.mxu0 %v5897
          %6209 = vmatpush.bf16.msra.mxu0 %v5896
          %6210 = vmatmul.bf16.gmra.mxu0 %v5038
          %v6211 = vpop.f32.mrf.mxu0
          %v6212 = vadd.f32 %v6199, %v6211
          %v6213 = vpop.f32.mrf.mxu0
          %6214 = vdwg.mxu0
          %6215 = vmatpush.bf16.msra.mxu0 %v5911
          %6216 = vmatpush.bf16.msra.mxu0 %v5910
          %6217 = vmatpush.bf16.msra.mxu0 %v5909
          %6218 = vmatpush.bf16.msra.mxu0 %v5908
          %6219 = vmatpush.bf16.msra.mxu0 %v5907
          %6220 = vmatpush.bf16.msra.mxu0 %v5906
          %6221 = vmatpush.bf16.msra.mxu0 %v5905
          %6222 = vmatpush.bf16.msra.mxu0 %v5904
          %6223 = vmatmul.bf16.gmra.mxu0 %v5039
          %v6224 = vpop.f32.mrf.mxu0
          %v6225 = vadd.f32 %v6212, %v6224
          %v6226 = vpop.f32.mrf.mxu0
          %6227 = vdwg.mxu0
          %6228 = vmatpush.bf16.msra.mxu0 %v5919
          %6229 = vmatpush.bf16.msra.mxu0 %v5918
          %6230 = vmatpush.bf16.msra.mxu0 %v5917
          %6231 = vmatpush.bf16.msra.mxu0 %v5916
          %6232 = vmatpush.bf16.msra.mxu0 %v5915
          %6233 = vmatpush.bf16.msra.mxu0 %v5914
          %6234 = vmatpush.bf16.msra.mxu0 %v5913
          %6235 = vmatpush.bf16.msra.mxu0 %v5912
          %6236 = vmatmul.bf16.gmra.mxu0 %v5040
          %v6237 = vpop.f32.mrf.mxu0
          %v6238 = vadd.f32 %v6225, %v6237
          %v6239 = vpop.f32.mrf.mxu0
          %6240 = vdwg.mxu0
          %6241 = vmatpush.bf16.msra.mxu0 %v5927
          %6242 = vmatpush.bf16.msra.mxu0 %v5926
          %6243 = vmatpush.bf16.msra.mxu0 %v5925
          %6244 = vmatpush.bf16.msra.mxu0 %v5924
          %6245 = vmatpush.bf16.msra.mxu0 %v5923
          %6246 = vmatpush.bf16.msra.mxu0 %v5922
          %6247 = vmatpush.bf16.msra.mxu0 %v5921
          %6248 = vmatpush.bf16.msra.mxu0 %v5920
          %6249 = vmatmul.bf16.gmra.mxu0 %v5041
          %v6250 = vpop.f32.mrf.mxu0
          %v6251 = vadd.f32 %v6238, %v6250
          %v6252 = vpop.f32.mrf.mxu0
          %6253 = vdwg.mxu0
          %6254 = vmatpush.bf16.msra.mxu0 %v5935
          %6255 = vmatpush.bf16.msra.mxu0 %v5934
          %6256 = vmatpush.bf16.msra.mxu0 %v5933
          %6257 = vmatpush.bf16.msra.mxu0 %v5932
          %6258 = vmatpush.bf16.msra.mxu0 %v5931
          %6259 = vmatpush.bf16.msra.mxu0 %v5930
          %6260 = vmatpush.bf16.msra.mxu0 %v5929
          %6261 = vmatpush.bf16.msra.mxu0 %v5928
          %6262 = vmatmul.bf16.gmra.mxu0 %v5042
          %v6263 = vpop.f32.mrf.mxu0
          %v6264 = vadd.f32 %v6251, %v6263
          %v6265 = vpop.f32.mrf.mxu0
          %6266 = vdwg.mxu0
          %6267 = vmatpush.bf16.msra.mxu0 %v5943
          %6268 = vmatpush.bf16.msra.mxu0 %v5942
          %6269 = vmatpush.bf16.msra.mxu0 %v5941
          %6270 = vmatpush.bf16.msra.mxu0 %v5940
          %6271 = vmatpush.bf16.msra.mxu0 %v5939
          %6272 = vmatpush.bf16.msra.mxu0 %v5938
          %6273 = vmatpush.bf16.msra.mxu0 %v5937
          %6274 = vmatpush.bf16.msra.mxu0 %v5936
          %6275 = vmatmul.bf16.gmra.mxu0 %v5043
          %v6276 = vpop.f32.mrf.mxu0
          %v6277 = vadd.f32 %v6264, %v6276
          %v6278 = vpop.f32.mrf.mxu0
          %6279 = vdwg.mxu0
          %v6280 = vpack.c.bf16 %v6277, %v6277
          %v6281 = vld [vmem:[%s4] sm:$0xf]
          %v6282 = vld [vmem:[%s4 + $0x4] sm:$0xf]
          %v6283 = vld [vmem:[%s4 + $0x8] sm:$0xf]
          %v6284 = vld [vmem:[%s4 + $0xc] sm:$0xf]
          %v6285 = vld [vmem:[%s4 + $0x10] sm:$0xf]
          %v6286 = vld [vmem:[%s4 + $0x14] sm:$0xf]
          %v6287 = vld [vmem:[%s4 + $0x18] sm:$0xf]
          %v6288 = vld [vmem:[%s4 + $0x1c] sm:$0xf]
          %v6289 = vld [vmem:[%s4 + $0x20] sm:$0xf]
          %v6290 = vld [vmem:[%s4 + $0x24] sm:$0xf]
          %v6291 = vld [vmem:[%s4 + $0x28] sm:$0xf]
          %v6292 = vld [vmem:[%s4 + $0x2c] sm:$0xf]
          %v6293 = vld [vmem:[%s4 + $0x30] sm:$0xf]
          %v6294 = vld [vmem:[%s4 + $0x34] sm:$0xf]
          %v6295 = vld [vmem:[%s4 + $0x38] sm:$0xf]
          %v6296 = vld [vmem:[%s4 + $0x3c] sm:$0xf]
          %v6297 = vld [vmem:[%s5] sm:$0x1]
          %v6299 = vperm.slane %v6297, 0
          %v6317 = vunpack.c.l.b16 %v6281
          %v6318 = vunpack.c.l.b16 %v6282
          %v6319 = vunpack.c.l.b16 %v6283
          %v6320 = vunpack.c.l.b16 %v6284
          %v6321 = vunpack.c.l.b16 %v6285
          %v6322 = vunpack.c.l.b16 %v6286
          %v6323 = vunpack.c.l.b16 %v6287
          %v6324 = vunpack.c.l.b16 %v6288
          %v6325 = vunpack.c.l.b16 %v6289
          %v6326 = vunpack.c.l.b16 %v6290
          %v6327 = vunpack.c.l.b16 %v6291
          %v6328 = vunpack.c.l.b16 %v6292
          %v6329 = vunpack.c.l.b16 %v6293
          %v6330 = vunpack.c.l.b16 %v6294
          %v6331 = vunpack.c.l.b16 %v6295
          %v6332 = vunpack.c.l.b16 %v6296
          %v6333 = vpack.c.b16 %v6318, %v6317
          %v6334 = vpack.c.b16 %v6320, %v6319
          %v6335 = vpack.c.b16 %v6322, %v6321
          %v6336 = vpack.c.b16 %v6324, %v6323
          %v6337 = vpack.c.b16 %v6326, %v6325
          %v6338 = vpack.c.b16 %v6328, %v6327
          %v6339 = vpack.c.b16 %v6330, %v6329
          %v6340 = vpack.c.b16 %v6332, %v6331
          %6349 = vmatpush.bf16.msra.mxu0 %v6340
          %6350 = vmatpush.bf16.msra.mxu0 %v6339
          %6351 = vmatpush.bf16.msra.mxu0 %v6338
          %6352 = vmatpush.bf16.msra.mxu0 %v6337
          %6353 = vmatpush.bf16.msra.mxu0 %v6336
          %6354 = vmatpush.bf16.msra.mxu0 %v6335
          %6355 = vmatpush.bf16.msra.mxu0 %v6334
          %6356 = vmatpush.bf16.msra.mxu0 %v6333
          %6357 = vmatmul.bf16.gmra.mxu0 %v6280
          %v6358 = vpop.f32.mrf.mxu0
          %v6359 = vadd.f32 %v6299, %v6358
          %v6360 = vpop.f32.mrf.mxu0
          %6361 = vdwg.mxu0
          %v6362 = vtanh.pop %v6359
          %6363 = vst [vmem:[%s451] sm:$0x3] %v6362
        $region97: #{tpu_custom_call.1} parent=80 // pred_fallthru
          _
        %s6364 = sand.u32 %s174, 1
        %s6365 = scalar_lea.sflag [#allocation6], %s6364
        %s6366 = sand.u32 %s174, 1
        %s6367 = smul.addr %s6366, 2
        %s6368 = scalar_lea.vmem [#allocation7], %s6367
        // Predicated region
        $region98: #{tpu_custom_call.1} parent=80 // pred_check
          %p6369 = pneg %p184
        $region99: #{tpu_custom_call.1} parent=80 // pred_check_branch
          %6371 = sbr.rel (%p6369) target = $region101
        $region100: #{tpu_custom_call.1} parent=80 // pred_region
          %6373 = vsyncadd %s6365, 0
          %s6374 = smul.addr %s25, 2
          %s6375 = scalar_lea.hbm %s6, %s6374
          %s6377 = sshll.u32 %s6368, 4
          %s6378 = int_to_ptr.vmem [resolvable:$true] %s6377
          %s6379 = sshll.u32 %s6375, 4
          %s6380 = int_to_ptr.hbm [resolvable:$true] %s6379
          %6382 = dma.vmem_to_hbm [thread:$0]  %s6378, 32, %s6380, %s6365
        $region101: #{tpu_custom_call.1} parent=80 // pred_fallthru
          _
      $region81: #{tpu_custom_call.1} parent=5 // pred_fallthru
        _
      %p6383 = scmp.le.s32.totalorder 2, %s16
      // Predicated region
      $region102: #{tpu_custom_call.1} parent=5 // pred_check
        %p6384 = pneg %p6383
      $region103: #{tpu_custom_call.1} parent=5 // pred_check_branch
        %6386 = sbr.rel (%p6384) target = $region105
      $region104: #{tpu_custom_call.1} parent=5 // pred_region
        %s6387 = ssub.s32 %s16, 2
        // Predicated region
        $region106: #{tpu_custom_call.1} parent=104 // pred_check
          %p6388 = pneg %p190
        $region107: #{tpu_custom_call.1} parent=104 // pred_check_branch
          %6390 = sbr.rel (%p6388) target = $region109
        $region108: #{tpu_custom_call.1} parent=104 // pred_region
          %s6391 = sand.u32 %s175, 1
          %s6392 = scalar_lea.sflag [#allocation6], %s6391
          %s6393 = sand.u32 %s175, 1
          %s6394 = smul.addr %s6393, 2
          %s6395 = scalar_lea.vmem [#allocation7], %s6394
          %6397 = dma.done %s6392, 32
        $region109: #{tpu_custom_call.1} parent=104 // pred_fallthru
          _
      $region105: #{tpu_custom_call.1} parent=5 // pred_fallthru
        _
    $region6: #{tpu_custom_call.1} parent=1 // loop_footer
      %s20 = sadd.s32 1, %s16
    $region7: #{tpu_custom_call.1} parent=1 // loop_footer_branch
      %15 = sbr.rel target = $region3
    $region8: #{tpu_custom_call.1} parent=1 // loop_exit
      _
    %6398 = vsyncpa [#allocation5], 1
    %s6399 = scalar_lea.sflag [#allocation5], 1
    %6400 = vsyncpa %s6399, 1
    %6401 = vsyncpa [#allocation6], 1
    %s6402 = scalar_lea.sflag [#allocation6], 1
    %6403 = vsyncpa %s6402, 1

</llo_original>
